<compile_context>
chip_gen: v7x
topology: tpu7x:2x2x1
jax: 0.10.0
libtpu: 0.0.40
codegen_flags: <defaults>
</compile_context>

<pallas_src>
import jax
import jax.numpy as jnp
from jax.experimental import pallas as pl
from jax.experimental.pallas import tpu as pltpu


def _round_up(x, m):
    return (x + m - 1) // m * m


# ----------------------------------------------------------------------------
# Fused kernel: StaticEncoder MLP + 2-layer LSTM recurrence + head
# One invocation = one (batch-tile, time-chunk) grid step.
# ----------------------------------------------------------------------------
def hydro_fused_kernel(seq_ref, static_ref,
                       se_w1_ref, se_b1_ref, se_w2_ref, se_b2_ref,
                       wih0d_ref, wih0s_ref, b0_ref, whh0_ref,
                       w1cat_ref, b1_ref,
                       whead_ref, bhead_ref,
                       out_ref,
                       g0_sc, h01_sc, c0_sc, c1_sc):
    t_chunk = pl.program_id(1)
    n_chunks = pl.num_programs(1)

    Tc, Bt, n_dyn = seq_ref.shape
    H = whh0_ref.shape[0]
    G = 4 * H
    cdt = wih0d_ref.dtype          # MXU operand dtype (bf16 or f32); accum stays f32

    # ---- once per batch tile: static-encoder MLP + time-invariant layer-0 gates
    @pl.when(t_chunk == 0)
    def _init():
        s = jnp.dot(static_ref[...].astype(cdt), se_w1_ref[...],
                    preferred_element_type=jnp.float32) + se_b1_ref[...]
        s = jnp.maximum(s, 0.0)
        s = jnp.dot(s.astype(cdt), se_w2_ref[...],
                    preferred_element_type=jnp.float32) + se_b2_ref[...]
        # 'repeat' fusion folded algebraically:  s @ wih0_static + (b_ih0 + b_hh0)
        g0_sc[...] = jnp.dot(s.astype(cdt), wih0s_ref[...],
                             preferred_element_type=jnp.float32) + b0_ref[...]
        h01_sc[...] = jnp.zeros((Bt, 2 * H), jnp.float32)
        c0_sc[...] = jnp.zeros((Bt, H), jnp.float32)
        c1_sc[...] = jnp.zeros((Bt, H), jnp.float32)

    # ---- chunk prologue: ALL layer-0 input projections of this chunk in one tall
    # (Tc*Bt, n_dyn) x (n_dyn, 4H) matmul, time-invariant part folded in once
    # (off the serial recurrence chain).
    x2 = seq_ref[...].reshape(Tc * Bt, n_dyn)
    xp = jnp.dot(x2.astype(cdt), wih0d_ref[...],
                 preferred_element_type=jnp.float32)
    xp3 = xp.reshape(Tc, Bt, G) + g0_sc[...]           # broadcast over Tc

    # ---- recurrence: only the recurrent matmuls remain on the serial path ----
    whh0 = whh0_ref[...]
    w1cat = w1cat_ref[...]                             # [wih1; whh1]  (2H, 4H)
    b1b = jnp.broadcast_to(b1_ref[...], (Bt, G))       # hoisted broadcast

    h0 = h01_sc[:, :H]
    h1 = h01_sc[:, H:]
    c0 = c0_sc[...]
    c1 = c1_sc[...]

    def gates_to_hc(gates, c):
        # sigmoid/tanh once over the full 4H-lane gate slab, then lane-slice.
        # TODO(synk): if H > 32 (4H > 128 lanes), permute gates to (i,f,o,g) in the
        # wrapper and apply tanh only to the g lanes to save EUP passes.
        sg = jax.nn.sigmoid(gates)
        tg = jnp.tanh(gates)
        i = sg[:, 0 * H:1 * H]
        f = sg[:, 1 * H:2 * H]
        g = tg[:, 2 * H:3 * H]
        o = sg[:, 3 * H:4 * H]
        c_new = f * c + i * g
        return o * jnp.tanh(c_new), c_new

    # Tc is static and bounded (<= 32 by the wrapper) -> fully unrolled; every
    # xp3[t] slice is an (8,128)-aligned tile (Bt multiple of 8, 4H mult. of 128).
    # TODO(synk): for larger Tc switch to lax.fori_loop(unroll~4) over a VMEM xp buffer.
    for t in range(Tc):
        gates0 = xp3[t] + jnp.dot(h0.astype(cdt), whh0,
                                  preferred_element_type=jnp.float32)
        h0, c0 = gates_to_hc(gates0, c0)
        h01_sc[:, :H] = h0                             # pack new h0 into [h0|h1] buffer

        # layer 1: ONE merged (Bt, 2H) x (2H, 4H) MXU push per step
        gates1 = jnp.dot(h01_sc[...].astype(cdt), w1cat,
                         preferred_element_type=jnp.float32) + b1b
        h1, c1 = gates_to_hc(gates1, c1)
        h01_sc[:, H:] = h1

    # carry cell state to the next time chunk (h0/h1 already live in h01_sc)
    c0_sc[...] = c0
    c1_sc[...] = c1

    # ---- head (Linear H -> 1), only on the last chunk of each batch tile -----
    @pl.when(t_chunk == n_chunks - 1)
    def _head():
        # TODO(synk): for large B emit a lane-dense (1, tile_B) output instead of
        # the (tile_B, 1) masked store.
        out_ref[...] = (jnp.dot(h1.astype(cdt), whead_ref[...],
                                preferred_element_type=jnp.float32)
                        + bhead_ref[...])


# ----------------------------------------------------------------------------
# Wrapper: full HydroLSTM forward (static_mode='repeat')
# ----------------------------------------------------------------------------
def hydro_lstm_forward(seq, static, params, *, weight_dtype=jnp.bfloat16):
    """seq [B,T,n_dyn], static [B,n_static] -> [B] predictions."""
    B, T, n_dyn = seq.shape
    H = params["whh0"].shape[0]
    G = 4 * H
    seq = seq.astype(jnp.float32)
    static = static.astype(jnp.float32)

    # ---- batch tiling: "parallel" grid axis (megacore-shardable, DMA-pipelined)
    if B <= 256:
        tile_B = _round_up(B, 8)
        B_pad = tile_B
    else:
        tile_B = 256
        B_pad = _round_up(B, tile_B)
    nb = B_pad // tile_B

    # ---- time chunking: "arbitrary" grid axis; only a chunk of the lane-padded
    # sequence + its projection is VMEM-resident, next chunk's DMA overlaps the
    # current chunk's recurrence.
    Tc = max(d for d in range(1, min(T, 32) + 1) if T % d == 0)
    nt = T // Tc
    # TODO(synk): handle T with no divisor <= 32 via a masked remainder chunk.

    # ---- weight prep (weights -> weight_dtype for the MXU; biases stay f32) ---
    wdt = weight_dtype
    wih0 = params["wih0"]
    wih0_dyn = wih0[:n_dyn, :].astype(wdt)                               # (n_dyn, 4H)
    wih0_sta = wih0[n_dyn:, :].astype(wdt)                               # (emb,   4H)
    whh0 = params["whh0"].astype(wdt)                                    # (H, 4H)
    w1cat = jnp.concatenate([params["wih1"], params["whh1"]], 0).astype(wdt)  # (2H, 4H)
    se_w1 = params["se_w1"].astype(wdt)
    se_w2 = params["se_w2"].astype(wdt)
    whead = params["whead"].astype(wdt)
    se_b1 = params["se_b1"].reshape(1, -1).astype(jnp.float32)
    se_b2 = params["se_b2"].reshape(1, -1).astype(jnp.float32)
    b0 = params["b0"].reshape(1, G).astype(jnp.float32)
    b1 = params["b1"].reshape(1, G).astype(jnp.float32)
    bhead = params["bhead"].reshape(1, 1).astype(jnp.float32)

    # ---- input layout: time-major (T, B_pad, n_dyn) so each (Tc, tile_B, n_dyn)
    # block is a contiguous, tile-aligned slab ----------------------------------
    seq_tm = jnp.transpose(seq, (1, 0, 2))
    if B_pad != B:
        seq_tm = jnp.pad(seq_tm, ((0, 0), (0, B_pad - B), (0, 0)))
        static = jnp.pad(static, ((0, B_pad - B), (0, 0)))

    weights = (se_w1, se_b1, se_w2, se_b2, wih0_dyn, wih0_sta, b0, whh0,
               w1cat, b1, whead, bhead)

    def wspec(w):
        # constant index_map -> weight stays VMEM-resident across all grid steps
        return pl.BlockSpec(w.shape, lambda bi, tc: (0,) * w.ndim)

    in_specs = (
        [pl.BlockSpec((Tc, tile_B, n_dyn), lambda bi, tc: (tc, bi, 0)),
         pl.BlockSpec((tile_B, static.shape[1]), lambda bi, tc: (bi, 0))]
        + [wspec(w) for w in weights]
    )
    out_spec = pl.BlockSpec((tile_B, 1), lambda bi, tc: (bi, 0))

    scratch = [pltpu.VMEM((tile_B, G), jnp.float32),       # g0_const (static contribution)
               pltpu.VMEM((tile_B, 2 * H), jnp.float32),   # packed [h0 | h1] state
               pltpu.VMEM((tile_B, H), jnp.float32),       # c0
               pltpu.VMEM((tile_B, H), jnp.float32)]       # c1

    # scoped-VMEM budget: only raise the limit when the tiles actually need it
    vmem_est = (2 * Tc * tile_B * 128 * 4                   # double-buffered seq chunk (lane-padded)
                + Tc * tile_B * G * 4                       # xp chunk (f32)
                + 12 * tile_B * G * 4                       # scratch + gate temporaries
                + sum(int(w.size) * w.dtype.itemsize for w in weights))
    cp_kwargs = dict(dimension_semantics=("parallel", "arbitrary"))
    if vmem_est > 24 * 1024 * 1024:
        cp_kwargs["vmem_limit_bytes"] = min(2 * vmem_est, 64 * 1024 * 1024)

    out = pl.pallas_call(
        hydro_fused_kernel,
        out_shape=jax.ShapeDtypeStruct((B_pad, 1), jnp.float32),
        grid_spec=pltpu.PrefetchScalarGridSpec(
            num_scalar_prefetch=0,
            grid=(nb, nt),
            in_specs=in_specs,
            out_specs=out_spec,
            scratch_shapes=scratch),
        compiler_params=pltpu.CompilerParams(**cp_kwargs),
    )(seq_tm, static, *weights)

    return out[:B, 0]


# ----------------------------------------------------------------------------
# Pure-JAX reference (mirrors the PyTorch forward exactly, f32 throughout)
# ----------------------------------------------------------------------------
def hydro_lstm_reference(seq, static, params):
    s = jnp.maximum(static @ params["se_w1"] + params["se_b1"], 0.0)
    s = s @ params["se_w2"] + params["se_b2"]
    B, T, _ = seq.shape
    s_rep = jnp.broadcast_to(s[:, None, :], (B, T, s.shape[-1]))
    x = jnp.concatenate([seq, s_rep], axis=-1)
    H = params["whh0"].shape[0]

    def cell(x_t, h, c, wih, whh, b):
        g = x_t @ wih + h @ whh + b
        i, f, gg, o = (jax.nn.sigmoid(g[:, :H]), jax.nn.sigmoid(g[:, H:2 * H]),
                       jnp.tanh(g[:, 2 * H:3 * H]), jax.nn.sigmoid(g[:, 3 * H:]))
        c = f * c + i * gg
        return o * jnp.tanh(c), c

    h0 = c0 = h1 = c1 = jnp.zeros((B, H), jnp.float32)
    for t in range(T):
        h0, c0 = cell(x[:, t, :], h0, c0, params["wih0"], params["whh0"], params["b0"])
        h1, c1 = cell(h0, h1, c1, params["wih1"], params["whh1"], params["b1"])
    return (h1 @ params["whead"] + params["bhead"])[:, 0]


# ----------------------------------------------------------------------------
if __name__ == "__main__":
    B, T = 2, 8
    n_dyn, n_static = 4, 5
    hidden_size = 32          # LSTM hidden (4H = 128, lane-aligned)
    static_emb = 32
    mlp_hidden = 2 * static_emb
    d_in = n_dyn + static_emb  # 'repeat' mode input size

    key = jax.random.PRNGKey(0)
    ks = jax.random.split(key, 16)

    def w(k, shape, scale=0.1):
        return (scale * jax.random.normal(k, shape)).astype(jnp.float32)

    params = {
        # StaticEncoder  (weights stored transposed: (in, out))
        "se_w1": w(ks[0], (n_static, mlp_hidden)),
        "se_b1": w(ks[1], (mlp_hidden,)),
        "se_w2": w(ks[2], (mlp_hidden, static_emb)),
        "se_b2": w(ks[3], (static_emb,)),
        # LSTM layer 0  (W_ih transposed to (d_in, 4H); gate order i,f,g,o)
        "wih0": w(ks[4], (d_in, 4 * hidden_size)),
        "whh0": w(ks[5], (hidden_size, 4 * hidden_size)),
        "b0":   w(ks[6], (4 * hidden_size,)),   # b_ih + b_hh fused
        # LSTM layer 1
        "wih1": w(ks[7], (hidden_size, 4 * hidden_size)),
        "whh1": w(ks[8], (hidden_size, 4 * hidden_size)),
        "b1":   w(ks[9], (4 * hidden_size,)),
        # Head
        "whead": w(ks[10], (hidden_size, 1)),
        "bhead": w(ks[11], (1,)),
    }

    seq = jax.random.normal(ks[12], (B, T, n_dyn), dtype=jnp.float32)
    static = jax.random.normal(ks[13], (B, n_static), dtype=jnp.float32)

    ref = jax.block_until_ready(hydro_lstm_reference(seq, static, params))

    # f32-weight path: tight check
    out_f32 = jax.block_until_ready(
        hydro_lstm_forward(seq, static, params, weight_dtype=jnp.float32))
    assert out_f32.shape == (B,)
    assert jnp.allclose(out_f32, ref, atol=1e-4, rtol=1e-4), (out_f32, ref)

    # bf16-weight path (MXU-native on v6e/v7x): relaxed tolerance vs f32 reference
    out_bf16 = jax.block_until_ready(
        hydro_lstm_forward(seq, static, params, weight_dtype=jnp.bfloat16))
    assert out_bf16.shape == (B,)
    assert jnp.allclose(out_bf16, ref, atol=3e-2, rtol=3e-2), (out_bf16, ref)

    print("KERNEL_OK")
</pallas_src>

<mosaic_0001>
module attributes {stable_mosaic.version = 11 : i64} {
  func.func @hydro_fused_kernel(%arg0: i32, %arg1: i32, %arg2: memref<8x8x4xf32, #tpu.memory_space<vmem>>, %arg3: memref<8x5xf32, #tpu.memory_space<vmem>>, %arg4: memref<5x64xf32, #tpu.memory_space<vmem>>, %arg5: memref<1x64xf32, #tpu.memory_space<vmem>>, %arg6: memref<64x32xf32, #tpu.memory_space<vmem>>, %arg7: memref<1x32xf32, #tpu.memory_space<vmem>>, %arg8: memref<4x128xf32, #tpu.memory_space<vmem>>, %arg9: memref<32x128xf32, #tpu.memory_space<vmem>>, %arg10: memref<1x128xf32, #tpu.memory_space<vmem>>, %arg11: memref<32x128xf32, #tpu.memory_space<vmem>>, %arg12: memref<64x128xf32, #tpu.memory_space<vmem>>, %arg13: memref<1x128xf32, #tpu.memory_space<vmem>>, %arg14: memref<32x1xf32, #tpu.memory_space<vmem>>, %arg15: memref<1x1xf32, #tpu.memory_space<vmem>>, %arg16: memref<8x1xf32, #tpu.memory_space<vmem>>, %arg17: memref<8x128xf32, #tpu.memory_space<vmem>>, %arg18: memref<8x64xf32, #tpu.memory_space<vmem>>, %arg19: memref<8x32xf32, #tpu.memory_space<vmem>>, %arg20: memref<8x32xf32, #tpu.memory_space<vmem>>) attributes {dimension_semantics = [#tpu.dimension_semantics<parallel>, #tpu.dimension_semantics<arbitrary>], iteration_bounds = array<i64: 1, 1>, scalar_prefetch = 0 : i64, scratch_operands = 4 : i64, tpu.core_type = #tpu.core_type<tc>, window_params = [{transform_indices = @transform_0, window_bounds = array<i64: 8, 8, 4>}, {transform_indices = @transform_1, window_bounds = array<i64: 8, 5>}, {pipeline_mode = #tpu.pipeline_mode<synchronous>, transform_indices = @transform_2, window_bounds = array<i64: 5, 64>}, {pipeline_mode = #tpu.pipeline_mode<synchronous>, transform_indices = @transform_3, window_bounds = array<i64: 1, 64>}, {pipeline_mode = #tpu.pipeline_mode<synchronous>, transform_indices = @transform_4, window_bounds = array<i64: 64, 32>}, {pipeline_mode = #tpu.pipeline_mode<synchronous>, transform_indices = @transform_5, window_bounds = array<i64: 1, 32>}, {pipeline_mode = #tpu.pipeline_mode<synchronous>, transform_indices = @transform_6, window_bounds = array<i64: 4, 128>}, {pipeline_mode = #tpu.pipeline_mode<synchronous>, transform_indices = @transform_7, window_bounds = array<i64: 32, 128>}, {pipeline_mode = #tpu.pipeline_mode<synchronous>, transform_indices = @transform_8, window_bounds = array<i64: 1, 128>}, {pipeline_mode = #tpu.pipeline_mode<synchronous>, transform_indices = @transform_9, window_bounds = array<i64: 32, 128>}, {pipeline_mode = #tpu.pipeline_mode<synchronous>, transform_indices = @transform_10, window_bounds = array<i64: 64, 128>}, {pipeline_mode = #tpu.pipeline_mode<synchronous>, transform_indices = @transform_11, window_bounds = array<i64: 1, 128>}, {pipeline_mode = #tpu.pipeline_mode<synchronous>, transform_indices = @transform_12, window_bounds = array<i64: 32, 1>}, {pipeline_mode = #tpu.pipeline_mode<synchronous>, transform_indices = @transform_13, window_bounds = array<i64: 1, 1>}, {transform_indices = @transform_14, window_bounds = array<i64: 8, 1>}]} {
    %c0_i32 = arith.constant 0 : i32
    %0 = arith.cmpi eq, %arg1, %c0_i32 : i32
    %1 = arith.extui %0 : i1 to i32
    %c0_i32_0 = arith.constant 0 : i32
    %2 = arith.cmpi ne, %1, %c0_i32_0 : i32
    scf.if %2 {
      %c0_104 = arith.constant 0 : index
      %c0_105 = arith.constant 0 : index
      %337 = vector.load %arg3[%c0_104, %c0_105] : memref<8x5xf32, #tpu.memory_space<vmem>>, vector<8x5xf32>
      %c0_106 = arith.constant 0 : index
      %c0_107 = arith.constant 0 : index
      %338 = vector.load %arg4[%c0_106, %c0_107] : memref<5x64xf32, #tpu.memory_space<vmem>>, vector<5x64xf32>
      %cst_108 = arith.constant dense<0.000000e+00> : vector<8x64xf32>
      %339 = tpu.matmul %337, %338, %cst_108 {dimension_numbers = #tpu.dot_dimension_numbers<[1], [0], [0], [1], [0, 0, 1, 1], [], []>} : vector<8x5xf32>, vector<5x64xf32>, vector<8x64xf32> -> vector<8x64xf32>
      %c0_109 = arith.constant 0 : index
      %c0_110 = arith.constant 0 : index
      %340 = vector.load %arg5[%c0_109, %c0_110] : memref<1x64xf32, #tpu.memory_space<vmem>>, vector<1x64xf32>
      %341 = vector.broadcast %340 : vector<1x64xf32> to vector<8x64xf32>
      %342 = arith.addf %339, %341 : vector<8x64xf32>
      %cst_111 = arith.constant 0.000000e+00 : f32
      %343 = vector.broadcast %cst_111 : f32 to vector<8x64xf32>
      %344 = arith.maximumf %342, %343 : vector<8x64xf32>
      %c0_112 = arith.constant 0 : index
      %c0_113 = arith.constant 0 : index
      %345 = vector.load %arg6[%c0_112, %c0_113] : memref<64x32xf32, #tpu.memory_space<vmem>>, vector<64x32xf32>
      %cst_114 = arith.constant dense<0.000000e+00> : vector<8x32xf32>
      %346 = tpu.matmul %344, %345, %cst_114 {dimension_numbers = #tpu.dot_dimension_numbers<[1], [0], [0], [1], [0, 0, 1, 1], [], []>} : vector<8x64xf32>, vector<64x32xf32>, vector<8x32xf32> -> vector<8x32xf32>
      %c0_115 = arith.constant 0 : index
      %c0_116 = arith.constant 0 : index
      %347 = vector.load %arg7[%c0_115, %c0_116] : memref<1x32xf32, #tpu.memory_space<vmem>>, vector<1x32xf32>
      %348 = vector.broadcast %347 : vector<1x32xf32> to vector<8x32xf32>
      %349 = arith.addf %346, %348 : vector<8x32xf32>
      %c0_117 = arith.constant 0 : index
      %c0_118 = arith.constant 0 : index
      %350 = vector.load %arg9[%c0_117, %c0_118] : memref<32x128xf32, #tpu.memory_space<vmem>>, vector<32x128xf32>
      %cst_119 = arith.constant dense<0.000000e+00> : vector<8x128xf32>
      %351 = tpu.matmul %349, %350, %cst_119 {dimension_numbers = #tpu.dot_dimension_numbers<[1], [0], [0], [1], [0, 0, 1, 1], [], []>} : vector<8x32xf32>, vector<32x128xf32>, vector<8x128xf32> -> vector<8x128xf32>
      %c0_120 = arith.constant 0 : index
      %c0_121 = arith.constant 0 : index
      %352 = vector.load %arg10[%c0_120, %c0_121] : memref<1x128xf32, #tpu.memory_space<vmem>>, vector<1x128xf32>
      %353 = vector.broadcast %352 : vector<1x128xf32> to vector<8x128xf32>
      %354 = arith.addf %351, %353 : vector<8x128xf32>
      %c0_122 = arith.constant 0 : index
      %c0_123 = arith.constant 0 : index
      %355 = vector.load %arg17[%c0_122, %c0_123] : memref<8x128xf32, #tpu.memory_space<vmem>>, vector<8x128xf32>
      tpu.vector_store %arg17[%c0_122, %c0_123], %354 {strides = array<i32>} : memref<8x128xf32, #tpu.memory_space<vmem>>, vector<8x128xf32>,
      %cst_124 = arith.constant 0.000000e+00 : f32
      %356 = vector.broadcast %cst_124 : f32 to vector<8x64xf32>
      %c0_125 = arith.constant 0 : index
      %c0_126 = arith.constant 0 : index
      %357 = vector.load %arg18[%c0_125, %c0_126] : memref<8x64xf32, #tpu.memory_space<vmem>>, vector<8x64xf32>
      tpu.vector_store %arg18[%c0_125, %c0_126], %356 {strides = array<i32>} : memref<8x64xf32, #tpu.memory_space<vmem>>, vector<8x64xf32>,
      %cst_127 = arith.constant 0.000000e+00 : f32
      %358 = vector.broadcast %cst_127 : f32 to vector<8x32xf32>
      %c0_128 = arith.constant 0 : index
      %c0_129 = arith.constant 0 : index
      %359 = vector.load %arg19[%c0_128, %c0_129] : memref<8x32xf32, #tpu.memory_space<vmem>>, vector<8x32xf32>
      tpu.vector_store %arg19[%c0_128, %c0_129], %358 {strides = array<i32>} : memref<8x32xf32, #tpu.memory_space<vmem>>, vector<8x32xf32>,
      %cst_130 = arith.constant 0.000000e+00 : f32
      %360 = vector.broadcast %cst_130 : f32 to vector<8x32xf32>
      %c0_131 = arith.constant 0 : index
      %c0_132 = arith.constant 0 : index
      %361 = vector.load %arg20[%c0_131, %c0_132] : memref<8x32xf32, #tpu.memory_space<vmem>>, vector<8x32xf32>
      tpu.vector_store %arg20[%c0_131, %c0_132], %360 {strides = array<i32>} : memref<8x32xf32, #tpu.memory_space<vmem>>, vector<8x32xf32>,
    } else {
    }
    %c0 = arith.constant 0 : index
    %c0_1 = arith.constant 0 : index
    %c0_2 = arith.constant 0 : index
    %3 = vector.load %arg2[%c0, %c0_1, %c0_2] : memref<8x8x4xf32, #tpu.memory_space<vmem>>, vector<8x8x4xf32>
    %4 = vector.shape_cast %3 : vector<8x8x4xf32> to vector<64x4xf32>
    %c0_3 = arith.constant 0 : index
    %c0_4 = arith.constant 0 : index
    %5 = vector.load %arg8[%c0_3, %c0_4] : memref<4x128xf32, #tpu.memory_space<vmem>>, vector<4x128xf32>
    %cst = arith.constant dense<0.000000e+00> : vector<64x128xf32>
    %6 = tpu.matmul %4, %5, %cst {dimension_numbers = #tpu.dot_dimension_numbers<[1], [0], [0], [1], [0, 0, 1, 1], [], []>} : vector<64x4xf32>, vector<4x128xf32>, vector<64x128xf32> -> vector<64x128xf32>
    %7 = vector.shape_cast %6 : vector<64x128xf32> to vector<8x8x128xf32>
    %c0_5 = arith.constant 0 : index
    %c0_6 = arith.constant 0 : index
    %8 = vector.load %arg17[%c0_5, %c0_6] : memref<8x128xf32, #tpu.memory_space<vmem>>, vector<8x128xf32>
    %9 = vector.shape_cast %8 : vector<8x128xf32> to vector<1x8x128xf32>
    %10 = vector.broadcast %9 : vector<1x8x128xf32> to vector<8x8x128xf32>
    %11 = arith.addf %7, %10 : vector<8x8x128xf32>
    %c0_7 = arith.constant 0 : index
    %c0_8 = arith.constant 0 : index
    %12 = vector.load %arg11[%c0_7, %c0_8] : memref<32x128xf32, #tpu.memory_space<vmem>>, vector<32x128xf32>
    %c0_9 = arith.constant 0 : index
    %c0_10 = arith.constant 0 : index
    %13 = vector.load %arg12[%c0_9, %c0_10] : memref<64x128xf32, #tpu.memory_space<vmem>>, vector<64x128xf32>
    %c0_11 = arith.constant 0 : index
    %c0_12 = arith.constant 0 : index
    %14 = vector.load %arg13[%c0_11, %c0_12] : memref<1x128xf32, #tpu.memory_space<vmem>>, vector<1x128xf32>
    %15 = vector.shape_cast %14 : vector<1x128xf32> to vector<1x128xf32>
    %16 = vector.broadcast %15 : vector<1x128xf32> to vector<8x128xf32>
    %c0_13 = arith.constant 0 : index
    %c0_14 = arith.constant 0 : index
    %17 = vector.load %arg18[%c0_13, %c0_14] : memref<8x64xf32, #tpu.memory_space<vmem>>, vector<8x32xf32>
    %c0_15 = arith.constant 0 : index
    %c0_16 = arith.constant 0 : index
    %18 = vector.load %arg19[%c0_15, %c0_16] : memref<8x32xf32, #tpu.memory_space<vmem>>, vector<8x32xf32>
    %c0_17 = arith.constant 0 : index
    %c0_18 = arith.constant 0 : index
    %19 = vector.load %arg20[%c0_17, %c0_18] : memref<8x32xf32, #tpu.memory_space<vmem>>, vector<8x32xf32>
    %20 = vector.extract_strided_slice %11 {offsets = [0, 0, 0], sizes = [1, 8, 128], strides = [1, 1, 1]} : vector<8x8x128xf32> to vector<1x8x128xf32>
    %21 = vector.shape_cast %20 : vector<1x8x128xf32> to vector<8x128xf32>
    %cst_19 = arith.constant dense<0.000000e+00> : vector<8x128xf32>
    %22 = tpu.matmul %17, %12, %cst_19 {dimension_numbers = #tpu.dot_dimension_numbers<[1], [0], [0], [1], [0, 0, 1, 1], [], []>} : vector<8x32xf32>, vector<32x128xf32>, vector<8x128xf32> -> vector<8x128xf32>
    %23 = arith.addf %21, %22 : vector<8x128xf32>
    %24 = arith.negf %23 : vector<8x128xf32>
    %25 = math.exp %24 : vector<8x128xf32>
    %cst_20 = arith.constant 1.000000e+00 : f32
    %26 = vector.broadcast %cst_20 : f32 to vector<8x128xf32>
    %27 = arith.addf %26, %25 : vector<8x128xf32>
    %28 = arith.divf %26, %27 : vector<8x128xf32>
    %29 = math.tanh %23 : vector<8x128xf32>
    %30 = vector.extract_strided_slice %28 {offsets = [0, 0], sizes = [8, 32], strides = [1, 1]} : vector<8x128xf32> to vector<8x32xf32>
    %31 = vector.extract_strided_slice %28 {offsets = [0, 32], sizes = [8, 32], strides = [1, 1]} : vector<8x128xf32> to vector<8x32xf32>
    %32 = vector.extract_strided_slice %29 {offsets = [0, 64], sizes = [8, 32], strides = [1, 1]} : vector<8x128xf32> to vector<8x32xf32>
    %33 = vector.extract_strided_slice %28 {offsets = [0, 96], sizes = [8, 32], strides = [1, 1]} : vector<8x128xf32> to vector<8x32xf32>
    %34 = arith.mulf %31, %18 : vector<8x32xf32>
    %35 = arith.mulf %30, %32 : vector<8x32xf32>
    %36 = arith.addf %34, %35 : vector<8x32xf32>
    %37 = math.tanh %36 : vector<8x32xf32>
    %38 = arith.mulf %33, %37 : vector<8x32xf32>
    %c0_21 = arith.constant 0 : index
    %c0_22 = arith.constant 0 : index
    %39 = vector.load %arg18[%c0_21, %c0_22] : memref<8x64xf32, #tpu.memory_space<vmem>>, vector<8x32xf32>
    tpu.vector_store %arg18[%c0_21, %c0_22], %38 {strides = array<i32>} : memref<8x64xf32, #tpu.memory_space<vmem>>, vector<8x32xf32>,
    %c0_23 = arith.constant 0 : index
    %c0_24 = arith.constant 0 : index
    %40 = vector.load %arg18[%c0_23, %c0_24] : memref<8x64xf32, #tpu.memory_space<vmem>>, vector<8x64xf32>
    %cst_25 = arith.constant dense<0.000000e+00> : vector<8x128xf32>
    %41 = tpu.matmul %40, %13, %cst_25 {dimension_numbers = #tpu.dot_dimension_numbers<[1], [0], [0], [1], [0, 0, 1, 1], [], []>} : vector<8x64xf32>, vector<64x128xf32>, vector<8x128xf32> -> vector<8x128xf32>
    %42 = arith.addf %41, %16 : vector<8x128xf32>
    %43 = arith.negf %42 : vector<8x128xf32>
    %44 = math.exp %43 : vector<8x128xf32>
    %cst_26 = arith.constant 1.000000e+00 : f32
    %45 = vector.broadcast %cst_26 : f32 to vector<8x128xf32>
    %46 = arith.addf %45, %44 : vector<8x128xf32>
    %47 = arith.divf %45, %46 : vector<8x128xf32>
    %48 = math.tanh %42 : vector<8x128xf32>
    %49 = vector.extract_strided_slice %47 {offsets = [0, 0], sizes = [8, 32], strides = [1, 1]} : vector<8x128xf32> to vector<8x32xf32>
    %50 = vector.extract_strided_slice %47 {offsets = [0, 32], sizes = [8, 32], strides = [1, 1]} : vector<8x128xf32> to vector<8x32xf32>
    %51 = vector.extract_strided_slice %48 {offsets = [0, 64], sizes = [8, 32], strides = [1, 1]} : vector<8x128xf32> to vector<8x32xf32>
    %52 = vector.extract_strided_slice %47 {offsets = [0, 96], sizes = [8, 32], strides = [1, 1]} : vector<8x128xf32> to vector<8x32xf32>
    %53 = arith.mulf %50, %19 : vector<8x32xf32>
    %54 = arith.mulf %49, %51 : vector<8x32xf32>
    %55 = arith.addf %53, %54 : vector<8x32xf32>
    %56 = math.tanh %55 : vector<8x32xf32>
    %57 = arith.mulf %52, %56 : vector<8x32xf32>
    %c0_27 = arith.constant 0 : index
    %c32 = arith.constant 32 : index
    %58 = vector.load %arg18[%c0_27, %c32] : memref<8x64xf32, #tpu.memory_space<vmem>>, vector<8x32xf32>
    tpu.vector_store %arg18[%c0_27, %c32], %57 {strides = array<i32>} : memref<8x64xf32, #tpu.memory_space<vmem>>, vector<8x32xf32>,
    %59 = vector.extract_strided_slice %11 {offsets = [1, 0, 0], sizes = [1, 8, 128], strides = [1, 1, 1]} : vector<8x8x128xf32> to vector<1x8x128xf32>
    %60 = vector.shape_cast %59 : vector<1x8x128xf32> to vector<8x128xf32>
    %cst_28 = arith.constant dense<0.000000e+00> : vector<8x128xf32>
    %61 = tpu.matmul %38, %12, %cst_28 {dimension_numbers = #tpu.dot_dimension_numbers<[1], [0], [0], [1], [0, 0, 1, 1], [], []>} : vector<8x32xf32>, vector<32x128xf32>, vector<8x128xf32> -> vector<8x128xf32>
    %62 = arith.addf %60, %61 : vector<8x128xf32>
    %63 = arith.negf %62 : vector<8x128xf32>
    %64 = math.exp %63 : vector<8x128xf32>
    %cst_29 = arith.constant 1.000000e+00 : f32
    %65 = vector.broadcast %cst_29 : f32 to vector<8x128xf32>
    %66 = arith.addf %65, %64 : vector<8x128xf32>
    %67 = arith.divf %65, %66 : vector<8x128xf32>
    %68 = math.tanh %62 : vector<8x128xf32>
    %69 = vector.extract_strided_slice %67 {offsets = [0, 0], sizes = [8, 32], strides = [1, 1]} : vector<8x128xf32> to vector<8x32xf32>
    %70 = vector.extract_strided_slice %67 {offsets = [0, 32], sizes = [8, 32], strides = [1, 1]} : vector<8x128xf32> to vector<8x32xf32>
    %71 = vector.extract_strided_slice %68 {offsets = [0, 64], sizes = [8, 32], strides = [1, 1]} : vector<8x128xf32> to vector<8x32xf32>
    %72 = vector.extract_strided_slice %67 {offsets = [0, 96], sizes = [8, 32], strides = [1, 1]} : vector<8x128xf32> to vector<8x32xf32>
    %73 = arith.mulf %70, %36 : vector<8x32xf32>
    %74 = arith.mulf %69, %71 : vector<8x32xf32>
    %75 = arith.addf %73, %74 : vector<8x32xf32>
    %76 = math.tanh %75 : vector<8x32xf32>
    %77 = arith.mulf %72, %76 : vector<8x32xf32>
    %c0_30 = arith.constant 0 : index
    %c0_31 = arith.constant 0 : index
    %78 = vector.load %arg18[%c0_30, %c0_31] : memref<8x64xf32, #tpu.memory_space<vmem>>, vector<8x32xf32>
    tpu.vector_store %arg18[%c0_30, %c0_31], %77 {strides = array<i32>} : memref<8x64xf32, #tpu.memory_space<vmem>>, vector<8x32xf32>,
    %c0_32 = arith.constant 0 : index
    %c0_33 = arith.constant 0 : index
    %79 = vector.load %arg18[%c0_32, %c0_33] : memref<8x64xf32, #tpu.memory_space<vmem>>, vector<8x64xf32>
    %cst_34 = arith.constant dense<0.000000e+00> : vector<8x128xf32>
    %80 = tpu.matmul %79, %13, %cst_34 {dimension_numbers = #tpu.dot_dimension_numbers<[1], [0], [0], [1], [0, 0, 1, 1], [], []>} : vector<8x64xf32>, vector<64x128xf32>, vector<8x128xf32> -> vector<8x128xf32>
    %81 = arith.addf %80, %16 : vector<8x128xf32>
    %82 = arith.negf %81 : vector<8x128xf32>
    %83 = math.exp %82 : vector<8x128xf32>
    %cst_35 = arith.constant 1.000000e+00 : f32
    %84 = vector.broadcast %cst_35 : f32 to vector<8x128xf32>
    %85 = arith.addf %84, %83 : vector<8x128xf32>
    %86 = arith.divf %84, %85 : vector<8x128xf32>
    %87 = math.tanh %81 : vector<8x128xf32>
    %88 = vector.extract_strided_slice %86 {offsets = [0, 0], sizes = [8, 32], strides = [1, 1]} : vector<8x128xf32> to vector<8x32xf32>
    %89 = vector.extract_strided_slice %86 {offsets = [0, 32], sizes = [8, 32], strides = [1, 1]} : vector<8x128xf32> to vector<8x32xf32>
    %90 = vector.extract_strided_slice %87 {offsets = [0, 64], sizes = [8, 32], strides = [1, 1]} : vector<8x128xf32> to vector<8x32xf32>
    %91 = vector.extract_strided_slice %86 {offsets = [0, 96], sizes = [8, 32], strides = [1, 1]} : vector<8x128xf32> to vector<8x32xf32>
    %92 = arith.mulf %89, %55 : vector<8x32xf32>
    %93 = arith.mulf %88, %90 : vector<8x32xf32>
    %94 = arith.addf %92, %93 : vector<8x32xf32>
    %95 = math.tanh %94 : vector<8x32xf32>
    %96 = arith.mulf %91, %95 : vector<8x32xf32>
    %c0_36 = arith.constant 0 : index
    %c32_37 = arith.constant 32 : index
    %97 = vector.load %arg18[%c0_36, %c32_37] : memref<8x64xf32, #tpu.memory_space<vmem>>, vector<8x32xf32>
    tpu.vector_store %arg18[%c0_36, %c32_37], %96 {strides = array<i32>} : memref<8x64xf32, #tpu.memory_space<vmem>>, vector<8x32xf32>,
    %98 = vector.extract_strided_slice %11 {offsets = [2, 0, 0], sizes = [1, 8, 128], strides = [1, 1, 1]} : vector<8x8x128xf32> to vector<1x8x128xf32>
    %99 = vector.shape_cast %98 : vector<1x8x128xf32> to vector<8x128xf32>
    %cst_38 = arith.constant dense<0.000000e+00> : vector<8x128xf32>
    %100 = tpu.matmul %77, %12, %cst_38 {dimension_numbers = #tpu.dot_dimension_numbers<[1], [0], [0], [1], [0, 0, 1, 1], [], []>} : vector<8x32xf32>, vector<32x128xf32>, vector<8x128xf32> -> vector<8x128xf32>
    %101 = arith.addf %99, %100 : vector<8x128xf32>
    %102 = arith.negf %101 : vector<8x128xf32>
    %103 = math.exp %102 : vector<8x128xf32>
    %cst_39 = arith.constant 1.000000e+00 : f32
    %104 = vector.broadcast %cst_39 : f32 to vector<8x128xf32>
    %105 = arith.addf %104, %103 : vector<8x128xf32>
    %106 = arith.divf %104, %105 : vector<8x128xf32>
    %107 = math.tanh %101 : vector<8x128xf32>
    %108 = vector.extract_strided_slice %106 {offsets = [0, 0], sizes = [8, 32], strides = [1, 1]} : vector<8x128xf32> to vector<8x32xf32>
    %109 = vector.extract_strided_slice %106 {offsets = [0, 32], sizes = [8, 32], strides = [1, 1]} : vector<8x128xf32> to vector<8x32xf32>
    %110 = vector.extract_strided_slice %107 {offsets = [0, 64], sizes = [8, 32], strides = [1, 1]} : vector<8x128xf32> to vector<8x32xf32>
    %111 = vector.extract_strided_slice %106 {offsets = [0, 96], sizes = [8, 32], strides = [1, 1]} : vector<8x128xf32> to vector<8x32xf32>
    %112 = arith.mulf %109, %75 : vector<8x32xf32>
    %113 = arith.mulf %108, %110 : vector<8x32xf32>
    %114 = arith.addf %112, %113 : vector<8x32xf32>
    %115 = math.tanh %114 : vector<8x32xf32>
    %116 = arith.mulf %111, %115 : vector<8x32xf32>
    %c0_40 = arith.constant 0 : index
    %c0_41 = arith.constant 0 : index
    %117 = vector.load %arg18[%c0_40, %c0_41] : memref<8x64xf32, #tpu.memory_space<vmem>>, vector<8x32xf32>
    tpu.vector_store %arg18[%c0_40, %c0_41], %116 {strides = array<i32>} : memref<8x64xf32, #tpu.memory_space<vmem>>, vector<8x32xf32>,
    %c0_42 = arith.constant 0 : index
    %c0_43 = arith.constant 0 : index
    %118 = vector.load %arg18[%c0_42, %c0_43] : memref<8x64xf32, #tpu.memory_space<vmem>>, vector<8x64xf32>
    %cst_44 = arith.constant dense<0.000000e+00> : vector<8x128xf32>
    %119 = tpu.matmul %118, %13, %cst_44 {dimension_numbers = #tpu.dot_dimension_numbers<[1], [0], [0], [1], [0, 0, 1, 1], [], []>} : vector<8x64xf32>, vector<64x128xf32>, vector<8x128xf32> -> vector<8x128xf32>
    %120 = arith.addf %119, %16 : vector<8x128xf32>
    %121 = arith.negf %120 : vector<8x128xf32>
    %122 = math.exp %121 : vector<8x128xf32>
    %cst_45 = arith.constant 1.000000e+00 : f32
    %123 = vector.broadcast %cst_45 : f32 to vector<8x128xf32>
    %124 = arith.addf %123, %122 : vector<8x128xf32>
    %125 = arith.divf %123, %124 : vector<8x128xf32>
    %126 = math.tanh %120 : vector<8x128xf32>
    %127 = vector.extract_strided_slice %125 {offsets = [0, 0], sizes = [8, 32], strides = [1, 1]} : vector<8x128xf32> to vector<8x32xf32>
    %128 = vector.extract_strided_slice %125 {offsets = [0, 32], sizes = [8, 32], strides = [1, 1]} : vector<8x128xf32> to vector<8x32xf32>
    %129 = vector.extract_strided_slice %126 {offsets = [0, 64], sizes = [8, 32], strides = [1, 1]} : vector<8x128xf32> to vector<8x32xf32>
    %130 = vector.extract_strided_slice %125 {offsets = [0, 96], sizes = [8, 32], strides = [1, 1]} : vector<8x128xf32> to vector<8x32xf32>
    %131 = arith.mulf %128, %94 : vector<8x32xf32>
    %132 = arith.mulf %127, %129 : vector<8x32xf32>
    %133 = arith.addf %131, %132 : vector<8x32xf32>
    %134 = math.tanh %133 : vector<8x32xf32>
    %135 = arith.mulf %130, %134 : vector<8x32xf32>
    %c0_46 = arith.constant 0 : index
    %c32_47 = arith.constant 32 : index
    %136 = vector.load %arg18[%c0_46, %c32_47] : memref<8x64xf32, #tpu.memory_space<vmem>>, vector<8x32xf32>
    tpu.vector_store %arg18[%c0_46, %c32_47], %135 {strides = array<i32>} : memref<8x64xf32, #tpu.memory_space<vmem>>, vector<8x32xf32>,
    %137 = vector.extract_strided_slice %11 {offsets = [3, 0, 0], sizes = [1, 8, 128], strides = [1, 1, 1]} : vector<8x8x128xf32> to vector<1x8x128xf32>
    %138 = vector.shape_cast %137 : vector<1x8x128xf32> to vector<8x128xf32>
    %cst_48 = arith.constant dense<0.000000e+00> : vector<8x128xf32>
    %139 = tpu.matmul %116, %12, %cst_48 {dimension_numbers = #tpu.dot_dimension_numbers<[1], [0], [0], [1], [0, 0, 1, 1], [], []>} : vector<8x32xf32>, vector<32x128xf32>, vector<8x128xf32> -> vector<8x128xf32>
    %140 = arith.addf %138, %139 : vector<8x128xf32>
    %141 = arith.negf %140 : vector<8x128xf32>
    %142 = math.exp %141 : vector<8x128xf32>
    %cst_49 = arith.constant 1.000000e+00 : f32
    %143 = vector.broadcast %cst_49 : f32 to vector<8x128xf32>
    %144 = arith.addf %143, %142 : vector<8x128xf32>
    %145 = arith.divf %143, %144 : vector<8x128xf32>
    %146 = math.tanh %140 : vector<8x128xf32>
    %147 = vector.extract_strided_slice %145 {offsets = [0, 0], sizes = [8, 32], strides = [1, 1]} : vector<8x128xf32> to vector<8x32xf32>
    %148 = vector.extract_strided_slice %145 {offsets = [0, 32], sizes = [8, 32], strides = [1, 1]} : vector<8x128xf32> to vector<8x32xf32>
    %149 = vector.extract_strided_slice %146 {offsets = [0, 64], sizes = [8, 32], strides = [1, 1]} : vector<8x128xf32> to vector<8x32xf32>
    %150 = vector.extract_strided_slice %145 {offsets = [0, 96], sizes = [8, 32], strides = [1, 1]} : vector<8x128xf32> to vector<8x32xf32>
    %151 = arith.mulf %148, %114 : vector<8x32xf32>
    %152 = arith.mulf %147, %149 : vector<8x32xf32>
    %153 = arith.addf %151, %152 : vector<8x32xf32>
    %154 = math.tanh %153 : vector<8x32xf32>
    %155 = arith.mulf %150, %154 : vector<8x32xf32>
    %c0_50 = arith.constant 0 : index
    %c0_51 = arith.constant 0 : index
    %156 = vector.load %arg18[%c0_50, %c0_51] : memref<8x64xf32, #tpu.memory_space<vmem>>, vector<8x32xf32>
    tpu.vector_store %arg18[%c0_50, %c0_51], %155 {strides = array<i32>} : memref<8x64xf32, #tpu.memory_space<vmem>>, vector<8x32xf32>,
    %c0_52 = arith.constant 0 : index
    %c0_53 = arith.constant 0 : index
    %157 = vector.load %arg18[%c0_52, %c0_53] : memref<8x64xf32, #tpu.memory_space<vmem>>, vector<8x64xf32>
    %cst_54 = arith.constant dense<0.000000e+00> : vector<8x128xf32>
    %158 = tpu.matmul %157, %13, %cst_54 {dimension_numbers = #tpu.dot_dimension_numbers<[1], [0], [0], [1], [0, 0, 1, 1], [], []>} : vector<8x64xf32>, vector<64x128xf32>, vector<8x128xf32> -> vector<8x128xf32>
    %159 = arith.addf %158, %16 : vector<8x128xf32>
    %160 = arith.negf %159 : vector<8x128xf32>
    %161 = math.exp %160 : vector<8x128xf32>
    %cst_55 = arith.constant 1.000000e+00 : f32
    %162 = vector.broadcast %cst_55 : f32 to vector<8x128xf32>
    %163 = arith.addf %162, %161 : vector<8x128xf32>
    %164 = arith.divf %162, %163 : vector<8x128xf32>
    %165 = math.tanh %159 : vector<8x128xf32>
    %166 = vector.extract_strided_slice %164 {offsets = [0, 0], sizes = [8, 32], strides = [1, 1]} : vector<8x128xf32> to vector<8x32xf32>
    %167 = vector.extract_strided_slice %164 {offsets = [0, 32], sizes = [8, 32], strides = [1, 1]} : vector<8x128xf32> to vector<8x32xf32>
    %168 = vector.extract_strided_slice %165 {offsets = [0, 64], sizes = [8, 32], strides = [1, 1]} : vector<8x128xf32> to vector<8x32xf32>
    %169 = vector.extract_strided_slice %164 {offsets = [0, 96], sizes = [8, 32], strides = [1, 1]} : vector<8x128xf32> to vector<8x32xf32>
    %170 = arith.mulf %167, %133 : vector<8x32xf32>
    %171 = arith.mulf %166, %168 : vector<8x32xf32>
    %172 = arith.addf %170, %171 : vector<8x32xf32>
    %173 = math.tanh %172 : vector<8x32xf32>
    %174 = arith.mulf %169, %173 : vector<8x32xf32>
    %c0_56 = arith.constant 0 : index
    %c32_57 = arith.constant 32 : index
    %175 = vector.load %arg18[%c0_56, %c32_57] : memref<8x64xf32, #tpu.memory_space<vmem>>, vector<8x32xf32>
    tpu.vector_store %arg18[%c0_56, %c32_57], %174 {strides = array<i32>} : memref<8x64xf32, #tpu.memory_space<vmem>>, vector<8x32xf32>,
    %176 = vector.extract_strided_slice %11 {offsets = [4, 0, 0], sizes = [1, 8, 128], strides = [1, 1, 1]} : vector<8x8x128xf32> to vector<1x8x128xf32>
    %177 = vector.shape_cast %176 : vector<1x8x128xf32> to vector<8x128xf32>
    %cst_58 = arith.constant dense<0.000000e+00> : vector<8x128xf32>
    %178 = tpu.matmul %155, %12, %cst_58 {dimension_numbers = #tpu.dot_dimension_numbers<[1], [0], [0], [1], [0, 0, 1, 1], [], []>} : vector<8x32xf32>, vector<32x128xf32>, vector<8x128xf32> -> vector<8x128xf32>
    %179 = arith.addf %177, %178 : vector<8x128xf32>
    %180 = arith.negf %179 : vector<8x128xf32>
    %181 = math.exp %180 : vector<8x128xf32>
    %cst_59 = arith.constant 1.000000e+00 : f32
    %182 = vector.broadcast %cst_59 : f32 to vector<8x128xf32>
    %183 = arith.addf %182, %181 : vector<8x128xf32>
    %184 = arith.divf %182, %183 : vector<8x128xf32>
    %185 = math.tanh %179 : vector<8x128xf32>
    %186 = vector.extract_strided_slice %184 {offsets = [0, 0], sizes = [8, 32], strides = [1, 1]} : vector<8x128xf32> to vector<8x32xf32>
    %187 = vector.extract_strided_slice %184 {offsets = [0, 32], sizes = [8, 32], strides = [1, 1]} : vector<8x128xf32> to vector<8x32xf32>
    %188 = vector.extract_strided_slice %185 {offsets = [0, 64], sizes = [8, 32], strides = [1, 1]} : vector<8x128xf32> to vector<8x32xf32>
    %189 = vector.extract_strided_slice %184 {offsets = [0, 96], sizes = [8, 32], strides = [1, 1]} : vector<8x128xf32> to vector<8x32xf32>
    %190 = arith.mulf %187, %153 : vector<8x32xf32>
    %191 = arith.mulf %186, %188 : vector<8x32xf32>
    %192 = arith.addf %190, %191 : vector<8x32xf32>
    %193 = math.tanh %192 : vector<8x32xf32>
    %194 = arith.mulf %189, %193 : vector<8x32xf32>
    %c0_60 = arith.constant 0 : index
    %c0_61 = arith.constant 0 : index
    %195 = vector.load %arg18[%c0_60, %c0_61] : memref<8x64xf32, #tpu.memory_space<vmem>>, vector<8x32xf32>
    tpu.vector_store %arg18[%c0_60, %c0_61], %194 {strides = array<i32>} : memref<8x64xf32, #tpu.memory_space<vmem>>, vector<8x32xf32>,
    %c0_62 = arith.constant 0 : index
    %c0_63 = arith.constant 0 : index
    %196 = vector.load %arg18[%c0_62, %c0_63] : memref<8x64xf32, #tpu.memory_space<vmem>>, vector<8x64xf32>
    %cst_64 = arith.constant dense<0.000000e+00> : vector<8x128xf32>
    %197 = tpu.matmul %196, %13, %cst_64 {dimension_numbers = #tpu.dot_dimension_numbers<[1], [0], [0], [1], [0, 0, 1, 1], [], []>} : vector<8x64xf32>, vector<64x128xf32>, vector<8x128xf32> -> vector<8x128xf32>
    %198 = arith.addf %197, %16 : vector<8x128xf32>
    %199 = arith.negf %198 : vector<8x128xf32>
    %200 = math.exp %199 : vector<8x128xf32>
    %cst_65 = arith.constant 1.000000e+00 : f32
    %201 = vector.broadcast %cst_65 : f32 to vector<8x128xf32>
    %202 = arith.addf %201, %200 : vector<8x128xf32>
    %203 = arith.divf %201, %202 : vector<8x128xf32>
    %204 = math.tanh %198 : vector<8x128xf32>
    %205 = vector.extract_strided_slice %203 {offsets = [0, 0], sizes = [8, 32], strides = [1, 1]} : vector<8x128xf32> to vector<8x32xf32>
    %206 = vector.extract_strided_slice %203 {offsets = [0, 32], sizes = [8, 32], strides = [1, 1]} : vector<8x128xf32> to vector<8x32xf32>
    %207 = vector.extract_strided_slice %204 {offsets = [0, 64], sizes = [8, 32], strides = [1, 1]} : vector<8x128xf32> to vector<8x32xf32>
    %208 = vector.extract_strided_slice %203 {offsets = [0, 96], sizes = [8, 32], strides = [1, 1]} : vector<8x128xf32> to vector<8x32xf32>
    %209 = arith.mulf %206, %172 : vector<8x32xf32>
    %210 = arith.mulf %205, %207 : vector<8x32xf32>
    %211 = arith.addf %209, %210 : vector<8x32xf32>
    %212 = math.tanh %211 : vector<8x32xf32>
    %213 = arith.mulf %208, %212 : vector<8x32xf32>
    %c0_66 = arith.constant 0 : index
    %c32_67 = arith.constant 32 : index
    %214 = vector.load %arg18[%c0_66, %c32_67] : memref<8x64xf32, #tpu.memory_space<vmem>>, vector<8x32xf32>
    tpu.vector_store %arg18[%c0_66, %c32_67], %213 {strides = array<i32>} : memref<8x64xf32, #tpu.memory_space<vmem>>, vector<8x32xf32>,
    %215 = vector.extract_strided_slice %11 {offsets = [5, 0, 0], sizes = [1, 8, 128], strides = [1, 1, 1]} : vector<8x8x128xf32> to vector<1x8x128xf32>
    %216 = vector.shape_cast %215 : vector<1x8x128xf32> to vector<8x128xf32>
    %cst_68 = arith.constant dense<0.000000e+00> : vector<8x128xf32>
    %217 = tpu.matmul %194, %12, %cst_68 {dimension_numbers = #tpu.dot_dimension_numbers<[1], [0], [0], [1], [0, 0, 1, 1], [], []>} : vector<8x32xf32>, vector<32x128xf32>, vector<8x128xf32> -> vector<8x128xf32>
    %218 = arith.addf %216, %217 : vector<8x128xf32>
    %219 = arith.negf %218 : vector<8x128xf32>
    %220 = math.exp %219 : vector<8x128xf32>
    %cst_69 = arith.constant 1.000000e+00 : f32
    %221 = vector.broadcast %cst_69 : f32 to vector<8x128xf32>
    %222 = arith.addf %221, %220 : vector<8x128xf32>
    %223 = arith.divf %221, %222 : vector<8x128xf32>
    %224 = math.tanh %218 : vector<8x128xf32>
    %225 = vector.extract_strided_slice %223 {offsets = [0, 0], sizes = [8, 32], strides = [1, 1]} : vector<8x128xf32> to vector<8x32xf32>
    %226 = vector.extract_strided_slice %223 {offsets = [0, 32], sizes = [8, 32], strides = [1, 1]} : vector<8x128xf32> to vector<8x32xf32>
    %227 = vector.extract_strided_slice %224 {offsets = [0, 64], sizes = [8, 32], strides = [1, 1]} : vector<8x128xf32> to vector<8x32xf32>
    %228 = vector.extract_strided_slice %223 {offsets = [0, 96], sizes = [8, 32], strides = [1, 1]} : vector<8x128xf32> to vector<8x32xf32>
    %229 = arith.mulf %226, %192 : vector<8x32xf32>
    %230 = arith.mulf %225, %227 : vector<8x32xf32>
    %231 = arith.addf %229, %230 : vector<8x32xf32>
    %232 = math.tanh %231 : vector<8x32xf32>
    %233 = arith.mulf %228, %232 : vector<8x32xf32>
    %c0_70 = arith.constant 0 : index
    %c0_71 = arith.constant 0 : index
    %234 = vector.load %arg18[%c0_70, %c0_71] : memref<8x64xf32, #tpu.memory_space<vmem>>, vector<8x32xf32>
    tpu.vector_store %arg18[%c0_70, %c0_71], %233 {strides = array<i32>} : memref<8x64xf32, #tpu.memory_space<vmem>>, vector<8x32xf32>,
    %c0_72 = arith.constant 0 : index
    %c0_73 = arith.constant 0 : index
    %235 = vector.load %arg18[%c0_72, %c0_73] : memref<8x64xf32, #tpu.memory_space<vmem>>, vector<8x64xf32>
    %cst_74 = arith.constant dense<0.000000e+00> : vector<8x128xf32>
    %236 = tpu.matmul %235, %13, %cst_74 {dimension_numbers = #tpu.dot_dimension_numbers<[1], [0], [0], [1], [0, 0, 1, 1], [], []>} : vector<8x64xf32>, vector<64x128xf32>, vector<8x128xf32> -> vector<8x128xf32>
    %237 = arith.addf %236, %16 : vector<8x128xf32>
    %238 = arith.negf %237 : vector<8x128xf32>
    %239 = math.exp %238 : vector<8x128xf32>
    %cst_75 = arith.constant 1.000000e+00 : f32
    %240 = vector.broadcast %cst_75 : f32 to vector<8x128xf32>
    %241 = arith.addf %240, %239 : vector<8x128xf32>
    %242 = arith.divf %240, %241 : vector<8x128xf32>
    %243 = math.tanh %237 : vector<8x128xf32>
    %244 = vector.extract_strided_slice %242 {offsets = [0, 0], sizes = [8, 32], strides = [1, 1]} : vector<8x128xf32> to vector<8x32xf32>
    %245 = vector.extract_strided_slice %242 {offsets = [0, 32], sizes = [8, 32], strides = [1, 1]} : vector<8x128xf32> to vector<8x32xf32>
    %246 = vector.extract_strided_slice %243 {offsets = [0, 64], sizes = [8, 32], strides = [1, 1]} : vector<8x128xf32> to vector<8x32xf32>
    %247 = vector.extract_strided_slice %242 {offsets = [0, 96], sizes = [8, 32], strides = [1, 1]} : vector<8x128xf32> to vector<8x32xf32>
    %248 = arith.mulf %245, %211 : vector<8x32xf32>
    %249 = arith.mulf %244, %246 : vector<8x32xf32>
    %250 = arith.addf %248, %249 : vector<8x32xf32>
    %251 = math.tanh %250 : vector<8x32xf32>
    %252 = arith.mulf %247, %251 : vector<8x32xf32>
    %c0_76 = arith.constant 0 : index
    %c32_77 = arith.constant 32 : index
    %253 = vector.load %arg18[%c0_76, %c32_77] : memref<8x64xf32, #tpu.memory_space<vmem>>, vector<8x32xf32>
    tpu.vector_store %arg18[%c0_76, %c32_77], %252 {strides = array<i32>} : memref<8x64xf32, #tpu.memory_space<vmem>>, vector<8x32xf32>,
    %254 = vector.extract_strided_slice %11 {offsets = [6, 0, 0], sizes = [1, 8, 128], strides = [1, 1, 1]} : vector<8x8x128xf32> to vector<1x8x128xf32>
    %255 = vector.shape_cast %254 : vector<1x8x128xf32> to vector<8x128xf32>
    %cst_78 = arith.constant dense<0.000000e+00> : vector<8x128xf32>
    %256 = tpu.matmul %233, %12, %cst_78 {dimension_numbers = #tpu.dot_dimension_numbers<[1], [0], [0], [1], [0, 0, 1, 1], [], []>} : vector<8x32xf32>, vector<32x128xf32>, vector<8x128xf32> -> vector<8x128xf32>
    %257 = arith.addf %255, %256 : vector<8x128xf32>
    %258 = arith.negf %257 : vector<8x128xf32>
    %259 = math.exp %258 : vector<8x128xf32>
    %cst_79 = arith.constant 1.000000e+00 : f32
    %260 = vector.broadcast %cst_79 : f32 to vector<8x128xf32>
    %261 = arith.addf %260, %259 : vector<8x128xf32>
    %262 = arith.divf %260, %261 : vector<8x128xf32>
    %263 = math.tanh %257 : vector<8x128xf32>
    %264 = vector.extract_strided_slice %262 {offsets = [0, 0], sizes = [8, 32], strides = [1, 1]} : vector<8x128xf32> to vector<8x32xf32>
    %265 = vector.extract_strided_slice %262 {offsets = [0, 32], sizes = [8, 32], strides = [1, 1]} : vector<8x128xf32> to vector<8x32xf32>
    %266 = vector.extract_strided_slice %263 {offsets = [0, 64], sizes = [8, 32], strides = [1, 1]} : vector<8x128xf32> to vector<8x32xf32>
    %267 = vector.extract_strided_slice %262 {offsets = [0, 96], sizes = [8, 32], strides = [1, 1]} : vector<8x128xf32> to vector<8x32xf32>
    %268 = arith.mulf %265, %231 : vector<8x32xf32>
    %269 = arith.mulf %264, %266 : vector<8x32xf32>
    %270 = arith.addf %268, %269 : vector<8x32xf32>
    %271 = math.tanh %270 : vector<8x32xf32>
    %272 = arith.mulf %267, %271 : vector<8x32xf32>
    %c0_80 = arith.constant 0 : index
    %c0_81 = arith.constant 0 : index
    %273 = vector.load %arg18[%c0_80, %c0_81] : memref<8x64xf32, #tpu.memory_space<vmem>>, vector<8x32xf32>
    tpu.vector_store %arg18[%c0_80, %c0_81], %272 {strides = array<i32>} : memref<8x64xf32, #tpu.memory_space<vmem>>, vector<8x32xf32>,
    %c0_82 = arith.constant 0 : index
    %c0_83 = arith.constant 0 : index
    %274 = vector.load %arg18[%c0_82, %c0_83] : memref<8x64xf32, #tpu.memory_space<vmem>>, vector<8x64xf32>
    %cst_84 = arith.constant dense<0.000000e+00> : vector<8x128xf32>
    %275 = tpu.matmul %274, %13, %cst_84 {dimension_numbers = #tpu.dot_dimension_numbers<[1], [0], [0], [1], [0, 0, 1, 1], [], []>} : vector<8x64xf32>, vector<64x128xf32>, vector<8x128xf32> -> vector<8x128xf32>
    %276 = arith.addf %275, %16 : vector<8x128xf32>
    %277 = arith.negf %276 : vector<8x128xf32>
    %278 = math.exp %277 : vector<8x128xf32>
    %cst_85 = arith.constant 1.000000e+00 : f32
    %279 = vector.broadcast %cst_85 : f32 to vector<8x128xf32>
    %280 = arith.addf %279, %278 : vector<8x128xf32>
    %281 = arith.divf %279, %280 : vector<8x128xf32>
    %282 = math.tanh %276 : vector<8x128xf32>
    %283 = vector.extract_strided_slice %281 {offsets = [0, 0], sizes = [8, 32], strides = [1, 1]} : vector<8x128xf32> to vector<8x32xf32>
    %284 = vector.extract_strided_slice %281 {offsets = [0, 32], sizes = [8, 32], strides = [1, 1]} : vector<8x128xf32> to vector<8x32xf32>
    %285 = vector.extract_strided_slice %282 {offsets = [0, 64], sizes = [8, 32], strides = [1, 1]} : vector<8x128xf32> to vector<8x32xf32>
    %286 = vector.extract_strided_slice %281 {offsets = [0, 96], sizes = [8, 32], strides = [1, 1]} : vector<8x128xf32> to vector<8x32xf32>
    %287 = arith.mulf %284, %250 : vector<8x32xf32>
    %288 = arith.mulf %283, %285 : vector<8x32xf32>
    %289 = arith.addf %287, %288 : vector<8x32xf32>
    %290 = math.tanh %289 : vector<8x32xf32>
    %291 = arith.mulf %286, %290 : vector<8x32xf32>
    %c0_86 = arith.constant 0 : index
    %c32_87 = arith.constant 32 : index
    %292 = vector.load %arg18[%c0_86, %c32_87] : memref<8x64xf32, #tpu.memory_space<vmem>>, vector<8x32xf32>
    tpu.vector_store %arg18[%c0_86, %c32_87], %291 {strides = array<i32>} : memref<8x64xf32, #tpu.memory_space<vmem>>, vector<8x32xf32>,
    %293 = vector.extract_strided_slice %11 {offsets = [7, 0, 0], sizes = [1, 8, 128], strides = [1, 1, 1]} : vector<8x8x128xf32> to vector<1x8x128xf32>
    %294 = vector.shape_cast %293 : vector<1x8x128xf32> to vector<8x128xf32>
    %cst_88 = arith.constant dense<0.000000e+00> : vector<8x128xf32>
    %295 = tpu.matmul %272, %12, %cst_88 {dimension_numbers = #tpu.dot_dimension_numbers<[1], [0], [0], [1], [0, 0, 1, 1], [], []>} : vector<8x32xf32>, vector<32x128xf32>, vector<8x128xf32> -> vector<8x128xf32>
    %296 = arith.addf %294, %295 : vector<8x128xf32>
    %297 = arith.negf %296 : vector<8x128xf32>
    %298 = math.exp %297 : vector<8x128xf32>
    %cst_89 = arith.constant 1.000000e+00 : f32
    %299 = vector.broadcast %cst_89 : f32 to vector<8x128xf32>
    %300 = arith.addf %299, %298 : vector<8x128xf32>
    %301 = arith.divf %299, %300 : vector<8x128xf32>
    %302 = math.tanh %296 : vector<8x128xf32>
    %303 = vector.extract_strided_slice %301 {offsets = [0, 0], sizes = [8, 32], strides = [1, 1]} : vector<8x128xf32> to vector<8x32xf32>
    %304 = vector.extract_strided_slice %301 {offsets = [0, 32], sizes = [8, 32], strides = [1, 1]} : vector<8x128xf32> to vector<8x32xf32>
    %305 = vector.extract_strided_slice %302 {offsets = [0, 64], sizes = [8, 32], strides = [1, 1]} : vector<8x128xf32> to vector<8x32xf32>
    %306 = vector.extract_strided_slice %301 {offsets = [0, 96], sizes = [8, 32], strides = [1, 1]} : vector<8x128xf32> to vector<8x32xf32>
    %307 = arith.mulf %304, %270 : vector<8x32xf32>
    %308 = arith.mulf %303, %305 : vector<8x32xf32>
    %309 = arith.addf %307, %308 : vector<8x32xf32>
    %310 = math.tanh %309 : vector<8x32xf32>
    %311 = arith.mulf %306, %310 : vector<8x32xf32>
    %c0_90 = arith.constant 0 : index
    %c0_91 = arith.constant 0 : index
    %312 = vector.load %arg18[%c0_90, %c0_91] : memref<8x64xf32, #tpu.memory_space<vmem>>, vector<8x32xf32>
    tpu.vector_store %arg18[%c0_90, %c0_91], %311 {strides = array<i32>} : memref<8x64xf32, #tpu.memory_space<vmem>>, vector<8x32xf32>,
    %c0_92 = arith.constant 0 : index
    %c0_93 = arith.constant 0 : index
    %313 = vector.load %arg18[%c0_92, %c0_93] : memref<8x64xf32, #tpu.memory_space<vmem>>, vector<8x64xf32>
    %cst_94 = arith.constant dense<0.000000e+00> : vector<8x128xf32>
    %314 = tpu.matmul %313, %13, %cst_94 {dimension_numbers = #tpu.dot_dimension_numbers<[1], [0], [0], [1], [0, 0, 1, 1], [], []>} : vector<8x64xf32>, vector<64x128xf32>, vector<8x128xf32> -> vector<8x128xf32>
    %315 = arith.addf %314, %16 : vector<8x128xf32>
    %316 = arith.negf %315 : vector<8x128xf32>
    %317 = math.exp %316 : vector<8x128xf32>
    %cst_95 = arith.constant 1.000000e+00 : f32
    %318 = vector.broadcast %cst_95 : f32 to vector<8x128xf32>
    %319 = arith.addf %318, %317 : vector<8x128xf32>
    %320 = arith.divf %318, %319 : vector<8x128xf32>
    %321 = math.tanh %315 : vector<8x128xf32>
    %322 = vector.extract_strided_slice %320 {offsets = [0, 0], sizes = [8, 32], strides = [1, 1]} : vector<8x128xf32> to vector<8x32xf32>
    %323 = vector.extract_strided_slice %320 {offsets = [0, 32], sizes = [8, 32], strides = [1, 1]} : vector<8x128xf32> to vector<8x32xf32>
    %324 = vector.extract_strided_slice %321 {offsets = [0, 64], sizes = [8, 32], strides = [1, 1]} : vector<8x128xf32> to vector<8x32xf32>
    %325 = vector.extract_strided_slice %320 {offsets = [0, 96], sizes = [8, 32], strides = [1, 1]} : vector<8x128xf32> to vector<8x32xf32>
    %326 = arith.mulf %323, %289 : vector<8x32xf32>
    %327 = arith.mulf %322, %324 : vector<8x32xf32>
    %328 = arith.addf %326, %327 : vector<8x32xf32>
    %329 = math.tanh %328 : vector<8x32xf32>
    %330 = arith.mulf %325, %329 : vector<8x32xf32>
    %c0_96 = arith.constant 0 : index
    %c32_97 = arith.constant 32 : index
    %331 = vector.load %arg18[%c0_96, %c32_97] : memref<8x64xf32, #tpu.memory_space<vmem>>, vector<8x32xf32>
    tpu.vector_store %arg18[%c0_96, %c32_97], %330 {strides = array<i32>} : memref<8x64xf32, #tpu.memory_space<vmem>>, vector<8x32xf32>,
    %c0_98 = arith.constant 0 : index
    %c0_99 = arith.constant 0 : index
    %332 = vector.load %arg19[%c0_98, %c0_99] : memref<8x32xf32, #tpu.memory_space<vmem>>, vector<8x32xf32>
    tpu.vector_store %arg19[%c0_98, %c0_99], %309 {strides = array<i32>} : memref<8x32xf32, #tpu.memory_space<vmem>>, vector<8x32xf32>,
    %c0_100 = arith.constant 0 : index
    %c0_101 = arith.constant 0 : index
    %333 = vector.load %arg20[%c0_100, %c0_101] : memref<8x32xf32, #tpu.memory_space<vmem>>, vector<8x32xf32>
    tpu.vector_store %arg20[%c0_100, %c0_101], %328 {strides = array<i32>} : memref<8x32xf32, #tpu.memory_space<vmem>>, vector<8x32xf32>,
    %c0_i32_102 = arith.constant 0 : i32
    %334 = arith.cmpi eq, %arg1, %c0_i32_102 : i32
    %335 = arith.extui %334 : i1 to i32
    %c0_i32_103 = arith.constant 0 : i32
    %336 = arith.cmpi ne, %335, %c0_i32_103 : i32
    scf.if %336 {
      %c0_104 = arith.constant 0 : index
      %c0_105 = arith.constant 0 : index
      %337 = vector.load %arg14[%c0_104, %c0_105] : memref<32x1xf32, #tpu.memory_space<vmem>>, vector<32x1xf32>
      %cst_106 = arith.constant dense<0.000000e+00> : vector<8x1xf32>
      %338 = tpu.matmul %330, %337, %cst_106 {dimension_numbers = #tpu.dot_dimension_numbers<[1], [0], [0], [1], [0, 0, 1, 1], [], []>} : vector<8x32xf32>, vector<32x1xf32>, vector<8x1xf32> -> vector<8x1xf32>
      %c0_107 = arith.constant 0 : index
      %c0_108 = arith.constant 0 : index
      %339 = vector.load %arg15[%c0_107, %c0_108] : memref<1x1xf32, #tpu.memory_space<vmem>>, vector<1x1xf32>
      %340 = vector.broadcast %339 : vector<1x1xf32> to vector<8x1xf32>
      %341 = arith.addf %338, %340 : vector<8x1xf32>
      %c0_109 = arith.constant 0 : index
      %c0_110 = arith.constant 0 : index
      %342 = vector.load %arg16[%c0_109, %c0_110] : memref<8x1xf32, #tpu.memory_space<vmem>>, vector<8x1xf32>
      tpu.vector_store %arg16[%c0_109, %c0_110], %341 {strides = array<i32>} : memref<8x1xf32, #tpu.memory_space<vmem>>, vector<8x1xf32>,
    } else {
    }
    return
  }
  func.func @transform_0(%arg0: i32, %arg1: i32) -> (i32, i32, i32) {
    %c0_i32 = arith.constant 0 : i32
    %c0_i32_0 = arith.constant 0 : i32
    return %arg1, %arg0, %c0_i32 : i32, i32, i32
  }
  func.func @transform_1(%arg0: i32, %arg1: i32) -> (i32, i32) {
    %c0_i32 = arith.constant 0 : i32
    %c0_i32_0 = arith.constant 0 : i32
    return %arg0, %c0_i32 : i32, i32
  }
  func.func @transform_2(%arg0: i32, %arg1: i32) -> (i32, i32) {
    %c0_i32 = arith.constant 0 : i32
    %c0_i32_0 = arith.constant 0 : i32
    %c0_i32_1 = arith.constant 0 : i32
    return %c0_i32, %c0_i32_0 : i32, i32
  }
  func.func @transform_3(%arg0: i32, %arg1: i32) -> (i32, i32) {
    %c0_i32 = arith.constant 0 : i32
    %c0_i32_0 = arith.constant 0 : i32
    %c0_i32_1 = arith.constant 0 : i32
    return %c0_i32, %c0_i32_0 : i32, i32
  }
  func.func @transform_4(%arg0: i32, %arg1: i32) -> (i32, i32) {
    %c0_i32 = arith.constant 0 : i32
    %c0_i32_0 = arith.constant 0 : i32
    %c0_i32_1 = arith.constant 0 : i32
    return %c0_i32, %c0_i32_0 : i32, i32
  }
  func.func @transform_5(%arg0: i32, %arg1: i32) -> (i32, i32) {
    %c0_i32 = arith.constant 0 : i32
    %c0_i32_0 = arith.constant 0 : i32
    %c0_i32_1 = arith.constant 0 : i32
    return %c0_i32, %c0_i32_0 : i32, i32
  }
  func.func @transform_6(%arg0: i32, %arg1: i32) -> (i32, i32) {
    %c0_i32 = arith.constant 0 : i32
    %c0_i32_0 = arith.constant 0 : i32
    %c0_i32_1 = arith.constant 0 : i32
    return %c0_i32, %c0_i32_0 : i32, i32
  }
  func.func @transform_7(%arg0: i32, %arg1: i32) -> (i32, i32) {
    %c0_i32 = arith.constant 0 : i32
    %c0_i32_0 = arith.constant 0 : i32
    %c0_i32_1 = arith.constant 0 : i32
    return %c0_i32, %c0_i32_0 : i32, i32
  }
  func.func @transform_8(%arg0: i32, %arg1: i32) -> (i32, i32) {
    %c0_i32 = arith.constant 0 : i32
    %c0_i32_0 = arith.constant 0 : i32
    %c0_i32_1 = arith.constant 0 : i32
    return %c0_i32, %c0_i32_0 : i32, i32
  }
  func.func @transform_9(%arg0: i32, %arg1: i32) -> (i32, i32) {
    %c0_i32 = arith.constant 0 : i32
    %c0_i32_0 = arith.constant 0 : i32
    %c0_i32_1 = arith.constant 0 : i32
    return %c0_i32, %c0_i32_0 : i32, i32
  }
  func.func @transform_10(%arg0: i32, %arg1: i32) -> (i32, i32) {
    %c0_i32 = arith.constant 0 : i32
    %c0_i32_0 = arith.constant 0 : i32
    %c0_i32_1 = arith.constant 0 : i32
    return %c0_i32, %c0_i32_0 : i32, i32
  }
  func.func @transform_11(%arg0: i32, %arg1: i32) -> (i32, i32) {
    %c0_i32 = arith.constant 0 : i32
    %c0_i32_0 = arith.constant 0 : i32
    %c0_i32_1 = arith.constant 0 : i32
    return %c0_i32, %c0_i32_0 : i32, i32
  }
  func.func @transform_12(%arg0: i32, %arg1: i32) -> (i32, i32) {
    %c0_i32 = arith.constant 0 : i32
    %c0_i32_0 = arith.constant 0 : i32
    %c0_i32_1 = arith.constant 0 : i32
    return %c0_i32, %c0_i32_0 : i32, i32
  }
  func.func @transform_13(%arg0: i32, %arg1: i32) -> (i32, i32) {
    %c0_i32 = arith.constant 0 : i32
    %c0_i32_0 = arith.constant 0 : i32
    %c0_i32_1 = arith.constant 0 : i32
    return %c0_i32, %c0_i32_0 : i32, i32
  }
  func.func @transform_14(%arg0: i32, %arg1: i32) -> (i32, i32) {
    %c0_i32 = arith.constant 0 : i32
    %c0_i32_0 = arith.constant 0 : i32
    return %arg0, %c0_i32 : i32, i32
  }
}

</mosaic_0001>

<llo_original>
// kernel: tpu_custom_call.1
$region0: #{tpu_custom_call.1}
  #allocation0 [shape = 'u32[]', space=smem, size = 0x4, offset = 0x4, fixed_abs, tag = 'smem constant byte address 0x4 - core index']
  #allocation1 [shape = 'u32[144,128]{1,0:T(1,128)}', space=vmem, size = 0x12000, scoped, tag = 'internal scratch']
  #allocation2 [shape = 'f32[8,128]{1,0:T(8,128)}', space=vmem, size = 0x1000, scoped, tag = 'scratch operand']
  #allocation3 [shape = 'f32[8,64]{1,0:T(8,128)}', space=vmem, size = 0x1000, scoped, tag = 'scratch operand']
  #allocation4 [shape = 'f32[8,32]{1,0:T(8,128)}', space=vmem, size = 0x1000, scoped, tag = 'scratch operand']
  #allocation5 [shape = 'f32[8,32]{1,0:T(8,128)}', space=vmem, size = 0x1000, scoped, tag = 'scratch operand']
  #allocation6 [shape = 'f32[1,1]{1,0:T(1,128)S(1)}', space=vmem, size = 0x200, scoped, tag = 'scoped memory for tpu_custom_call.1']
  %s0 = inlined_call_operand.vmem [shape: f32[8,8,4], index: 0, kind: input, shape index: {}]
  %s1 = inlined_call_operand.vmem [shape: f32[8,5], index: 1, kind: input, shape index: {}]
  %s2 = inlined_call_operand.vmem [shape: f32[5,64], index: 2, kind: input, shape index: {}]
  %s3 = inlined_call_operand.vmem [shape: f32[1,64], index: 3, kind: input, shape index: {}]
  %s4 = inlined_call_operand.vmem [shape: f32[64,32], index: 4, kind: input, shape index: {}]
  %s5 = inlined_call_operand.vmem [shape: f32[1,32], index: 5, kind: input, shape index: {}]
  %s6 = inlined_call_operand.vmem [shape: f32[4,128], index: 6, kind: input, shape index: {}]
  %s7 = inlined_call_operand.vmem [shape: f32[32,128], index: 7, kind: input, shape index: {}]
  %s8 = inlined_call_operand.vmem [shape: f32[1,128], index: 8, kind: input, shape index: {}]
  %s9 = inlined_call_operand.vmem [shape: f32[32,128], index: 9, kind: input, shape index: {}]
  %s10 = inlined_call_operand.vmem [shape: f32[64,128], index: 10, kind: input, shape index: {}]
  %s11 = inlined_call_operand.vmem [shape: f32[1,128], index: 11, kind: input, shape index: {}]
  %s12 = inlined_call_operand.vmem [shape: f32[32,1], index: 12, kind: input, shape index: {}]
  %s13 = inlined_call_operand.<no memory space> [shape: f32[1,1], index: 13, kind: input, shape index: {}]
  %s14 = inlined_call_operand.vmem [shape: f32[8,1], index: 14, kind: output, shape index: {}]
  %s15 = sld [smem:[#allocation0]]
  $region74: #{tpu_custom_call.1} parent=0
    _
  %s17 = ssub.s32 1, %s15
  %s18 = scalar_select 0, %s17, %s15
  %v19 = vstv %s13
  %20 = vst [vmem:[#allocation6] sm:$0x1] %v19
  // Predicated region
  $region2: #{tpu_custom_call.1} parent=0 // pred_check
    _
  $region3: #{tpu_custom_call.1} parent=0 // pred_check_branch
    %22 = sbr.rel (0) target = $region5
  $region4: #{tpu_custom_call.1} parent=0 // pred_region
    _
  $region5: #{tpu_custom_call.1} parent=0 // pred_fallthru
    _
  // Predicated region
  $region6: #{tpu_custom_call.1} parent=0 // pred_check
    _
  $region7: #{tpu_custom_call.1} parent=0 // pred_check_branch
    %24 = sbr.rel (0) target = $region9
  $region8: #{tpu_custom_call.1} parent=0 // pred_region
    _
  $region9: #{tpu_custom_call.1} parent=0 // pred_fallthru
    _
  // Predicated region
  $region10: #{tpu_custom_call.1} parent=0 // pred_check
    _
  $region11: #{tpu_custom_call.1} parent=0 // pred_check_branch
    %26 = sbr.rel (0) target = $region13
  $region12: #{tpu_custom_call.1} parent=0 // pred_region
    _
  $region13: #{tpu_custom_call.1} parent=0 // pred_fallthru
    _
  // Predicated region
  $region14: #{tpu_custom_call.1} parent=0 // pred_check
    _
  $region15: #{tpu_custom_call.1} parent=0 // pred_check_branch
    %28 = sbr.rel (0) target = $region17
  $region16: #{tpu_custom_call.1} parent=0 // pred_region
    _
  $region17: #{tpu_custom_call.1} parent=0 // pred_fallthru
    _
  // Predicated region
  $region18: #{tpu_custom_call.1} parent=0 // pred_check
    _
  $region19: #{tpu_custom_call.1} parent=0 // pred_check_branch
    %30 = sbr.rel (0) target = $region21
  $region20: #{tpu_custom_call.1} parent=0 // pred_region
    _
  $region21: #{tpu_custom_call.1} parent=0 // pred_fallthru
    _
  // Predicated region
  $region22: #{tpu_custom_call.1} parent=0 // pred_check
    _
  $region23: #{tpu_custom_call.1} parent=0 // pred_check_branch
    %32 = sbr.rel (0) target = $region25
  $region24: #{tpu_custom_call.1} parent=0 // pred_region
    _
  $region25: #{tpu_custom_call.1} parent=0 // pred_fallthru
    _
  // Predicated region
  $region26: #{tpu_custom_call.1} parent=0 // pred_check
    _
  $region27: #{tpu_custom_call.1} parent=0 // pred_check_branch
    %34 = sbr.rel (0) target = $region29
  $region28: #{tpu_custom_call.1} parent=0 // pred_region
    _
  $region29: #{tpu_custom_call.1} parent=0 // pred_fallthru
    _
  // Predicated region
  $region30: #{tpu_custom_call.1} parent=0 // pred_check
    _
  $region31: #{tpu_custom_call.1} parent=0 // pred_check_branch
    %36 = sbr.rel (0) target = $region33
  $region32: #{tpu_custom_call.1} parent=0 // pred_region
    _
  $region33: #{tpu_custom_call.1} parent=0 // pred_fallthru
    _
  // Predicated region
  $region34: #{tpu_custom_call.1} parent=0 // pred_check
    _
  $region35: #{tpu_custom_call.1} parent=0 // pred_check_branch
    %38 = sbr.rel (0) target = $region37
  $region36: #{tpu_custom_call.1} parent=0 // pred_region
    _
  $region37: #{tpu_custom_call.1} parent=0 // pred_fallthru
    _
  // Predicated region
  $region38: #{tpu_custom_call.1} parent=0 // pred_check
    _
  $region39: #{tpu_custom_call.1} parent=0 // pred_check_branch
    %40 = sbr.rel (0) target = $region41
  $region40: #{tpu_custom_call.1} parent=0 // pred_region
    _
  $region41: #{tpu_custom_call.1} parent=0 // pred_fallthru
    _
  // Predicated region
  $region42: #{tpu_custom_call.1} parent=0 // pred_check
    _
  $region43: #{tpu_custom_call.1} parent=0 // pred_check_branch
    %42 = sbr.rel (0) target = $region45
  $region44: #{tpu_custom_call.1} parent=0 // pred_region
    _
  $region45: #{tpu_custom_call.1} parent=0 // pred_fallthru
    _
  // Predicated region
  $region46: #{tpu_custom_call.1} parent=0 // pred_check
    _
  $region47: #{tpu_custom_call.1} parent=0 // pred_check_branch
    %44 = sbr.rel (0) target = $region49
  $region48: #{tpu_custom_call.1} parent=0 // pred_region
    _
  $region49: #{tpu_custom_call.1} parent=0 // pred_fallthru
    _
  // Predicated region
  $region50: #{tpu_custom_call.1} parent=0 // pred_check
    _
  $region51: #{tpu_custom_call.1} parent=0 // pred_check_branch
    %46 = sbr.rel (0) target = $region53
  $region52: #{tpu_custom_call.1} parent=0 // pred_region
    _
  $region53: #{tpu_custom_call.1} parent=0 // pred_fallthru
    _
  // Predicated region
  $region54: #{tpu_custom_call.1} parent=0 // pred_check
    _
  $region55: #{tpu_custom_call.1} parent=0 // pred_check_branch
    %48 = sbr.rel (0) target = $region57
  $region56: #{tpu_custom_call.1} parent=0 // pred_region
    _
  $region57: #{tpu_custom_call.1} parent=0 // pred_fallthru
    _
  %p49 = scmp.eq.s32.totalorder 0, 0
  // Predicated region
  $region58: #{tpu_custom_call.1} parent=0 // pred_check
    %p50 = pneg %p49
  $region59: #{tpu_custom_call.1} parent=0 // pred_check_branch
    %52 = sbr.rel (%p50) target = $region61
  $region60: #{tpu_custom_call.1} parent=0 // pred_region
    %v53 = vld [vmem:[%s1] sm:$0xff]
    %v54 = vld [vmem:[%s2] sm:$0x1f]
    %v55 = vld [vmem:[%s3] sm:$0x1]
    %v57 = vlaneseq
    %v58 = vshrl.u32 %v57, 7
    %v59 = vsub.s32 0, %v58
    %v60 = vrot.slane %v55, %v59
    %vm62 = vcmask 39936
    %v64 = vsel %vm62, %v53, 0
    %vm66 = vcmask 1044480
    %v68 = vsel %vm66, %v54, 0
    %70 = vmatprep.subr.mxu0 0.0
    %71 = vmatpush1.msra.mxu0 %v68
    %72 = vmatprep.subr.mxu0 0.0
    %73 = vmatpush1.msra.mxu0 0.0
    %74 = vmatprep.subr.mxu0 0.0
    %75 = vmatpush1.msra.mxu0 0.0
    %76 = vmatprep.subr.mxu0 0.0
    %77 = vmatpush1.msra.mxu0 0.0
    %78 = vmatprep.subr.mxu0 0.0
    %79 = vmatpush1.msra.mxu0 0.0
    %80 = vmatprep.subr.mxu0 0.0
    %81 = vmatpush1.msra.mxu0 0.0
    %82 = vmatprep.subr.mxu0 0.0
    %83 = vmatpush1.msra.mxu0 0.0
    %84 = vmatprep.subr.mxu0 0.0
    %85 = vmatpush1.msra.mxu0 0.0
    %86 = vmatprep.subr.mxu0 0.0
    %87 = vmatpush1.msra.mxu0 0.0
    %88 = vmatprep.subr.mxu0 0.0
    %89 = vmatpush1.msra.mxu0 0.0
    %90 = vmatprep.subr.mxu0 0.0
    %91 = vmatpush1.msra.mxu0 0.0
    %92 = vmatprep.subr.mxu0 0.0
    %93 = vmatpush1.msra.mxu0 0.0
    %94 = vmatprep.subr.mxu0 0.0
    %95 = vmatpush1.msra.mxu0 0.0
    %96 = vmatprep.subr.mxu0 0.0
    %97 = vmatpush1.msra.mxu0 0.0
    %98 = vmatprep.subr.mxu0 0.0
    %99 = vmatpush1.msra.mxu0 0.0
    %100 = vmatprep.subr.mxu0 0.0
    %101 = vmatpush1.msra.mxu0 0.0
    %102 = vmatprep.subr.mxu0 0.0
    %103 = vmatpush1.msra.mxu0 0.0
    %104 = vmatprep.subr.mxu0 0.0
    %105 = vmatpush1.msra.mxu0 0.0
    %106 = vmatprep.subr.mxu0 0.0
    %107 = vmatpush1.msra.mxu0 0.0
    %108 = vmatprep.subr.mxu0 0.0
    %109 = vmatpush1.msra.mxu0 0.0
    %110 = vmatprep.subr.mxu0 0.0
    %111 = vmatpush1.msra.mxu0 0.0
    %112 = vmatprep.subr.mxu0 0.0
    %113 = vmatpush1.msra.mxu0 0.0
    %114 = vmatprep.subr.mxu0 0.0
    %115 = vmatpush1.msra.mxu0 0.0
    %116 = vmatprep.subr.mxu0 0.0
    %117 = vmatpush1.msra.mxu0 0.0
    %118 = vmatprep.subr.mxu0 0.0
    %119 = vmatpush1.msra.mxu0 0.0
    %120 = vmatprep.subr.mxu0 0.0
    %121 = vmatpush1.msra.mxu0 0.0
    %122 = vmatprep.subr.mxu0 0.0
    %123 = vmatpush1.msra.mxu0 0.0
    %124 = vmatprep.subr.mxu0 0.0
    %125 = vmatpush1.msra.mxu0 0.0
    %126 = vmatprep.subr.mxu0 0.0
    %127 = vmatpush1.msra.mxu0 0.0
    %128 = vmatprep.subr.mxu0 0.0
    %129 = vmatpush1.msra.mxu0 0.0
    %130 = vmatprep.subr.mxu0 0.0
    %131 = vmatpush1.msra.mxu0 0.0
    %132 = vmatprep.subr.mxu0 0.0
    %133 = vmatpush1.msra.mxu0 0.0
    %134 = vmatprep.mubr.f32.mxu0 0.0
    %135 = vmatmul.mubr.f32.gmra.mrb[0].mxu0 %v64
    %v136 = vpop.f32.mrb[0].mxu0
    %v137 = vadd.f32 %v60, %v136
    %v138 = vpop.f32.mrb[0].mxu0
    %139 = vdwg.mxu0
    %v140 = vmax.f32 %v137, 0.0
    %v141 = vld [vmem:[%s4] sm:$0xff]
    %v142 = vld [vmem:[%s4 + $0x8] sm:$0xff]
    %v143 = vld [vmem:[%s4 + $0x10] sm:$0xff]
    %v144 = vld [vmem:[%s4 + $0x18] sm:$0xff]
    %v145 = vld [vmem:[%s4 + $0x20] sm:$0xff]
    %v146 = vld [vmem:[%s4 + $0x28] sm:$0xff]
    %v147 = vld [vmem:[%s4 + $0x30] sm:$0xff]
    %v148 = vld [vmem:[%s4 + $0x38] sm:$0xff]
    %v149 = vld [vmem:[%s5] sm:$0x1]
    %v151 = vlaneseq
    %v152 = vshrl.u32 %v151, 7
    %v153 = vsub.s32 0, %v152
    %v154 = vrot.slane %v149, %v153
    %vm156 = vcmask 523264
    %v158 = vsel %vm156, %v140, 0
    %160 = vmatprep.subr.mxu0 0.0
    %161 = vmatpush1.msra.mxu0 %v141
    %162 = vmatprep.subr.mxu0 0.0
    %163 = vmatpush1.msra.mxu0 %v142
    %164 = vmatprep.subr.mxu0 0.0
    %165 = vmatpush1.msra.mxu0 %v143
    %166 = vmatprep.subr.mxu0 0.0
    %167 = vmatpush1.msra.mxu0 %v144
    %168 = vmatprep.subr.mxu0 0.0
    %169 = vmatpush1.msra.mxu0 %v145
    %170 = vmatprep.subr.mxu0 0.0
    %171 = vmatpush1.msra.mxu0 %v146
    %172 = vmatprep.subr.mxu0 0.0
    %173 = vmatpush1.msra.mxu0 %v147
    %174 = vmatprep.subr.mxu0 0.0
    %175 = vmatpush1.msra.mxu0 %v148
    %176 = vmatprep.subr.mxu0 0.0
    %177 = vmatpush1.msra.mxu0 0.0
    %178 = vmatprep.subr.mxu0 0.0
    %179 = vmatpush1.msra.mxu0 0.0
    %180 = vmatprep.subr.mxu0 0.0
    %181 = vmatpush1.msra.mxu0 0.0
    %182 = vmatprep.subr.mxu0 0.0
    %183 = vmatpush1.msra.mxu0 0.0
    %184 = vmatprep.subr.mxu0 0.0
    %185 = vmatpush1.msra.mxu0 0.0
    %186 = vmatprep.subr.mxu0 0.0
    %187 = vmatpush1.msra.mxu0 0.0
    %188 = vmatprep.subr.mxu0 0.0
    %189 = vmatpush1.msra.mxu0 0.0
    %190 = vmatprep.subr.mxu0 0.0
    %191 = vmatpush1.msra.mxu0 0.0
    %192 = vmatprep.subr.mxu0 0.0
    %193 = vmatpush1.msra.mxu0 0.0
    %194 = vmatprep.subr.mxu0 0.0
    %195 = vmatpush1.msra.mxu0 0.0
    %196 = vmatprep.subr.mxu0 0.0
    %197 = vmatpush1.msra.mxu0 0.0
    %198 = vmatprep.subr.mxu0 0.0
    %199 = vmatpush1.msra.mxu0 0.0
    %200 = vmatprep.subr.mxu0 0.0
    %201 = vmatpush1.msra.mxu0 0.0
    %202 = vmatprep.subr.mxu0 0.0
    %203 = vmatpush1.msra.mxu0 0.0
    %204 = vmatprep.subr.mxu0 0.0
    %205 = vmatpush1.msra.mxu0 0.0
    %206 = vmatprep.subr.mxu0 0.0
    %207 = vmatpush1.msra.mxu0 0.0
    %208 = vmatprep.subr.mxu0 0.0
    %209 = vmatpush1.msra.mxu0 0.0
    %210 = vmatprep.subr.mxu0 0.0
    %211 = vmatpush1.msra.mxu0 0.0
    %212 = vmatprep.subr.mxu0 0.0
    %213 = vmatpush1.msra.mxu0 0.0
    %214 = vmatprep.subr.mxu0 0.0
    %215 = vmatpush1.msra.mxu0 0.0
    %216 = vmatprep.subr.mxu0 0.0
    %217 = vmatpush1.msra.mxu0 0.0
    %218 = vmatprep.subr.mxu0 0.0
    %219 = vmatpush1.msra.mxu0 0.0
    %220 = vmatprep.subr.mxu0 0.0
    %221 = vmatpush1.msra.mxu0 0.0
    %222 = vmatprep.subr.mxu0 0.0
    %223 = vmatpush1.msra.mxu0 0.0
    %224 = vmatprep.mubr.f32.mxu0 0.0
    %225 = vmatmul.mubr.f32.gmra.mrb[0].mxu0 %v158
    %v226 = vpop.f32.mrb[0].mxu0
    %v227 = vadd.f32 %v154, %v226
    %v228 = vpop.f32.mrb[0].mxu0
    %229 = vdwg.mxu0
    %v230 = vld [vmem:[%s7] sm:$0xff]
    %v231 = vld [vmem:[%s7 + $0x8] sm:$0xff]
    %v232 = vld [vmem:[%s7 + $0x10] sm:$0xff]
    %v233 = vld [vmem:[%s7 + $0x18] sm:$0xff]
    %v234 = vld [vmem:[%s8] sm:$0x1]
    %v236 = vlaneseq
    %v237 = vshrl.u32 %v236, 7
    %v238 = vsub.s32 0, %v237
    %v239 = vrot.slane %v234, %v238
    %vm241 = vcmask 261120
    %v243 = vsel %vm241, %v227, 0
    %245 = vmatprep.subr.mxu0 0.0
    %246 = vmatpush1.msra.mxu0 %v230
    %247 = vmatprep.subr.mxu0 0.0
    %248 = vmatpush1.msra.mxu0 %v231
    %249 = vmatprep.subr.mxu0 0.0
    %250 = vmatpush1.msra.mxu0 %v232
    %251 = vmatprep.subr.mxu0 0.0
    %252 = vmatpush1.msra.mxu0 %v233
    %253 = vmatprep.subr.mxu0 0.0
    %254 = vmatpush1.msra.mxu0 0.0
    %255 = vmatprep.subr.mxu0 0.0
    %256 = vmatpush1.msra.mxu0 0.0
    %257 = vmatprep.subr.mxu0 0.0
    %258 = vmatpush1.msra.mxu0 0.0
    %259 = vmatprep.subr.mxu0 0.0
    %260 = vmatpush1.msra.mxu0 0.0
    %261 = vmatprep.subr.mxu0 0.0
    %262 = vmatpush1.msra.mxu0 0.0
    %263 = vmatprep.subr.mxu0 0.0
    %264 = vmatpush1.msra.mxu0 0.0
    %265 = vmatprep.subr.mxu0 0.0
    %266 = vmatpush1.msra.mxu0 0.0
    %267 = vmatprep.subr.mxu0 0.0
    %268 = vmatpush1.msra.mxu0 0.0
    %269 = vmatprep.subr.mxu0 0.0
    %270 = vmatpush1.msra.mxu0 0.0
    %271 = vmatprep.subr.mxu0 0.0
    %272 = vmatpush1.msra.mxu0 0.0
    %273 = vmatprep.subr.mxu0 0.0
    %274 = vmatpush1.msra.mxu0 0.0
    %275 = vmatprep.subr.mxu0 0.0
    %276 = vmatpush1.msra.mxu0 0.0
    %277 = vmatprep.subr.mxu0 0.0
    %278 = vmatpush1.msra.mxu0 0.0
    %279 = vmatprep.subr.mxu0 0.0
    %280 = vmatpush1.msra.mxu0 0.0
    %281 = vmatprep.subr.mxu0 0.0
    %282 = vmatpush1.msra.mxu0 0.0
    %283 = vmatprep.subr.mxu0 0.0
    %284 = vmatpush1.msra.mxu0 0.0
    %285 = vmatprep.subr.mxu0 0.0
    %286 = vmatpush1.msra.mxu0 0.0
    %287 = vmatprep.subr.mxu0 0.0
    %288 = vmatpush1.msra.mxu0 0.0
    %289 = vmatprep.subr.mxu0 0.0
    %290 = vmatpush1.msra.mxu0 0.0
    %291 = vmatprep.subr.mxu0 0.0
    %292 = vmatpush1.msra.mxu0 0.0
    %293 = vmatprep.subr.mxu0 0.0
    %294 = vmatpush1.msra.mxu0 0.0
    %295 = vmatprep.subr.mxu0 0.0
    %296 = vmatpush1.msra.mxu0 0.0
    %297 = vmatprep.subr.mxu0 0.0
    %298 = vmatpush1.msra.mxu0 0.0
    %299 = vmatprep.subr.mxu0 0.0
    %300 = vmatpush1.msra.mxu0 0.0
    %301 = vmatprep.subr.mxu0 0.0
    %302 = vmatpush1.msra.mxu0 0.0
    %303 = vmatprep.subr.mxu0 0.0
    %304 = vmatpush1.msra.mxu0 0.0
    %305 = vmatprep.subr.mxu0 0.0
    %306 = vmatpush1.msra.mxu0 0.0
    %307 = vmatprep.subr.mxu0 0.0
    %308 = vmatpush1.msra.mxu0 0.0
    %309 = vmatprep.mubr.f32.mxu0 0.0
    %310 = vmatmul.mubr.f32.gmra.mrb[0].mxu0 %v243
    %v311 = vpop.f32.mrb[0].mxu0
    %v312 = vadd.f32 %v239, %v311
    %v313 = vpop.f32.mrb[0].mxu0
    %314 = vdwg.mxu0
    %315 = vst [vmem:[#allocation2] sm:$0xff] %v312
    %316 = vst.msk [vmem:[#allocation3] sm:$0xff] %vm156, 0.0
    %317 = vst.msk [vmem:[#allocation4] sm:$0xff] %vm241, 0.0
    %318 = vst.msk [vmem:[#allocation5] sm:$0xff] %vm241, 0.0
  $region61: #{tpu_custom_call.1} parent=0 // pred_fallthru
    _
  %v319 = vld [vmem:[%s0] sm:$0xff]
  %v320 = vld [vmem:[%s0 + $0x8] sm:$0xff]
  %v321 = vld [vmem:[%s0 + $0x10] sm:$0xff]
  %v322 = vld [vmem:[%s0 + $0x18] sm:$0xff]
  %v323 = vld [vmem:[%s0 + $0x20] sm:$0xff]
  %v324 = vld [vmem:[%s0 + $0x28] sm:$0xff]
  %v325 = vld [vmem:[%s0 + $0x30] sm:$0xff]
  %v326 = vld [vmem:[%s0 + $0x38] sm:$0xff]
  %v327 = vld [vmem:[%s6] sm:$0xf]
  %vm328 = vcmask 31744
  %v330 = vsel %vm328, %v319, 0
  %v333 = vsel %vm328, %v320, 0
  %v336 = vsel %vm328, %v321, 0
  %v339 = vsel %vm328, %v322, 0
  %v342 = vsel %vm328, %v323, 0
  %v345 = vsel %vm328, %v324, 0
  %v348 = vsel %vm328, %v325, 0
  %v351 = vsel %vm328, %v326, 0
  %vm353 = vcmask 1043456
  %v355 = vsel %vm353, %v327, 0
  %357 = vmatprep.subr.mxu0 0.0
  %358 = vmatpush1.msra.mxu0 %v355
  %359 = vmatprep.subr.mxu0 0.0
  %360 = vmatpush1.msra.mxu0 0.0
  %361 = vmatprep.subr.mxu0 0.0
  %362 = vmatpush1.msra.mxu0 0.0
  %363 = vmatprep.subr.mxu0 0.0
  %364 = vmatpush1.msra.mxu0 0.0
  %365 = vmatprep.subr.mxu0 0.0
  %366 = vmatpush1.msra.mxu0 0.0
  %367 = vmatprep.subr.mxu0 0.0
  %368 = vmatpush1.msra.mxu0 0.0
  %369 = vmatprep.subr.mxu0 0.0
  %370 = vmatpush1.msra.mxu0 0.0
  %371 = vmatprep.subr.mxu0 0.0
  %372 = vmatpush1.msra.mxu0 0.0
  %373 = vmatprep.subr.mxu0 0.0
  %374 = vmatpush1.msra.mxu0 0.0
  %375 = vmatprep.subr.mxu0 0.0
  %376 = vmatpush1.msra.mxu0 0.0
  %377 = vmatprep.subr.mxu0 0.0
  %378 = vmatpush1.msra.mxu0 0.0
  %379 = vmatprep.subr.mxu0 0.0
  %380 = vmatpush1.msra.mxu0 0.0
  %381 = vmatprep.subr.mxu0 0.0
  %382 = vmatpush1.msra.mxu0 0.0
  %383 = vmatprep.subr.mxu0 0.0
  %384 = vmatpush1.msra.mxu0 0.0
  %385 = vmatprep.subr.mxu0 0.0
  %386 = vmatpush1.msra.mxu0 0.0
  %387 = vmatprep.subr.mxu0 0.0
  %388 = vmatpush1.msra.mxu0 0.0
  %389 = vmatprep.subr.mxu0 0.0
  %390 = vmatpush1.msra.mxu0 0.0
  %391 = vmatprep.subr.mxu0 0.0
  %392 = vmatpush1.msra.mxu0 0.0
  %393 = vmatprep.subr.mxu0 0.0
  %394 = vmatpush1.msra.mxu0 0.0
  %395 = vmatprep.subr.mxu0 0.0
  %396 = vmatpush1.msra.mxu0 0.0
  %397 = vmatprep.subr.mxu0 0.0
  %398 = vmatpush1.msra.mxu0 0.0
  %399 = vmatprep.subr.mxu0 0.0
  %400 = vmatpush1.msra.mxu0 0.0
  %401 = vmatprep.subr.mxu0 0.0
  %402 = vmatpush1.msra.mxu0 0.0
  %403 = vmatprep.subr.mxu0 0.0
  %404 = vmatpush1.msra.mxu0 0.0
  %405 = vmatprep.subr.mxu0 0.0
  %406 = vmatpush1.msra.mxu0 0.0
  %407 = vmatprep.subr.mxu0 0.0
  %408 = vmatpush1.msra.mxu0 0.0
  %409 = vmatprep.subr.mxu0 0.0
  %410 = vmatpush1.msra.mxu0 0.0
  %411 = vmatprep.subr.mxu0 0.0
  %412 = vmatpush1.msra.mxu0 0.0
  %413 = vmatprep.subr.mxu0 0.0
  %414 = vmatpush1.msra.mxu0 0.0
  %415 = vmatprep.subr.mxu0 0.0
  %416 = vmatpush1.msra.mxu0 0.0
  %417 = vmatprep.subr.mxu0 0.0
  %418 = vmatpush1.msra.mxu0 0.0
  %419 = vmatprep.subr.mxu0 0.0
  %420 = vmatpush1.msra.mxu0 0.0
  %421 = vmatprep.mubr.f32.mxu0 0.0
  %422 = vmatmul.mubr.f32.gmra.mrb[0].mxu0 %v330
  %v423 = vpop.f32.mrb[0].mxu0
  %v424 = vadd.f32 0.0, %v423
  %v425 = vpop.f32.mrb[0].mxu0
  %426 = vmatprep.mubr.f32.mxu0 0.0
  %427 = vmatmul.mubr.f32.gmra.mrb[0].mxu0 %v333
  %v428 = vpop.f32.mrb[0].mxu0
  %v429 = vadd.f32 0.0, %v428
  %v430 = vpop.f32.mrb[0].mxu0
  %431 = vmatprep.mubr.f32.mxu0 0.0
  %432 = vmatmul.mubr.f32.gmra.mrb[0].mxu0 %v336
  %v433 = vpop.f32.mrb[0].mxu0
  %v434 = vadd.f32 0.0, %v433
  %v435 = vpop.f32.mrb[0].mxu0
  %436 = vmatprep.mubr.f32.mxu0 0.0
  %437 = vmatmul.mubr.f32.gmra.mrb[0].mxu0 %v339
  %v438 = vpop.f32.mrb[0].mxu0
  %v439 = vadd.f32 0.0, %v438
  %v440 = vpop.f32.mrb[0].mxu0
  %441 = vmatprep.mubr.f32.mxu0 0.0
  %442 = vmatmul.mubr.f32.gmra.mrb[0].mxu0 %v342
  %v443 = vpop.f32.mrb[0].mxu0
  %v444 = vadd.f32 0.0, %v443
  %v445 = vpop.f32.mrb[0].mxu0
  %446 = vmatprep.mubr.f32.mxu0 0.0
  %447 = vmatmul.mubr.f32.gmra.mrb[0].mxu0 %v345
  %v448 = vpop.f32.mrb[0].mxu0
  %v449 = vadd.f32 0.0, %v448
  %v450 = vpop.f32.mrb[0].mxu0
  %451 = vmatprep.mubr.f32.mxu0 0.0
  %452 = vmatmul.mubr.f32.gmra.mrb[0].mxu0 %v348
  %v453 = vpop.f32.mrb[0].mxu0
  %v454 = vadd.f32 0.0, %v453
  %v455 = vpop.f32.mrb[0].mxu0
  %456 = vmatprep.mubr.f32.mxu0 0.0
  %457 = vmatmul.mubr.f32.gmra.mrb[0].mxu0 %v351
  %v458 = vpop.f32.mrb[0].mxu0
  %v459 = vadd.f32 0.0, %v458
  %v460 = vpop.f32.mrb[0].mxu0
  %461 = vdwg.mxu0
  %v462 = vld [vmem:[#allocation2] sm:$0xff]
  %v463 = vadd.f32 %v424, %v462
  %v464 = vadd.f32 %v429, %v462
  %v465 = vadd.f32 %v434, %v462
  %v466 = vadd.f32 %v439, %v462
  %v467 = vadd.f32 %v444, %v462
  %v468 = vadd.f32 %v449, %v462
  %v469 = vadd.f32 %v454, %v462
  %v470 = vadd.f32 %v459, %v462
  %v471 = vld [vmem:[%s9] sm:$0xff]
  %v472 = vld [vmem:[%s9 + $0x8] sm:$0xff]
  %v473 = vld [vmem:[%s9 + $0x10] sm:$0xff]
  %v474 = vld [vmem:[%s9 + $0x18] sm:$0xff]
  %v475 = vld [vmem:[%s10] sm:$0xff]
  %v476 = vld [vmem:[%s10 + $0x8] sm:$0xff]
  %v477 = vld [vmem:[%s10 + $0x10] sm:$0xff]
  %v478 = vld [vmem:[%s10 + $0x18] sm:$0xff]
  %v479 = vld [vmem:[%s10 + $0x20] sm:$0xff]
  %v480 = vld [vmem:[%s10 + $0x28] sm:$0xff]
  %v481 = vld [vmem:[%s10 + $0x30] sm:$0xff]
  %v482 = vld [vmem:[%s10 + $0x38] sm:$0xff]
  %v483 = vld [vmem:[%s11] sm:$0x1]
  %v485 = vlaneseq
  %v486 = vshrl.u32 %v485, 7
  %v487 = vsub.s32 0, %v486
  %v488 = vrot.slane %v483, %v487
  %v490 = vld [vmem:[#allocation3] sm:$0xff]
  %v491 = vld [vmem:[#allocation4] sm:$0xff]
  %v492 = vld [vmem:[#allocation5] sm:$0xff]
  %vm493 = vcmask 261120
  %v495 = vsel %vm493, %v490, 0
  %497 = vmatprep.subr.mxu0 0.0
  %498 = vmatpush1.msra.mxu0 %v471
  %499 = vmatprep.subr.mxu0 0.0
  %500 = vmatpush1.msra.mxu0 %v472
  %501 = vmatprep.subr.mxu0 0.0
  %502 = vmatpush1.msra.mxu0 %v473
  %503 = vmatprep.subr.mxu0 0.0
  %504 = vmatpush1.msra.mxu0 %v474
  %505 = vmatprep.subr.mxu0 0.0
  %506 = vmatpush1.msra.mxu0 0.0
  %507 = vmatprep.subr.mxu0 0.0
  %508 = vmatpush1.msra.mxu0 0.0
  %509 = vmatprep.subr.mxu0 0.0
  %510 = vmatpush1.msra.mxu0 0.0
  %511 = vmatprep.subr.mxu0 0.0
  %512 = vmatpush1.msra.mxu0 0.0
  %513 = vmatprep.subr.mxu0 0.0
  %514 = vmatpush1.msra.mxu0 0.0
  %515 = vmatprep.subr.mxu0 0.0
  %516 = vmatpush1.msra.mxu0 0.0
  %517 = vmatprep.subr.mxu0 0.0
  %518 = vmatpush1.msra.mxu0 0.0
  %519 = vmatprep.subr.mxu0 0.0
  %520 = vmatpush1.msra.mxu0 0.0
  %521 = vmatprep.subr.mxu0 0.0
  %522 = vmatpush1.msra.mxu0 0.0
  %523 = vmatprep.subr.mxu0 0.0
  %524 = vmatpush1.msra.mxu0 0.0
  %525 = vmatprep.subr.mxu0 0.0
  %526 = vmatpush1.msra.mxu0 0.0
  %527 = vmatprep.subr.mxu0 0.0
  %528 = vmatpush1.msra.mxu0 0.0
  %529 = vmatprep.subr.mxu0 0.0
  %530 = vmatpush1.msra.mxu0 0.0
  %531 = vmatprep.subr.mxu0 0.0
  %532 = vmatpush1.msra.mxu0 0.0
  %533 = vmatprep.subr.mxu0 0.0
  %534 = vmatpush1.msra.mxu0 0.0
  %535 = vmatprep.subr.mxu0 0.0
  %536 = vmatpush1.msra.mxu0 0.0
  %537 = vmatprep.subr.mxu0 0.0
  %538 = vmatpush1.msra.mxu0 0.0
  %539 = vmatprep.subr.mxu0 0.0
  %540 = vmatpush1.msra.mxu0 0.0
  %541 = vmatprep.subr.mxu0 0.0
  %542 = vmatpush1.msra.mxu0 0.0
  %543 = vmatprep.subr.mxu0 0.0
  %544 = vmatpush1.msra.mxu0 0.0
  %545 = vmatprep.subr.mxu0 0.0
  %546 = vmatpush1.msra.mxu0 0.0
  %547 = vmatprep.subr.mxu0 0.0
  %548 = vmatpush1.msra.mxu0 0.0
  %549 = vmatprep.subr.mxu0 0.0
  %550 = vmatpush1.msra.mxu0 0.0
  %551 = vmatprep.subr.mxu0 0.0
  %552 = vmatpush1.msra.mxu0 0.0
  %553 = vmatprep.subr.mxu0 0.0
  %554 = vmatpush1.msra.mxu0 0.0
  %555 = vmatprep.subr.mxu0 0.0
  %556 = vmatpush1.msra.mxu0 0.0
  %557 = vmatprep.subr.mxu0 0.0
  %558 = vmatpush1.msra.mxu0 0.0
  %559 = vmatprep.subr.mxu0 0.0
  %560 = vmatpush1.msra.mxu0 0.0
  %561 = vmatprep.mubr.f32.mxu0 0.0
  %562 = vmatmul.mubr.f32.gmra.mrb[0].mxu0 %v495
  %v563 = vpop.f32.mrb[0].mxu0
  %v564 = vadd.f32 0.0, %v563
  %v565 = vpop.f32.mrb[0].mxu0
  %566 = vdwg.mxu0
  %v567 = vadd.f32 %v463, %v564
  %v568 = vxor.u32 %v567, 2147483648
  %v569 = vmul.f32 %v568, 1.442695
  %v570 = vpow.pop %v569
  %v571 = vadd.f32 %v570, 1.0
  %v572 = vrcp.pop %v571
  %v573 = vmul.f32 1.0, %v572
  %v574 = vtanh.pop %v567
  %576 = vrot.lane.b32.xlu0 %v491, 32
  %v577 = vpop.permute.xlu0 %576
  %v579 = vmul.f32 %v573, %v577
  %581 = vrot.lane.b32.xlu0 %v574, 64
  %v582 = vpop.permute.xlu0 %581
  %v584 = vmul.f32 %v573, %v582
  %586 = vrot.lane.b32.xlu0 %v584, 32
  %v587 = vpop.permute.xlu0 %586
  %v589 = vadd.f32 %v579, %v587
  %v590 = vtanh.pop %v589
  %592 = vrot.lane.b32.xlu0 %v590, 64
  %v593 = vpop.permute.xlu0 %592
  %v595 = vmul.f32 %v573, %v593
  %597 = vrot.lane.b32.xlu0 %v595, 32
  %v598 = vpop.permute.xlu0 %597
  %600 = vst.msk [vmem:[#allocation3] sm:$0xff] %vm493, %v598
  %v601 = vld [vmem:[#allocation3] sm:$0xff]
  %vm602 = vcmask 523264
  %v604 = vsel %vm602, %v601, 0
  %606 = vmatprep.subr.mxu0 0.0
  %607 = vmatpush1.msra.mxu0 %v475
  %608 = vmatprep.subr.mxu0 0.0
  %609 = vmatpush1.msra.mxu0 %v476
  %610 = vmatprep.subr.mxu0 0.0
  %611 = vmatpush1.msra.mxu0 %v477
  %612 = vmatprep.subr.mxu0 0.0
  %613 = vmatpush1.msra.mxu0 %v478
  %614 = vmatprep.subr.mxu0 0.0
  %615 = vmatpush1.msra.mxu0 %v479
  %616 = vmatprep.subr.mxu0 0.0
  %617 = vmatpush1.msra.mxu0 %v480
  %618 = vmatprep.subr.mxu0 0.0
  %619 = vmatpush1.msra.mxu0 %v481
  %620 = vmatprep.subr.mxu0 0.0
  %621 = vmatpush1.msra.mxu0 %v482
  %622 = vmatprep.subr.mxu0 0.0
  %623 = vmatpush1.msra.mxu0 0.0
  %624 = vmatprep.subr.mxu0 0.0
  %625 = vmatpush1.msra.mxu0 0.0
  %626 = vmatprep.subr.mxu0 0.0
  %627 = vmatpush1.msra.mxu0 0.0
  %628 = vmatprep.subr.mxu0 0.0
  %629 = vmatpush1.msra.mxu0 0.0
  %630 = vmatprep.subr.mxu0 0.0
  %631 = vmatpush1.msra.mxu0 0.0
  %632 = vmatprep.subr.mxu0 0.0
  %633 = vmatpush1.msra.mxu0 0.0
  %634 = vmatprep.subr.mxu0 0.0
  %635 = vmatpush1.msra.mxu0 0.0
  %636 = vmatprep.subr.mxu0 0.0
  %637 = vmatpush1.msra.mxu0 0.0
  %638 = vmatprep.subr.mxu0 0.0
  %639 = vmatpush1.msra.mxu0 0.0
  %640 = vmatprep.subr.mxu0 0.0
  %641 = vmatpush1.msra.mxu0 0.0
  %642 = vmatprep.subr.mxu0 0.0
  %643 = vmatpush1.msra.mxu0 0.0
  %644 = vmatprep.subr.mxu0 0.0
  %645 = vmatpush1.msra.mxu0 0.0
  %646 = vmatprep.subr.mxu0 0.0
  %647 = vmatpush1.msra.mxu0 0.0
  %648 = vmatprep.subr.mxu0 0.0
  %649 = vmatpush1.msra.mxu0 0.0
  %650 = vmatprep.subr.mxu0 0.0
  %651 = vmatpush1.msra.mxu0 0.0
  %652 = vmatprep.subr.mxu0 0.0
  %653 = vmatpush1.msra.mxu0 0.0
  %654 = vmatprep.subr.mxu0 0.0
  %655 = vmatpush1.msra.mxu0 0.0
  %656 = vmatprep.subr.mxu0 0.0
  %657 = vmatpush1.msra.mxu0 0.0
  %658 = vmatprep.subr.mxu0 0.0
  %659 = vmatpush1.msra.mxu0 0.0
  %660 = vmatprep.subr.mxu0 0.0
  %661 = vmatpush1.msra.mxu0 0.0
  %662 = vmatprep.subr.mxu0 0.0
  %663 = vmatpush1.msra.mxu0 0.0
  %664 = vmatprep.subr.mxu0 0.0
  %665 = vmatpush1.msra.mxu0 0.0
  %666 = vmatprep.subr.mxu0 0.0
  %667 = vmatpush1.msra.mxu0 0.0
  %668 = vmatprep.subr.mxu0 0.0
  %669 = vmatpush1.msra.mxu0 0.0
  %670 = vmatprep.mubr.f32.mxu0 0.0
  %671 = vmatmul.mubr.f32.gmra.mrb[0].mxu0 %v604
  %v672 = vpop.f32.mrb[0].mxu0
  %v673 = vadd.f32 %v488, %v672
  %v674 = vpop.f32.mrb[0].mxu0
  %675 = vdwg.mxu0
  %v676 = vxor.u32 %v673, 2147483648
  %v677 = vmul.f32 %v676, 1.442695
  %v678 = vpow.pop %v677
  %v679 = vadd.f32 %v678, 1.0
  %v680 = vrcp.pop %v679
  %v681 = vmul.f32 1.0, %v680
  %v682 = vtanh.pop %v673
  %684 = vrot.lane.b32.xlu0 %v492, 32
  %v685 = vpop.permute.xlu0 %684
  %v687 = vmul.f32 %v681, %v685
  %689 = vrot.lane.b32.xlu0 %v682, 64
  %v690 = vpop.permute.xlu0 %689
  %v692 = vmul.f32 %v681, %v690
  %694 = vrot.lane.b32.xlu0 %v692, 32
  %v695 = vpop.permute.xlu0 %694
  %v697 = vadd.f32 %v687, %v695
  %v698 = vtanh.pop %v697
  %700 = vrot.lane.b32.xlu0 %v698, 64
  %v701 = vpop.permute.xlu0 %700
  %v703 = vmul.f32 %v681, %v701
  %705 = vrot.lane.b32.xlu0 %v703, 64
  %v706 = vpop.permute.xlu0 %705
  %vm708 = vcmask 523520
  %709 = vst.msk [vmem:[#allocation3] sm:$0xff] %vm708, %v706
  %v710 = vsel %vm493, %v598, 0
  %712 = vmatprep.subr.mxu0 0.0
  %713 = vmatpush1.msra.mxu0 %v471
  %714 = vmatprep.subr.mxu0 0.0
  %715 = vmatpush1.msra.mxu0 %v472
  %716 = vmatprep.subr.mxu0 0.0
  %717 = vmatpush1.msra.mxu0 %v473
  %718 = vmatprep.subr.mxu0 0.0
  %719 = vmatpush1.msra.mxu0 %v474
  %720 = vmatprep.subr.mxu0 0.0
  %721 = vmatpush1.msra.mxu0 0.0
  %722 = vmatprep.subr.mxu0 0.0
  %723 = vmatpush1.msra.mxu0 0.0
  %724 = vmatprep.subr.mxu0 0.0
  %725 = vmatpush1.msra.mxu0 0.0
  %726 = vmatprep.subr.mxu0 0.0
  %727 = vmatpush1.msra.mxu0 0.0
  %728 = vmatprep.subr.mxu0 0.0
  %729 = vmatpush1.msra.mxu0 0.0
  %730 = vmatprep.subr.mxu0 0.0
  %731 = vmatpush1.msra.mxu0 0.0
  %732 = vmatprep.subr.mxu0 0.0
  %733 = vmatpush1.msra.mxu0 0.0
  %734 = vmatprep.subr.mxu0 0.0
  %735 = vmatpush1.msra.mxu0 0.0
  %736 = vmatprep.subr.mxu0 0.0
  %737 = vmatpush1.msra.mxu0 0.0
  %738 = vmatprep.subr.mxu0 0.0
  %739 = vmatpush1.msra.mxu0 0.0
  %740 = vmatprep.subr.mxu0 0.0
  %741 = vmatpush1.msra.mxu0 0.0
  %742 = vmatprep.subr.mxu0 0.0
  %743 = vmatpush1.msra.mxu0 0.0
  %744 = vmatprep.subr.mxu0 0.0
  %745 = vmatpush1.msra.mxu0 0.0
  %746 = vmatprep.subr.mxu0 0.0
  %747 = vmatpush1.msra.mxu0 0.0
  %748 = vmatprep.subr.mxu0 0.0
  %749 = vmatpush1.msra.mxu0 0.0
  %750 = vmatprep.subr.mxu0 0.0
  %751 = vmatpush1.msra.mxu0 0.0
  %752 = vmatprep.subr.mxu0 0.0
  %753 = vmatpush1.msra.mxu0 0.0
  %754 = vmatprep.subr.mxu0 0.0
  %755 = vmatpush1.msra.mxu0 0.0
  %756 = vmatprep.subr.mxu0 0.0
  %757 = vmatpush1.msra.mxu0 0.0
  %758 = vmatprep.subr.mxu0 0.0
  %759 = vmatpush1.msra.mxu0 0.0
  %760 = vmatprep.subr.mxu0 0.0
  %761 = vmatpush1.msra.mxu0 0.0
  %762 = vmatprep.subr.mxu0 0.0
  %763 = vmatpush1.msra.mxu0 0.0
  %764 = vmatprep.subr.mxu0 0.0
  %765 = vmatpush1.msra.mxu0 0.0
  %766 = vmatprep.subr.mxu0 0.0
  %767 = vmatpush1.msra.mxu0 0.0
  %768 = vmatprep.subr.mxu0 0.0
  %769 = vmatpush1.msra.mxu0 0.0
  %770 = vmatprep.subr.mxu0 0.0
  %771 = vmatpush1.msra.mxu0 0.0
  %772 = vmatprep.subr.mxu0 0.0
  %773 = vmatpush1.msra.mxu0 0.0
  %774 = vmatprep.subr.mxu0 0.0
  %775 = vmatpush1.msra.mxu0 0.0
  %776 = vmatprep.mubr.f32.mxu0 0.0
  %777 = vmatmul.mubr.f32.gmra.mrb[0].mxu0 %v710
  %v778 = vpop.f32.mrb[0].mxu0
  %v779 = vadd.f32 0.0, %v778
  %v780 = vpop.f32.mrb[0].mxu0
  %781 = vdwg.mxu0
  %v782 = vadd.f32 %v464, %v779
  %v783 = vxor.u32 %v782, 2147483648
  %v784 = vmul.f32 %v783, 1.442695
  %v785 = vpow.pop %v784
  %v786 = vadd.f32 %v785, 1.0
  %v787 = vrcp.pop %v786
  %v788 = vmul.f32 1.0, %v787
  %v789 = vtanh.pop %v782
  %v790 = vmul.f32 %v788, %v589
  %792 = vrot.lane.b32.xlu0 %v789, 64
  %v793 = vpop.permute.xlu0 %792
  %v795 = vmul.f32 %v788, %v793
  %797 = vrot.lane.b32.xlu0 %v795, 32
  %v798 = vpop.permute.xlu0 %797
  %v800 = vadd.f32 %v790, %v798
  %v801 = vtanh.pop %v800
  %803 = vrot.lane.b32.xlu0 %v801, 64
  %v804 = vpop.permute.xlu0 %803
  %v806 = vmul.f32 %v788, %v804
  %808 = vrot.lane.b32.xlu0 %v806, 32
  %v809 = vpop.permute.xlu0 %808
  %811 = vst.msk [vmem:[#allocation3] sm:$0xff] %vm493, %v809
  %v812 = vld [vmem:[#allocation3] sm:$0xff]
  %v814 = vsel %vm602, %v812, 0
  %816 = vmatprep.subr.mxu0 0.0
  %817 = vmatpush1.msra.mxu0 %v475
  %818 = vmatprep.subr.mxu0 0.0
  %819 = vmatpush1.msra.mxu0 %v476
  %820 = vmatprep.subr.mxu0 0.0
  %821 = vmatpush1.msra.mxu0 %v477
  %822 = vmatprep.subr.mxu0 0.0
  %823 = vmatpush1.msra.mxu0 %v478
  %824 = vmatprep.subr.mxu0 0.0
  %825 = vmatpush1.msra.mxu0 %v479
  %826 = vmatprep.subr.mxu0 0.0
  %827 = vmatpush1.msra.mxu0 %v480
  %828 = vmatprep.subr.mxu0 0.0
  %829 = vmatpush1.msra.mxu0 %v481
  %830 = vmatprep.subr.mxu0 0.0
  %831 = vmatpush1.msra.mxu0 %v482
  %832 = vmatprep.subr.mxu0 0.0
  %833 = vmatpush1.msra.mxu0 0.0
  %834 = vmatprep.subr.mxu0 0.0
  %835 = vmatpush1.msra.mxu0 0.0
  %836 = vmatprep.subr.mxu0 0.0
  %837 = vmatpush1.msra.mxu0 0.0
  %838 = vmatprep.subr.mxu0 0.0
  %839 = vmatpush1.msra.mxu0 0.0
  %840 = vmatprep.subr.mxu0 0.0
  %841 = vmatpush1.msra.mxu0 0.0
  %842 = vmatprep.subr.mxu0 0.0
  %843 = vmatpush1.msra.mxu0 0.0
  %844 = vmatprep.subr.mxu0 0.0
  %845 = vmatpush1.msra.mxu0 0.0
  %846 = vmatprep.subr.mxu0 0.0
  %847 = vmatpush1.msra.mxu0 0.0
  %848 = vmatprep.subr.mxu0 0.0
  %849 = vmatpush1.msra.mxu0 0.0
  %850 = vmatprep.subr.mxu0 0.0
  %851 = vmatpush1.msra.mxu0 0.0
  %852 = vmatprep.subr.mxu0 0.0
  %853 = vmatpush1.msra.mxu0 0.0
  %854 = vmatprep.subr.mxu0 0.0
  %855 = vmatpush1.msra.mxu0 0.0
  %856 = vmatprep.subr.mxu0 0.0
  %857 = vmatpush1.msra.mxu0 0.0
  %858 = vmatprep.subr.mxu0 0.0
  %859 = vmatpush1.msra.mxu0 0.0
  %860 = vmatprep.subr.mxu0 0.0
  %861 = vmatpush1.msra.mxu0 0.0
  %862 = vmatprep.subr.mxu0 0.0
  %863 = vmatpush1.msra.mxu0 0.0
  %864 = vmatprep.subr.mxu0 0.0
  %865 = vmatpush1.msra.mxu0 0.0
  %866 = vmatprep.subr.mxu0 0.0
  %867 = vmatpush1.msra.mxu0 0.0
  %868 = vmatprep.subr.mxu0 0.0
  %869 = vmatpush1.msra.mxu0 0.0
  %870 = vmatprep.subr.mxu0 0.0
  %871 = vmatpush1.msra.mxu0 0.0
  %872 = vmatprep.subr.mxu0 0.0
  %873 = vmatpush1.msra.mxu0 0.0
  %874 = vmatprep.subr.mxu0 0.0
  %875 = vmatpush1.msra.mxu0 0.0
  %876 = vmatprep.subr.mxu0 0.0
  %877 = vmatpush1.msra.mxu0 0.0
  %878 = vmatprep.subr.mxu0 0.0
  %879 = vmatpush1.msra.mxu0 0.0
  %880 = vmatprep.mubr.f32.mxu0 0.0
  %881 = vmatmul.mubr.f32.gmra.mrb[0].mxu0 %v814
  %v882 = vpop.f32.mrb[0].mxu0
  %v883 = vadd.f32 %v488, %v882
  %v884 = vpop.f32.mrb[0].mxu0
  %885 = vdwg.mxu0
  %v886 = vxor.u32 %v883, 2147483648
  %v887 = vmul.f32 %v886, 1.442695
  %v888 = vpow.pop %v887
  %v889 = vadd.f32 %v888, 1.0
  %v890 = vrcp.pop %v889
  %v891 = vmul.f32 1.0, %v890
  %v892 = vtanh.pop %v883
  %v893 = vmul.f32 %v891, %v697
  %895 = vrot.lane.b32.xlu0 %v892, 64
  %v896 = vpop.permute.xlu0 %895
  %v898 = vmul.f32 %v891, %v896
  %900 = vrot.lane.b32.xlu0 %v898, 32
  %v901 = vpop.permute.xlu0 %900
  %v903 = vadd.f32 %v893, %v901
  %v904 = vtanh.pop %v903
  %906 = vrot.lane.b32.xlu0 %v904, 64
  %v907 = vpop.permute.xlu0 %906
  %v909 = vmul.f32 %v891, %v907
  %911 = vrot.lane.b32.xlu0 %v909, 64
  %v912 = vpop.permute.xlu0 %911
  %914 = vst.msk [vmem:[#allocation3] sm:$0xff] %vm708, %v912
  %v915 = vsel %vm493, %v809, 0
  %917 = vmatprep.subr.mxu0 0.0
  %918 = vmatpush1.msra.mxu0 %v471
  %919 = vmatprep.subr.mxu0 0.0
  %920 = vmatpush1.msra.mxu0 %v472
  %921 = vmatprep.subr.mxu0 0.0
  %922 = vmatpush1.msra.mxu0 %v473
  %923 = vmatprep.subr.mxu0 0.0
  %924 = vmatpush1.msra.mxu0 %v474
  %925 = vmatprep.subr.mxu0 0.0
  %926 = vmatpush1.msra.mxu0 0.0
  %927 = vmatprep.subr.mxu0 0.0
  %928 = vmatpush1.msra.mxu0 0.0
  %929 = vmatprep.subr.mxu0 0.0
  %930 = vmatpush1.msra.mxu0 0.0
  %931 = vmatprep.subr.mxu0 0.0
  %932 = vmatpush1.msra.mxu0 0.0
  %933 = vmatprep.subr.mxu0 0.0
  %934 = vmatpush1.msra.mxu0 0.0
  %935 = vmatprep.subr.mxu0 0.0
  %936 = vmatpush1.msra.mxu0 0.0
  %937 = vmatprep.subr.mxu0 0.0
  %938 = vmatpush1.msra.mxu0 0.0
  %939 = vmatprep.subr.mxu0 0.0
  %940 = vmatpush1.msra.mxu0 0.0
  %941 = vmatprep.subr.mxu0 0.0
  %942 = vmatpush1.msra.mxu0 0.0
  %943 = vmatprep.subr.mxu0 0.0
  %944 = vmatpush1.msra.mxu0 0.0
  %945 = vmatprep.subr.mxu0 0.0
  %946 = vmatpush1.msra.mxu0 0.0
  %947 = vmatprep.subr.mxu0 0.0
  %948 = vmatpush1.msra.mxu0 0.0
  %949 = vmatprep.subr.mxu0 0.0
  %950 = vmatpush1.msra.mxu0 0.0
  %951 = vmatprep.subr.mxu0 0.0
  %952 = vmatpush1.msra.mxu0 0.0
  %953 = vmatprep.subr.mxu0 0.0
  %954 = vmatpush1.msra.mxu0 0.0
  %955 = vmatprep.subr.mxu0 0.0
  %956 = vmatpush1.msra.mxu0 0.0
  %957 = vmatprep.subr.mxu0 0.0
  %958 = vmatpush1.msra.mxu0 0.0
  %959 = vmatprep.subr.mxu0 0.0
  %960 = vmatpush1.msra.mxu0 0.0
  %961 = vmatprep.subr.mxu0 0.0
  %962 = vmatpush1.msra.mxu0 0.0
  %963 = vmatprep.subr.mxu0 0.0
  %964 = vmatpush1.msra.mxu0 0.0
  %965 = vmatprep.subr.mxu0 0.0
  %966 = vmatpush1.msra.mxu0 0.0
  %967 = vmatprep.subr.mxu0 0.0
  %968 = vmatpush1.msra.mxu0 0.0
  %969 = vmatprep.subr.mxu0 0.0
  %970 = vmatpush1.msra.mxu0 0.0
  %971 = vmatprep.subr.mxu0 0.0
  %972 = vmatpush1.msra.mxu0 0.0
  %973 = vmatprep.subr.mxu0 0.0
  %974 = vmatpush1.msra.mxu0 0.0
  %975 = vmatprep.subr.mxu0 0.0
  %976 = vmatpush1.msra.mxu0 0.0
  %977 = vmatprep.subr.mxu0 0.0
  %978 = vmatpush1.msra.mxu0 0.0
  %979 = vmatprep.subr.mxu0 0.0
  %980 = vmatpush1.msra.mxu0 0.0
  %981 = vmatprep.mubr.f32.mxu0 0.0
  %982 = vmatmul.mubr.f32.gmra.mrb[0].mxu0 %v915
  %v983 = vpop.f32.mrb[0].mxu0
  %v984 = vadd.f32 0.0, %v983
  %v985 = vpop.f32.mrb[0].mxu0
  %986 = vdwg.mxu0
  %v987 = vadd.f32 %v465, %v984
  %v988 = vxor.u32 %v987, 2147483648
  %v989 = vmul.f32 %v988, 1.442695
  %v990 = vpow.pop %v989
  %v991 = vadd.f32 %v990, 1.0
  %v992 = vrcp.pop %v991
  %v993 = vmul.f32 1.0, %v992
  %v994 = vtanh.pop %v987
  %v995 = vmul.f32 %v993, %v800
  %997 = vrot.lane.b32.xlu0 %v994, 64
  %v998 = vpop.permute.xlu0 %997
  %v1000 = vmul.f32 %v993, %v998
  %1002 = vrot.lane.b32.xlu0 %v1000, 32
  %v1003 = vpop.permute.xlu0 %1002
  %v1005 = vadd.f32 %v995, %v1003
  %v1006 = vtanh.pop %v1005
  %1008 = vrot.lane.b32.xlu0 %v1006, 64
  %v1009 = vpop.permute.xlu0 %1008
  %v1011 = vmul.f32 %v993, %v1009
  %1013 = vrot.lane.b32.xlu0 %v1011, 32
  %v1014 = vpop.permute.xlu0 %1013
  %1016 = vst.msk [vmem:[#allocation3] sm:$0xff] %vm493, %v1014
  %v1017 = vld [vmem:[#allocation3] sm:$0xff]
  %v1019 = vsel %vm602, %v1017, 0
  %1021 = vmatprep.subr.mxu0 0.0
  %1022 = vmatpush1.msra.mxu0 %v475
  %1023 = vmatprep.subr.mxu0 0.0
  %1024 = vmatpush1.msra.mxu0 %v476
  %1025 = vmatprep.subr.mxu0 0.0
  %1026 = vmatpush1.msra.mxu0 %v477
  %1027 = vmatprep.subr.mxu0 0.0
  %1028 = vmatpush1.msra.mxu0 %v478
  %1029 = vmatprep.subr.mxu0 0.0
  %1030 = vmatpush1.msra.mxu0 %v479
  %1031 = vmatprep.subr.mxu0 0.0
  %1032 = vmatpush1.msra.mxu0 %v480
  %1033 = vmatprep.subr.mxu0 0.0
  %1034 = vmatpush1.msra.mxu0 %v481
  %1035 = vmatprep.subr.mxu0 0.0
  %1036 = vmatpush1.msra.mxu0 %v482
  %1037 = vmatprep.subr.mxu0 0.0
  %1038 = vmatpush1.msra.mxu0 0.0
  %1039 = vmatprep.subr.mxu0 0.0
  %1040 = vmatpush1.msra.mxu0 0.0
  %1041 = vmatprep.subr.mxu0 0.0
  %1042 = vmatpush1.msra.mxu0 0.0
  %1043 = vmatprep.subr.mxu0 0.0
  %1044 = vmatpush1.msra.mxu0 0.0
  %1045 = vmatprep.subr.mxu0 0.0
  %1046 = vmatpush1.msra.mxu0 0.0
  %1047 = vmatprep.subr.mxu0 0.0
  %1048 = vmatpush1.msra.mxu0 0.0
  %1049 = vmatprep.subr.mxu0 0.0
  %1050 = vmatpush1.msra.mxu0 0.0
  %1051 = vmatprep.subr.mxu0 0.0
  %1052 = vmatpush1.msra.mxu0 0.0
  %1053 = vmatprep.subr.mxu0 0.0
  %1054 = vmatpush1.msra.mxu0 0.0
  %1055 = vmatprep.subr.mxu0 0.0
  %1056 = vmatpush1.msra.mxu0 0.0
  %1057 = vmatprep.subr.mxu0 0.0
  %1058 = vmatpush1.msra.mxu0 0.0
  %1059 = vmatprep.subr.mxu0 0.0
  %1060 = vmatpush1.msra.mxu0 0.0
  %1061 = vmatprep.subr.mxu0 0.0
  %1062 = vmatpush1.msra.mxu0 0.0
  %1063 = vmatprep.subr.mxu0 0.0
  %1064 = vmatpush1.msra.mxu0 0.0
  %1065 = vmatprep.subr.mxu0 0.0
  %1066 = vmatpush1.msra.mxu0 0.0
  %1067 = vmatprep.subr.mxu0 0.0
  %1068 = vmatpush1.msra.mxu0 0.0
  %1069 = vmatprep.subr.mxu0 0.0
  %1070 = vmatpush1.msra.mxu0 0.0
  %1071 = vmatprep.subr.mxu0 0.0
  %1072 = vmatpush1.msra.mxu0 0.0
  %1073 = vmatprep.subr.mxu0 0.0
  %1074 = vmatpush1.msra.mxu0 0.0
  %1075 = vmatprep.subr.mxu0 0.0
  %1076 = vmatpush1.msra.mxu0 0.0
  %1077 = vmatprep.subr.mxu0 0.0
  %1078 = vmatpush1.msra.mxu0 0.0
  %1079 = vmatprep.subr.mxu0 0.0
  %1080 = vmatpush1.msra.mxu0 0.0
  %1081 = vmatprep.subr.mxu0 0.0
  %1082 = vmatpush1.msra.mxu0 0.0
  %1083 = vmatprep.subr.mxu0 0.0
  %1084 = vmatpush1.msra.mxu0 0.0
  %1085 = vmatprep.mubr.f32.mxu0 0.0
  %1086 = vmatmul.mubr.f32.gmra.mrb[0].mxu0 %v1019
  %v1087 = vpop.f32.mrb[0].mxu0
  %v1088 = vadd.f32 %v488, %v1087
  %v1089 = vpop.f32.mrb[0].mxu0
  %1090 = vdwg.mxu0
  %v1091 = vxor.u32 %v1088, 2147483648
  %v1092 = vmul.f32 %v1091, 1.442695
  %v1093 = vpow.pop %v1092
  %v1094 = vadd.f32 %v1093, 1.0
  %v1095 = vrcp.pop %v1094
  %v1096 = vmul.f32 1.0, %v1095
  %v1097 = vtanh.pop %v1088
  %v1098 = vmul.f32 %v1096, %v903
  %1100 = vrot.lane.b32.xlu0 %v1097, 64
  %v1101 = vpop.permute.xlu0 %1100
  %v1103 = vmul.f32 %v1096, %v1101
  %1105 = vrot.lane.b32.xlu0 %v1103, 32
  %v1106 = vpop.permute.xlu0 %1105
  %v1108 = vadd.f32 %v1098, %v1106
  %v1109 = vtanh.pop %v1108
  %1111 = vrot.lane.b32.xlu0 %v1109, 64
  %v1112 = vpop.permute.xlu0 %1111
  %v1114 = vmul.f32 %v1096, %v1112
  %1116 = vrot.lane.b32.xlu0 %v1114, 64
  %v1117 = vpop.permute.xlu0 %1116
  %1119 = vst.msk [vmem:[#allocation3] sm:$0xff] %vm708, %v1117
  %v1120 = vsel %vm493, %v1014, 0
  %1122 = vmatprep.subr.mxu0 0.0
  %1123 = vmatpush1.msra.mxu0 %v471
  %1124 = vmatprep.subr.mxu0 0.0
  %1125 = vmatpush1.msra.mxu0 %v472
  %1126 = vmatprep.subr.mxu0 0.0
  %1127 = vmatpush1.msra.mxu0 %v473
  %1128 = vmatprep.subr.mxu0 0.0
  %1129 = vmatpush1.msra.mxu0 %v474
  %1130 = vmatprep.subr.mxu0 0.0
  %1131 = vmatpush1.msra.mxu0 0.0
  %1132 = vmatprep.subr.mxu0 0.0
  %1133 = vmatpush1.msra.mxu0 0.0
  %1134 = vmatprep.subr.mxu0 0.0
  %1135 = vmatpush1.msra.mxu0 0.0
  %1136 = vmatprep.subr.mxu0 0.0
  %1137 = vmatpush1.msra.mxu0 0.0
  %1138 = vmatprep.subr.mxu0 0.0
  %1139 = vmatpush1.msra.mxu0 0.0
  %1140 = vmatprep.subr.mxu0 0.0
  %1141 = vmatpush1.msra.mxu0 0.0
  %1142 = vmatprep.subr.mxu0 0.0
  %1143 = vmatpush1.msra.mxu0 0.0
  %1144 = vmatprep.subr.mxu0 0.0
  %1145 = vmatpush1.msra.mxu0 0.0
  %1146 = vmatprep.subr.mxu0 0.0
  %1147 = vmatpush1.msra.mxu0 0.0
  %1148 = vmatprep.subr.mxu0 0.0
  %1149 = vmatpush1.msra.mxu0 0.0
  %1150 = vmatprep.subr.mxu0 0.0
  %1151 = vmatpush1.msra.mxu0 0.0
  %1152 = vmatprep.subr.mxu0 0.0
  %1153 = vmatpush1.msra.mxu0 0.0
  %1154 = vmatprep.subr.mxu0 0.0
  %1155 = vmatpush1.msra.mxu0 0.0
  %1156 = vmatprep.subr.mxu0 0.0
  %1157 = vmatpush1.msra.mxu0 0.0
  %1158 = vmatprep.subr.mxu0 0.0
  %1159 = vmatpush1.msra.mxu0 0.0
  %1160 = vmatprep.subr.mxu0 0.0
  %1161 = vmatpush1.msra.mxu0 0.0
  %1162 = vmatprep.subr.mxu0 0.0
  %1163 = vmatpush1.msra.mxu0 0.0
  %1164 = vmatprep.subr.mxu0 0.0
  %1165 = vmatpush1.msra.mxu0 0.0
  %1166 = vmatprep.subr.mxu0 0.0
  %1167 = vmatpush1.msra.mxu0 0.0
  %1168 = vmatprep.subr.mxu0 0.0
  %1169 = vmatpush1.msra.mxu0 0.0
  %1170 = vmatprep.subr.mxu0 0.0
  %1171 = vmatpush1.msra.mxu0 0.0
  %1172 = vmatprep.subr.mxu0 0.0
  %1173 = vmatpush1.msra.mxu0 0.0
  %1174 = vmatprep.subr.mxu0 0.0
  %1175 = vmatpush1.msra.mxu0 0.0
  %1176 = vmatprep.subr.mxu0 0.0
  %1177 = vmatpush1.msra.mxu0 0.0
  %1178 = vmatprep.subr.mxu0 0.0
  %1179 = vmatpush1.msra.mxu0 0.0
  %1180 = vmatprep.subr.mxu0 0.0
  %1181 = vmatpush1.msra.mxu0 0.0
  %1182 = vmatprep.subr.mxu0 0.0
  %1183 = vmatpush1.msra.mxu0 0.0
  %1184 = vmatprep.subr.mxu0 0.0
  %1185 = vmatpush1.msra.mxu0 0.0
  %1186 = vmatprep.mubr.f32.mxu0 0.0
  %1187 = vmatmul.mubr.f32.gmra.mrb[0].mxu0 %v1120
  %v1188 = vpop.f32.mrb[0].mxu0
  %v1189 = vadd.f32 0.0, %v1188
  %v1190 = vpop.f32.mrb[0].mxu0
  %1191 = vdwg.mxu0
  %v1192 = vadd.f32 %v466, %v1189
  %v1193 = vxor.u32 %v1192, 2147483648
  %v1194 = vmul.f32 %v1193, 1.442695
  %v1195 = vpow.pop %v1194
  %v1196 = vadd.f32 %v1195, 1.0
  %v1197 = vrcp.pop %v1196
  %v1198 = vmul.f32 1.0, %v1197
  %v1199 = vtanh.pop %v1192
  %v1200 = vmul.f32 %v1198, %v1005
  %1202 = vrot.lane.b32.xlu0 %v1199, 64
  %v1203 = vpop.permute.xlu0 %1202
  %v1205 = vmul.f32 %v1198, %v1203
  %1207 = vrot.lane.b32.xlu0 %v1205, 32
  %v1208 = vpop.permute.xlu0 %1207
  %v1210 = vadd.f32 %v1200, %v1208
  %v1211 = vtanh.pop %v1210
  %1213 = vrot.lane.b32.xlu0 %v1211, 64
  %v1214 = vpop.permute.xlu0 %1213
  %v1216 = vmul.f32 %v1198, %v1214
  %1218 = vrot.lane.b32.xlu0 %v1216, 32
  %v1219 = vpop.permute.xlu0 %1218
  %1221 = vst.msk [vmem:[#allocation3] sm:$0xff] %vm493, %v1219
  %v1222 = vld [vmem:[#allocation3] sm:$0xff]
  %v1224 = vsel %vm602, %v1222, 0
  %1226 = vmatprep.subr.mxu0 0.0
  %1227 = vmatpush1.msra.mxu0 %v475
  %1228 = vmatprep.subr.mxu0 0.0
  %1229 = vmatpush1.msra.mxu0 %v476
  %1230 = vmatprep.subr.mxu0 0.0
  %1231 = vmatpush1.msra.mxu0 %v477
  %1232 = vmatprep.subr.mxu0 0.0
  %1233 = vmatpush1.msra.mxu0 %v478
  %1234 = vmatprep.subr.mxu0 0.0
  %1235 = vmatpush1.msra.mxu0 %v479
  %1236 = vmatprep.subr.mxu0 0.0
  %1237 = vmatpush1.msra.mxu0 %v480
  %1238 = vmatprep.subr.mxu0 0.0
  %1239 = vmatpush1.msra.mxu0 %v481
  %1240 = vmatprep.subr.mxu0 0.0
  %1241 = vmatpush1.msra.mxu0 %v482
  %1242 = vmatprep.subr.mxu0 0.0
  %1243 = vmatpush1.msra.mxu0 0.0
  %1244 = vmatprep.subr.mxu0 0.0
  %1245 = vmatpush1.msra.mxu0 0.0
  %1246 = vmatprep.subr.mxu0 0.0
  %1247 = vmatpush1.msra.mxu0 0.0
  %1248 = vmatprep.subr.mxu0 0.0
  %1249 = vmatpush1.msra.mxu0 0.0
  %1250 = vmatprep.subr.mxu0 0.0
  %1251 = vmatpush1.msra.mxu0 0.0
  %1252 = vmatprep.subr.mxu0 0.0
  %1253 = vmatpush1.msra.mxu0 0.0
  %1254 = vmatprep.subr.mxu0 0.0
  %1255 = vmatpush1.msra.mxu0 0.0
  %1256 = vmatprep.subr.mxu0 0.0
  %1257 = vmatpush1.msra.mxu0 0.0
  %1258 = vmatprep.subr.mxu0 0.0
  %1259 = vmatpush1.msra.mxu0 0.0
  %1260 = vmatprep.subr.mxu0 0.0
  %1261 = vmatpush1.msra.mxu0 0.0
  %1262 = vmatprep.subr.mxu0 0.0
  %1263 = vmatpush1.msra.mxu0 0.0
  %1264 = vmatprep.subr.mxu0 0.0
  %1265 = vmatpush1.msra.mxu0 0.0
  %1266 = vmatprep.subr.mxu0 0.0
  %1267 = vmatpush1.msra.mxu0 0.0
  %1268 = vmatprep.subr.mxu0 0.0
  %1269 = vmatpush1.msra.mxu0 0.0
  %1270 = vmatprep.subr.mxu0 0.0
  %1271 = vmatpush1.msra.mxu0 0.0
  %1272 = vmatprep.subr.mxu0 0.0
  %1273 = vmatpush1.msra.mxu0 0.0
  %1274 = vmatprep.subr.mxu0 0.0
  %1275 = vmatpush1.msra.mxu0 0.0
  %1276 = vmatprep.subr.mxu0 0.0
  %1277 = vmatpush1.msra.mxu0 0.0
  %1278 = vmatprep.subr.mxu0 0.0
  %1279 = vmatpush1.msra.mxu0 0.0
  %1280 = vmatprep.subr.mxu0 0.0
  %1281 = vmatpush1.msra.mxu0 0.0
  %1282 = vmatprep.subr.mxu0 0.0
  %1283 = vmatpush1.msra.mxu0 0.0
  %1284 = vmatprep.subr.mxu0 0.0
  %1285 = vmatpush1.msra.mxu0 0.0
  %1286 = vmatprep.subr.mxu0 0.0
  %1287 = vmatpush1.msra.mxu0 0.0
  %1288 = vmatprep.subr.mxu0 0.0
  %1289 = vmatpush1.msra.mxu0 0.0
  %1290 = vmatprep.mubr.f32.mxu0 0.0
  %1291 = vmatmul.mubr.f32.gmra.mrb[0].mxu0 %v1224
  %v1292 = vpop.f32.mrb[0].mxu0
  %v1293 = vadd.f32 %v488, %v1292
  %v1294 = vpop.f32.mrb[0].mxu0
  %1295 = vdwg.mxu0
  %v1296 = vxor.u32 %v1293, 2147483648
  %v1297 = vmul.f32 %v1296, 1.442695
  %v1298 = vpow.pop %v1297
  %v1299 = vadd.f32 %v1298, 1.0
  %v1300 = vrcp.pop %v1299
  %v1301 = vmul.f32 1.0, %v1300
  %v1302 = vtanh.pop %v1293
  %v1303 = vmul.f32 %v1301, %v1108
  %1305 = vrot.lane.b32.xlu0 %v1302, 64
  %v1306 = vpop.permute.xlu0 %1305
  %v1308 = vmul.f32 %v1301, %v1306
  %1310 = vrot.lane.b32.xlu0 %v1308, 32
  %v1311 = vpop.permute.xlu0 %1310
  %v1313 = vadd.f32 %v1303, %v1311
  %v1314 = vtanh.pop %v1313
  %1316 = vrot.lane.b32.xlu0 %v1314, 64
  %v1317 = vpop.permute.xlu0 %1316
  %v1319 = vmul.f32 %v1301, %v1317
  %1321 = vrot.lane.b32.xlu0 %v1319, 64
  %v1322 = vpop.permute.xlu0 %1321
  %1324 = vst.msk [vmem:[#allocation3] sm:$0xff] %vm708, %v1322
  %v1325 = vsel %vm493, %v1219, 0
  %1327 = vmatprep.subr.mxu0 0.0
  %1328 = vmatpush1.msra.mxu0 %v471
  %1329 = vmatprep.subr.mxu0 0.0
  %1330 = vmatpush1.msra.mxu0 %v472
  %1331 = vmatprep.subr.mxu0 0.0
  %1332 = vmatpush1.msra.mxu0 %v473
  %1333 = vmatprep.subr.mxu0 0.0
  %1334 = vmatpush1.msra.mxu0 %v474
  %1335 = vmatprep.subr.mxu0 0.0
  %1336 = vmatpush1.msra.mxu0 0.0
  %1337 = vmatprep.subr.mxu0 0.0
  %1338 = vmatpush1.msra.mxu0 0.0
  %1339 = vmatprep.subr.mxu0 0.0
  %1340 = vmatpush1.msra.mxu0 0.0
  %1341 = vmatprep.subr.mxu0 0.0
  %1342 = vmatpush1.msra.mxu0 0.0
  %1343 = vmatprep.subr.mxu0 0.0
  %1344 = vmatpush1.msra.mxu0 0.0
  %1345 = vmatprep.subr.mxu0 0.0
  %1346 = vmatpush1.msra.mxu0 0.0
  %1347 = vmatprep.subr.mxu0 0.0
  %1348 = vmatpush1.msra.mxu0 0.0
  %1349 = vmatprep.subr.mxu0 0.0
  %1350 = vmatpush1.msra.mxu0 0.0
  %1351 = vmatprep.subr.mxu0 0.0
  %1352 = vmatpush1.msra.mxu0 0.0
  %1353 = vmatprep.subr.mxu0 0.0
  %1354 = vmatpush1.msra.mxu0 0.0
  %1355 = vmatprep.subr.mxu0 0.0
  %1356 = vmatpush1.msra.mxu0 0.0
  %1357 = vmatprep.subr.mxu0 0.0
  %1358 = vmatpush1.msra.mxu0 0.0
  %1359 = vmatprep.subr.mxu0 0.0
  %1360 = vmatpush1.msra.mxu0 0.0
  %1361 = vmatprep.subr.mxu0 0.0
  %1362 = vmatpush1.msra.mxu0 0.0
  %1363 = vmatprep.subr.mxu0 0.0
  %1364 = vmatpush1.msra.mxu0 0.0
  %1365 = vmatprep.subr.mxu0 0.0
  %1366 = vmatpush1.msra.mxu0 0.0
  %1367 = vmatprep.subr.mxu0 0.0
  %1368 = vmatpush1.msra.mxu0 0.0
  %1369 = vmatprep.subr.mxu0 0.0
  %1370 = vmatpush1.msra.mxu0 0.0
  %1371 = vmatprep.subr.mxu0 0.0
  %1372 = vmatpush1.msra.mxu0 0.0
  %1373 = vmatprep.subr.mxu0 0.0
  %1374 = vmatpush1.msra.mxu0 0.0
  %1375 = vmatprep.subr.mxu0 0.0
  %1376 = vmatpush1.msra.mxu0 0.0
  %1377 = vmatprep.subr.mxu0 0.0
  %1378 = vmatpush1.msra.mxu0 0.0
  %1379 = vmatprep.subr.mxu0 0.0
  %1380 = vmatpush1.msra.mxu0 0.0
  %1381 = vmatprep.subr.mxu0 0.0
  %1382 = vmatpush1.msra.mxu0 0.0
  %1383 = vmatprep.subr.mxu0 0.0
  %1384 = vmatpush1.msra.mxu0 0.0
  %1385 = vmatprep.subr.mxu0 0.0
  %1386 = vmatpush1.msra.mxu0 0.0
  %1387 = vmatprep.subr.mxu0 0.0
  %1388 = vmatpush1.msra.mxu0 0.0
  %1389 = vmatprep.subr.mxu0 0.0
  %1390 = vmatpush1.msra.mxu0 0.0
  %1391 = vmatprep.mubr.f32.mxu0 0.0
  %1392 = vmatmul.mubr.f32.gmra.mrb[0].mxu0 %v1325
  %v1393 = vpop.f32.mrb[0].mxu0
  %v1394 = vadd.f32 0.0, %v1393
  %v1395 = vpop.f32.mrb[0].mxu0
  %1396 = vdwg.mxu0
  %v1397 = vadd.f32 %v467, %v1394
  %v1398 = vxor.u32 %v1397, 2147483648
  %v1399 = vmul.f32 %v1398, 1.442695
  %v1400 = vpow.pop %v1399
  %v1401 = vadd.f32 %v1400, 1.0
  %v1402 = vrcp.pop %v1401
  %v1403 = vmul.f32 1.0, %v1402
  %v1404 = vtanh.pop %v1397
  %v1405 = vmul.f32 %v1403, %v1210
  %1407 = vrot.lane.b32.xlu0 %v1404, 64
  %v1408 = vpop.permute.xlu0 %1407
  %v1410 = vmul.f32 %v1403, %v1408
  %1412 = vrot.lane.b32.xlu0 %v1410, 32
  %v1413 = vpop.permute.xlu0 %1412
  %v1415 = vadd.f32 %v1405, %v1413
  %v1416 = vtanh.pop %v1415
  %1418 = vrot.lane.b32.xlu0 %v1416, 64
  %v1419 = vpop.permute.xlu0 %1418
  %v1421 = vmul.f32 %v1403, %v1419
  %1423 = vrot.lane.b32.xlu0 %v1421, 32
  %v1424 = vpop.permute.xlu0 %1423
  %1426 = vst.msk [vmem:[#allocation3] sm:$0xff] %vm493, %v1424
  %v1427 = vld [vmem:[#allocation3] sm:$0xff]
  %v1429 = vsel %vm602, %v1427, 0
  %1431 = vmatprep.subr.mxu0 0.0
  %1432 = vmatpush1.msra.mxu0 %v475
  %1433 = vmatprep.subr.mxu0 0.0
  %1434 = vmatpush1.msra.mxu0 %v476
  %1435 = vmatprep.subr.mxu0 0.0
  %1436 = vmatpush1.msra.mxu0 %v477
  %1437 = vmatprep.subr.mxu0 0.0
  %1438 = vmatpush1.msra.mxu0 %v478
  %1439 = vmatprep.subr.mxu0 0.0
  %1440 = vmatpush1.msra.mxu0 %v479
  %1441 = vmatprep.subr.mxu0 0.0
  %1442 = vmatpush1.msra.mxu0 %v480
  %1443 = vmatprep.subr.mxu0 0.0
  %1444 = vmatpush1.msra.mxu0 %v481
  %1445 = vmatprep.subr.mxu0 0.0
  %1446 = vmatpush1.msra.mxu0 %v482
  %1447 = vmatprep.subr.mxu0 0.0
  %1448 = vmatpush1.msra.mxu0 0.0
  %1449 = vmatprep.subr.mxu0 0.0
  %1450 = vmatpush1.msra.mxu0 0.0
  %1451 = vmatprep.subr.mxu0 0.0
  %1452 = vmatpush1.msra.mxu0 0.0
  %1453 = vmatprep.subr.mxu0 0.0
  %1454 = vmatpush1.msra.mxu0 0.0
  %1455 = vmatprep.subr.mxu0 0.0
  %1456 = vmatpush1.msra.mxu0 0.0
  %1457 = vmatprep.subr.mxu0 0.0
  %1458 = vmatpush1.msra.mxu0 0.0
  %1459 = vmatprep.subr.mxu0 0.0
  %1460 = vmatpush1.msra.mxu0 0.0
  %1461 = vmatprep.subr.mxu0 0.0
  %1462 = vmatpush1.msra.mxu0 0.0
  %1463 = vmatprep.subr.mxu0 0.0
  %1464 = vmatpush1.msra.mxu0 0.0
  %1465 = vmatprep.subr.mxu0 0.0
  %1466 = vmatpush1.msra.mxu0 0.0
  %1467 = vmatprep.subr.mxu0 0.0
  %1468 = vmatpush1.msra.mxu0 0.0
  %1469 = vmatprep.subr.mxu0 0.0
  %1470 = vmatpush1.msra.mxu0 0.0
  %1471 = vmatprep.subr.mxu0 0.0
  %1472 = vmatpush1.msra.mxu0 0.0
  %1473 = vmatprep.subr.mxu0 0.0
  %1474 = vmatpush1.msra.mxu0 0.0
  %1475 = vmatprep.subr.mxu0 0.0
  %1476 = vmatpush1.msra.mxu0 0.0
  %1477 = vmatprep.subr.mxu0 0.0
  %1478 = vmatpush1.msra.mxu0 0.0
  %1479 = vmatprep.subr.mxu0 0.0
  %1480 = vmatpush1.msra.mxu0 0.0
  %1481 = vmatprep.subr.mxu0 0.0
  %1482 = vmatpush1.msra.mxu0 0.0
  %1483 = vmatprep.subr.mxu0 0.0
  %1484 = vmatpush1.msra.mxu0 0.0
  %1485 = vmatprep.subr.mxu0 0.0
  %1486 = vmatpush1.msra.mxu0 0.0
  %1487 = vmatprep.subr.mxu0 0.0
  %1488 = vmatpush1.msra.mxu0 0.0
  %1489 = vmatprep.subr.mxu0 0.0
  %1490 = vmatpush1.msra.mxu0 0.0
  %1491 = vmatprep.subr.mxu0 0.0
  %1492 = vmatpush1.msra.mxu0 0.0
  %1493 = vmatprep.subr.mxu0 0.0
  %1494 = vmatpush1.msra.mxu0 0.0
  %1495 = vmatprep.mubr.f32.mxu0 0.0
  %1496 = vmatmul.mubr.f32.gmra.mrb[0].mxu0 %v1429
  %v1497 = vpop.f32.mrb[0].mxu0
  %v1498 = vadd.f32 %v488, %v1497
  %v1499 = vpop.f32.mrb[0].mxu0
  %1500 = vdwg.mxu0
  %v1501 = vxor.u32 %v1498, 2147483648
  %v1502 = vmul.f32 %v1501, 1.442695
  %v1503 = vpow.pop %v1502
  %v1504 = vadd.f32 %v1503, 1.0
  %v1505 = vrcp.pop %v1504
  %v1506 = vmul.f32 1.0, %v1505
  %v1507 = vtanh.pop %v1498
  %v1508 = vmul.f32 %v1506, %v1313
  %1510 = vrot.lane.b32.xlu0 %v1507, 64
  %v1511 = vpop.permute.xlu0 %1510
  %v1513 = vmul.f32 %v1506, %v1511
  %1515 = vrot.lane.b32.xlu0 %v1513, 32
  %v1516 = vpop.permute.xlu0 %1515
  %v1518 = vadd.f32 %v1508, %v1516
  %v1519 = vtanh.pop %v1518
  %1521 = vrot.lane.b32.xlu0 %v1519, 64
  %v1522 = vpop.permute.xlu0 %1521
  %v1524 = vmul.f32 %v1506, %v1522
  %1526 = vrot.lane.b32.xlu0 %v1524, 64
  %v1527 = vpop.permute.xlu0 %1526
  %1529 = vst.msk [vmem:[#allocation3] sm:$0xff] %vm708, %v1527
  %v1530 = vsel %vm493, %v1424, 0
  %1532 = vmatprep.subr.mxu0 0.0
  %1533 = vmatpush1.msra.mxu0 %v471
  %1534 = vmatprep.subr.mxu0 0.0
  %1535 = vmatpush1.msra.mxu0 %v472
  %1536 = vmatprep.subr.mxu0 0.0
  %1537 = vmatpush1.msra.mxu0 %v473
  %1538 = vmatprep.subr.mxu0 0.0
  %1539 = vmatpush1.msra.mxu0 %v474
  %1540 = vmatprep.subr.mxu0 0.0
  %1541 = vmatpush1.msra.mxu0 0.0
  %1542 = vmatprep.subr.mxu0 0.0
  %1543 = vmatpush1.msra.mxu0 0.0
  %1544 = vmatprep.subr.mxu0 0.0
  %1545 = vmatpush1.msra.mxu0 0.0
  %1546 = vmatprep.subr.mxu0 0.0
  %1547 = vmatpush1.msra.mxu0 0.0
  %1548 = vmatprep.subr.mxu0 0.0
  %1549 = vmatpush1.msra.mxu0 0.0
  %1550 = vmatprep.subr.mxu0 0.0
  %1551 = vmatpush1.msra.mxu0 0.0
  %1552 = vmatprep.subr.mxu0 0.0
  %1553 = vmatpush1.msra.mxu0 0.0
  %1554 = vmatprep.subr.mxu0 0.0
  %1555 = vmatpush1.msra.mxu0 0.0
  %1556 = vmatprep.subr.mxu0 0.0
  %1557 = vmatpush1.msra.mxu0 0.0
  %1558 = vmatprep.subr.mxu0 0.0
  %1559 = vmatpush1.msra.mxu0 0.0
  %1560 = vmatprep.subr.mxu0 0.0
  %1561 = vmatpush1.msra.mxu0 0.0
  %1562 = vmatprep.subr.mxu0 0.0
  %1563 = vmatpush1.msra.mxu0 0.0
  %1564 = vmatprep.subr.mxu0 0.0
  %1565 = vmatpush1.msra.mxu0 0.0
  %1566 = vmatprep.subr.mxu0 0.0
  %1567 = vmatpush1.msra.mxu0 0.0
  %1568 = vmatprep.subr.mxu0 0.0
  %1569 = vmatpush1.msra.mxu0 0.0
  %1570 = vmatprep.subr.mxu0 0.0
  %1571 = vmatpush1.msra.mxu0 0.0
  %1572 = vmatprep.subr.mxu0 0.0
  %1573 = vmatpush1.msra.mxu0 0.0
  %1574 = vmatprep.subr.mxu0 0.0
  %1575 = vmatpush1.msra.mxu0 0.0
  %1576 = vmatprep.subr.mxu0 0.0
  %1577 = vmatpush1.msra.mxu0 0.0
  %1578 = vmatprep.subr.mxu0 0.0
  %1579 = vmatpush1.msra.mxu0 0.0
  %1580 = vmatprep.subr.mxu0 0.0
  %1581 = vmatpush1.msra.mxu0 0.0
  %1582 = vmatprep.subr.mxu0 0.0
  %1583 = vmatpush1.msra.mxu0 0.0
  %1584 = vmatprep.subr.mxu0 0.0
  %1585 = vmatpush1.msra.mxu0 0.0
  %1586 = vmatprep.subr.mxu0 0.0
  %1587 = vmatpush1.msra.mxu0 0.0
  %1588 = vmatprep.subr.mxu0 0.0
  %1589 = vmatpush1.msra.mxu0 0.0
  %1590 = vmatprep.subr.mxu0 0.0
  %1591 = vmatpush1.msra.mxu0 0.0
  %1592 = vmatprep.subr.mxu0 0.0
  %1593 = vmatpush1.msra.mxu0 0.0
  %1594 = vmatprep.subr.mxu0 0.0
  %1595 = vmatpush1.msra.mxu0 0.0
  %1596 = vmatprep.mubr.f32.mxu0 0.0
  %1597 = vmatmul.mubr.f32.gmra.mrb[0].mxu0 %v1530
  %v1598 = vpop.f32.mrb[0].mxu0
  %v1599 = vadd.f32 0.0, %v1598
  %v1600 = vpop.f32.mrb[0].mxu0
  %1601 = vdwg.mxu0
  %v1602 = vadd.f32 %v468, %v1599
  %v1603 = vxor.u32 %v1602, 2147483648
  %v1604 = vmul.f32 %v1603, 1.442695
  %v1605 = vpow.pop %v1604
  %v1606 = vadd.f32 %v1605, 1.0
  %v1607 = vrcp.pop %v1606
  %v1608 = vmul.f32 1.0, %v1607
  %v1609 = vtanh.pop %v1602
  %v1610 = vmul.f32 %v1608, %v1415
  %1612 = vrot.lane.b32.xlu0 %v1609, 64
  %v1613 = vpop.permute.xlu0 %1612
  %v1615 = vmul.f32 %v1608, %v1613
  %1617 = vrot.lane.b32.xlu0 %v1615, 32
  %v1618 = vpop.permute.xlu0 %1617
  %v1620 = vadd.f32 %v1610, %v1618
  %v1621 = vtanh.pop %v1620
  %1623 = vrot.lane.b32.xlu0 %v1621, 64
  %v1624 = vpop.permute.xlu0 %1623
  %v1626 = vmul.f32 %v1608, %v1624
  %1628 = vrot.lane.b32.xlu0 %v1626, 32
  %v1629 = vpop.permute.xlu0 %1628
  %1631 = vst.msk [vmem:[#allocation3] sm:$0xff] %vm493, %v1629
  %v1632 = vld [vmem:[#allocation3] sm:$0xff]
  %v1634 = vsel %vm602, %v1632, 0
  %1636 = vmatprep.subr.mxu0 0.0
  %1637 = vmatpush1.msra.mxu0 %v475
  %1638 = vmatprep.subr.mxu0 0.0
  %1639 = vmatpush1.msra.mxu0 %v476
  %1640 = vmatprep.subr.mxu0 0.0
  %1641 = vmatpush1.msra.mxu0 %v477
  %1642 = vmatprep.subr.mxu0 0.0
  %1643 = vmatpush1.msra.mxu0 %v478
  %1644 = vmatprep.subr.mxu0 0.0
  %1645 = vmatpush1.msra.mxu0 %v479
  %1646 = vmatprep.subr.mxu0 0.0
  %1647 = vmatpush1.msra.mxu0 %v480
  %1648 = vmatprep.subr.mxu0 0.0
  %1649 = vmatpush1.msra.mxu0 %v481
  %1650 = vmatprep.subr.mxu0 0.0
  %1651 = vmatpush1.msra.mxu0 %v482
  %1652 = vmatprep.subr.mxu0 0.0
  %1653 = vmatpush1.msra.mxu0 0.0
  %1654 = vmatprep.subr.mxu0 0.0
  %1655 = vmatpush1.msra.mxu0 0.0
  %1656 = vmatprep.subr.mxu0 0.0
  %1657 = vmatpush1.msra.mxu0 0.0
  %1658 = vmatprep.subr.mxu0 0.0
  %1659 = vmatpush1.msra.mxu0 0.0
  %1660 = vmatprep.subr.mxu0 0.0
  %1661 = vmatpush1.msra.mxu0 0.0
  %1662 = vmatprep.subr.mxu0 0.0
  %1663 = vmatpush1.msra.mxu0 0.0
  %1664 = vmatprep.subr.mxu0 0.0
  %1665 = vmatpush1.msra.mxu0 0.0
  %1666 = vmatprep.subr.mxu0 0.0
  %1667 = vmatpush1.msra.mxu0 0.0
  %1668 = vmatprep.subr.mxu0 0.0
  %1669 = vmatpush1.msra.mxu0 0.0
  %1670 = vmatprep.subr.mxu0 0.0
  %1671 = vmatpush1.msra.mxu0 0.0
  %1672 = vmatprep.subr.mxu0 0.0
  %1673 = vmatpush1.msra.mxu0 0.0
  %1674 = vmatprep.subr.mxu0 0.0
  %1675 = vmatpush1.msra.mxu0 0.0
  %1676 = vmatprep.subr.mxu0 0.0
  %1677 = vmatpush1.msra.mxu0 0.0
  %1678 = vmatprep.subr.mxu0 0.0
  %1679 = vmatpush1.msra.mxu0 0.0
  %1680 = vmatprep.subr.mxu0 0.0
  %1681 = vmatpush1.msra.mxu0 0.0
  %1682 = vmatprep.subr.mxu0 0.0
  %1683 = vmatpush1.msra.mxu0 0.0
  %1684 = vmatprep.subr.mxu0 0.0
  %1685 = vmatpush1.msra.mxu0 0.0
  %1686 = vmatprep.subr.mxu0 0.0
  %1687 = vmatpush1.msra.mxu0 0.0
  %1688 = vmatprep.subr.mxu0 0.0
  %1689 = vmatpush1.msra.mxu0 0.0
  %1690 = vmatprep.subr.mxu0 0.0
  %1691 = vmatpush1.msra.mxu0 0.0
  %1692 = vmatprep.subr.mxu0 0.0
  %1693 = vmatpush1.msra.mxu0 0.0
  %1694 = vmatprep.subr.mxu0 0.0
  %1695 = vmatpush1.msra.mxu0 0.0
  %1696 = vmatprep.subr.mxu0 0.0
  %1697 = vmatpush1.msra.mxu0 0.0
  %1698 = vmatprep.subr.mxu0 0.0
  %1699 = vmatpush1.msra.mxu0 0.0
  %1700 = vmatprep.mubr.f32.mxu0 0.0
  %1701 = vmatmul.mubr.f32.gmra.mrb[0].mxu0 %v1634
  %v1702 = vpop.f32.mrb[0].mxu0
  %v1703 = vadd.f32 %v488, %v1702
  %v1704 = vpop.f32.mrb[0].mxu0
  %1705 = vdwg.mxu0
  %v1706 = vxor.u32 %v1703, 2147483648
  %v1707 = vmul.f32 %v1706, 1.442695
  %v1708 = vpow.pop %v1707
  %v1709 = vadd.f32 %v1708, 1.0
  %v1710 = vrcp.pop %v1709
  %v1711 = vmul.f32 1.0, %v1710
  %v1712 = vtanh.pop %v1703
  %v1713 = vmul.f32 %v1711, %v1518
  %1715 = vrot.lane.b32.xlu0 %v1712, 64
  %v1716 = vpop.permute.xlu0 %1715
  %v1718 = vmul.f32 %v1711, %v1716
  %1720 = vrot.lane.b32.xlu0 %v1718, 32
  %v1721 = vpop.permute.xlu0 %1720
  %v1723 = vadd.f32 %v1713, %v1721
  %v1724 = vtanh.pop %v1723
  %1726 = vrot.lane.b32.xlu0 %v1724, 64
  %v1727 = vpop.permute.xlu0 %1726
  %v1729 = vmul.f32 %v1711, %v1727
  %1731 = vrot.lane.b32.xlu0 %v1729, 64
  %v1732 = vpop.permute.xlu0 %1731
  %1734 = vst.msk [vmem:[#allocation3] sm:$0xff] %vm708, %v1732
  %v1735 = vsel %vm493, %v1629, 0
  %1737 = vmatprep.subr.mxu0 0.0
  %1738 = vmatpush1.msra.mxu0 %v471
  %1739 = vmatprep.subr.mxu0 0.0
  %1740 = vmatpush1.msra.mxu0 %v472
  %1741 = vmatprep.subr.mxu0 0.0
  %1742 = vmatpush1.msra.mxu0 %v473
  %1743 = vmatprep.subr.mxu0 0.0
  %1744 = vmatpush1.msra.mxu0 %v474
  %1745 = vmatprep.subr.mxu0 0.0
  %1746 = vmatpush1.msra.mxu0 0.0
  %1747 = vmatprep.subr.mxu0 0.0
  %1748 = vmatpush1.msra.mxu0 0.0
  %1749 = vmatprep.subr.mxu0 0.0
  %1750 = vmatpush1.msra.mxu0 0.0
  %1751 = vmatprep.subr.mxu0 0.0
  %1752 = vmatpush1.msra.mxu0 0.0
  %1753 = vmatprep.subr.mxu0 0.0
  %1754 = vmatpush1.msra.mxu0 0.0
  %1755 = vmatprep.subr.mxu0 0.0
  %1756 = vmatpush1.msra.mxu0 0.0
  %1757 = vmatprep.subr.mxu0 0.0
  %1758 = vmatpush1.msra.mxu0 0.0
  %1759 = vmatprep.subr.mxu0 0.0
  %1760 = vmatpush1.msra.mxu0 0.0
  %1761 = vmatprep.subr.mxu0 0.0
  %1762 = vmatpush1.msra.mxu0 0.0
  %1763 = vmatprep.subr.mxu0 0.0
  %1764 = vmatpush1.msra.mxu0 0.0
  %1765 = vmatprep.subr.mxu0 0.0
  %1766 = vmatpush1.msra.mxu0 0.0
  %1767 = vmatprep.subr.mxu0 0.0
  %1768 = vmatpush1.msra.mxu0 0.0
  %1769 = vmatprep.subr.mxu0 0.0
  %1770 = vmatpush1.msra.mxu0 0.0
  %1771 = vmatprep.subr.mxu0 0.0
  %1772 = vmatpush1.msra.mxu0 0.0
  %1773 = vmatprep.subr.mxu0 0.0
  %1774 = vmatpush1.msra.mxu0 0.0
  %1775 = vmatprep.subr.mxu0 0.0
  %1776 = vmatpush1.msra.mxu0 0.0
  %1777 = vmatprep.subr.mxu0 0.0
  %1778 = vmatpush1.msra.mxu0 0.0
  %1779 = vmatprep.subr.mxu0 0.0
  %1780 = vmatpush1.msra.mxu0 0.0
  %1781 = vmatprep.subr.mxu0 0.0
  %1782 = vmatpush1.msra.mxu0 0.0
  %1783 = vmatprep.subr.mxu0 0.0
  %1784 = vmatpush1.msra.mxu0 0.0
  %1785 = vmatprep.subr.mxu0 0.0
  %1786 = vmatpush1.msra.mxu0 0.0
  %1787 = vmatprep.subr.mxu0 0.0
  %1788 = vmatpush1.msra.mxu0 0.0
  %1789 = vmatprep.subr.mxu0 0.0
  %1790 = vmatpush1.msra.mxu0 0.0
  %1791 = vmatprep.subr.mxu0 0.0
  %1792 = vmatpush1.msra.mxu0 0.0
  %1793 = vmatprep.subr.mxu0 0.0
  %1794 = vmatpush1.msra.mxu0 0.0
  %1795 = vmatprep.subr.mxu0 0.0
  %1796 = vmatpush1.msra.mxu0 0.0
  %1797 = vmatprep.subr.mxu0 0.0
  %1798 = vmatpush1.msra.mxu0 0.0
  %1799 = vmatprep.subr.mxu0 0.0
  %1800 = vmatpush1.msra.mxu0 0.0
  %1801 = vmatprep.mubr.f32.mxu0 0.0
  %1802 = vmatmul.mubr.f32.gmra.mrb[0].mxu0 %v1735
  %v1803 = vpop.f32.mrb[0].mxu0
  %v1804 = vadd.f32 0.0, %v1803
  %v1805 = vpop.f32.mrb[0].mxu0
  %1806 = vdwg.mxu0
  %v1807 = vadd.f32 %v469, %v1804
  %v1808 = vxor.u32 %v1807, 2147483648
  %v1809 = vmul.f32 %v1808, 1.442695
  %v1810 = vpow.pop %v1809
  %v1811 = vadd.f32 %v1810, 1.0
  %v1812 = vrcp.pop %v1811
  %v1813 = vmul.f32 1.0, %v1812
  %v1814 = vtanh.pop %v1807
  %v1815 = vmul.f32 %v1813, %v1620
  %1817 = vrot.lane.b32.xlu0 %v1814, 64
  %v1818 = vpop.permute.xlu0 %1817
  %v1820 = vmul.f32 %v1813, %v1818
  %1822 = vrot.lane.b32.xlu0 %v1820, 32
  %v1823 = vpop.permute.xlu0 %1822
  %v1825 = vadd.f32 %v1815, %v1823
  %v1826 = vtanh.pop %v1825
  %1828 = vrot.lane.b32.xlu0 %v1826, 64
  %v1829 = vpop.permute.xlu0 %1828
  %v1831 = vmul.f32 %v1813, %v1829
  %1833 = vrot.lane.b32.xlu0 %v1831, 32
  %v1834 = vpop.permute.xlu0 %1833
  %1836 = vst.msk [vmem:[#allocation3] sm:$0xff] %vm493, %v1834
  %v1837 = vld [vmem:[#allocation3] sm:$0xff]
  %v1839 = vsel %vm602, %v1837, 0
  %1841 = vmatprep.subr.mxu0 0.0
  %1842 = vmatpush1.msra.mxu0 %v475
  %1843 = vmatprep.subr.mxu0 0.0
  %1844 = vmatpush1.msra.mxu0 %v476
  %1845 = vmatprep.subr.mxu0 0.0
  %1846 = vmatpush1.msra.mxu0 %v477
  %1847 = vmatprep.subr.mxu0 0.0
  %1848 = vmatpush1.msra.mxu0 %v478
  %1849 = vmatprep.subr.mxu0 0.0
  %1850 = vmatpush1.msra.mxu0 %v479
  %1851 = vmatprep.subr.mxu0 0.0
  %1852 = vmatpush1.msra.mxu0 %v480
  %1853 = vmatprep.subr.mxu0 0.0
  %1854 = vmatpush1.msra.mxu0 %v481
  %1855 = vmatprep.subr.mxu0 0.0
  %1856 = vmatpush1.msra.mxu0 %v482
  %1857 = vmatprep.subr.mxu0 0.0
  %1858 = vmatpush1.msra.mxu0 0.0
  %1859 = vmatprep.subr.mxu0 0.0
  %1860 = vmatpush1.msra.mxu0 0.0
  %1861 = vmatprep.subr.mxu0 0.0
  %1862 = vmatpush1.msra.mxu0 0.0
  %1863 = vmatprep.subr.mxu0 0.0
  %1864 = vmatpush1.msra.mxu0 0.0
  %1865 = vmatprep.subr.mxu0 0.0
  %1866 = vmatpush1.msra.mxu0 0.0
  %1867 = vmatprep.subr.mxu0 0.0
  %1868 = vmatpush1.msra.mxu0 0.0
  %1869 = vmatprep.subr.mxu0 0.0
  %1870 = vmatpush1.msra.mxu0 0.0
  %1871 = vmatprep.subr.mxu0 0.0
  %1872 = vmatpush1.msra.mxu0 0.0
  %1873 = vmatprep.subr.mxu0 0.0
  %1874 = vmatpush1.msra.mxu0 0.0
  %1875 = vmatprep.subr.mxu0 0.0
  %1876 = vmatpush1.msra.mxu0 0.0
  %1877 = vmatprep.subr.mxu0 0.0
  %1878 = vmatpush1.msra.mxu0 0.0
  %1879 = vmatprep.subr.mxu0 0.0
  %1880 = vmatpush1.msra.mxu0 0.0
  %1881 = vmatprep.subr.mxu0 0.0
  %1882 = vmatpush1.msra.mxu0 0.0
  %1883 = vmatprep.subr.mxu0 0.0
  %1884 = vmatpush1.msra.mxu0 0.0
  %1885 = vmatprep.subr.mxu0 0.0
  %1886 = vmatpush1.msra.mxu0 0.0
  %1887 = vmatprep.subr.mxu0 0.0
  %1888 = vmatpush1.msra.mxu0 0.0
  %1889 = vmatprep.subr.mxu0 0.0
  %1890 = vmatpush1.msra.mxu0 0.0
  %1891 = vmatprep.subr.mxu0 0.0
  %1892 = vmatpush1.msra.mxu0 0.0
  %1893 = vmatprep.subr.mxu0 0.0
  %1894 = vmatpush1.msra.mxu0 0.0
  %1895 = vmatprep.subr.mxu0 0.0
  %1896 = vmatpush1.msra.mxu0 0.0
  %1897 = vmatprep.subr.mxu0 0.0
  %1898 = vmatpush1.msra.mxu0 0.0
  %1899 = vmatprep.subr.mxu0 0.0
  %1900 = vmatpush1.msra.mxu0 0.0
  %1901 = vmatprep.subr.mxu0 0.0
  %1902 = vmatpush1.msra.mxu0 0.0
  %1903 = vmatprep.subr.mxu0 0.0
  %1904 = vmatpush1.msra.mxu0 0.0
  %1905 = vmatprep.mubr.f32.mxu0 0.0
  %1906 = vmatmul.mubr.f32.gmra.mrb[0].mxu0 %v1839
  %v1907 = vpop.f32.mrb[0].mxu0
  %v1908 = vadd.f32 %v488, %v1907
  %v1909 = vpop.f32.mrb[0].mxu0
  %1910 = vdwg.mxu0
  %v1911 = vxor.u32 %v1908, 2147483648
  %v1912 = vmul.f32 %v1911, 1.442695
  %v1913 = vpow.pop %v1912
  %v1914 = vadd.f32 %v1913, 1.0
  %v1915 = vrcp.pop %v1914
  %v1916 = vmul.f32 1.0, %v1915
  %v1917 = vtanh.pop %v1908
  %v1918 = vmul.f32 %v1916, %v1723
  %1920 = vrot.lane.b32.xlu0 %v1917, 64
  %v1921 = vpop.permute.xlu0 %1920
  %v1923 = vmul.f32 %v1916, %v1921
  %1925 = vrot.lane.b32.xlu0 %v1923, 32
  %v1926 = vpop.permute.xlu0 %1925
  %v1928 = vadd.f32 %v1918, %v1926
  %v1929 = vtanh.pop %v1928
  %1931 = vrot.lane.b32.xlu0 %v1929, 64
  %v1932 = vpop.permute.xlu0 %1931
  %v1934 = vmul.f32 %v1916, %v1932
  %1936 = vrot.lane.b32.xlu0 %v1934, 64
  %v1937 = vpop.permute.xlu0 %1936
  %1939 = vst.msk [vmem:[#allocation3] sm:$0xff] %vm708, %v1937
  %v1940 = vsel %vm493, %v1834, 0
  %1942 = vmatprep.subr.mxu0 0.0
  %1943 = vmatpush1.msra.mxu0 %v471
  %1944 = vmatprep.subr.mxu0 0.0
  %1945 = vmatpush1.msra.mxu0 %v472
  %1946 = vmatprep.subr.mxu0 0.0
  %1947 = vmatpush1.msra.mxu0 %v473
  %1948 = vmatprep.subr.mxu0 0.0
  %1949 = vmatpush1.msra.mxu0 %v474
  %1950 = vmatprep.subr.mxu0 0.0
  %1951 = vmatpush1.msra.mxu0 0.0
  %1952 = vmatprep.subr.mxu0 0.0
  %1953 = vmatpush1.msra.mxu0 0.0
  %1954 = vmatprep.subr.mxu0 0.0
  %1955 = vmatpush1.msra.mxu0 0.0
  %1956 = vmatprep.subr.mxu0 0.0
  %1957 = vmatpush1.msra.mxu0 0.0
  %1958 = vmatprep.subr.mxu0 0.0
  %1959 = vmatpush1.msra.mxu0 0.0
  %1960 = vmatprep.subr.mxu0 0.0
  %1961 = vmatpush1.msra.mxu0 0.0
  %1962 = vmatprep.subr.mxu0 0.0
  %1963 = vmatpush1.msra.mxu0 0.0
  %1964 = vmatprep.subr.mxu0 0.0
  %1965 = vmatpush1.msra.mxu0 0.0
  %1966 = vmatprep.subr.mxu0 0.0
  %1967 = vmatpush1.msra.mxu0 0.0
  %1968 = vmatprep.subr.mxu0 0.0
  %1969 = vmatpush1.msra.mxu0 0.0
  %1970 = vmatprep.subr.mxu0 0.0
  %1971 = vmatpush1.msra.mxu0 0.0
  %1972 = vmatprep.subr.mxu0 0.0
  %1973 = vmatpush1.msra.mxu0 0.0
  %1974 = vmatprep.subr.mxu0 0.0
  %1975 = vmatpush1.msra.mxu0 0.0
  %1976 = vmatprep.subr.mxu0 0.0
  %1977 = vmatpush1.msra.mxu0 0.0
  %1978 = vmatprep.subr.mxu0 0.0
  %1979 = vmatpush1.msra.mxu0 0.0
  %1980 = vmatprep.subr.mxu0 0.0
  %1981 = vmatpush1.msra.mxu0 0.0
  %1982 = vmatprep.subr.mxu0 0.0
  %1983 = vmatpush1.msra.mxu0 0.0
  %1984 = vmatprep.subr.mxu0 0.0
  %1985 = vmatpush1.msra.mxu0 0.0
  %1986 = vmatprep.subr.mxu0 0.0
  %1987 = vmatpush1.msra.mxu0 0.0
  %1988 = vmatprep.subr.mxu0 0.0
  %1989 = vmatpush1.msra.mxu0 0.0
  %1990 = vmatprep.subr.mxu0 0.0
  %1991 = vmatpush1.msra.mxu0 0.0
  %1992 = vmatprep.subr.mxu0 0.0
  %1993 = vmatpush1.msra.mxu0 0.0
  %1994 = vmatprep.subr.mxu0 0.0
  %1995 = vmatpush1.msra.mxu0 0.0
  %1996 = vmatprep.subr.mxu0 0.0
  %1997 = vmatpush1.msra.mxu0 0.0
  %1998 = vmatprep.subr.mxu0 0.0
  %1999 = vmatpush1.msra.mxu0 0.0
  %2000 = vmatprep.subr.mxu0 0.0
  %2001 = vmatpush1.msra.mxu0 0.0
  %2002 = vmatprep.subr.mxu0 0.0
  %2003 = vmatpush1.msra.mxu0 0.0
  %2004 = vmatprep.subr.mxu0 0.0
  %2005 = vmatpush1.msra.mxu0 0.0
  %2006 = vmatprep.mubr.f32.mxu0 0.0
  %2007 = vmatmul.mubr.f32.gmra.mrb[0].mxu0 %v1940
  %v2008 = vpop.f32.mrb[0].mxu0
  %v2009 = vadd.f32 0.0, %v2008
  %v2010 = vpop.f32.mrb[0].mxu0
  %2011 = vdwg.mxu0
  %v2012 = vadd.f32 %v470, %v2009
  %v2013 = vxor.u32 %v2012, 2147483648
  %v2014 = vmul.f32 %v2013, 1.442695
  %v2015 = vpow.pop %v2014
  %v2016 = vadd.f32 %v2015, 1.0
  %v2017 = vrcp.pop %v2016
  %v2018 = vmul.f32 1.0, %v2017
  %v2019 = vtanh.pop %v2012
  %v2020 = vmul.f32 %v2018, %v1825
  %2022 = vrot.lane.b32.xlu0 %v2019, 64
  %v2023 = vpop.permute.xlu0 %2022
  %v2025 = vmul.f32 %v2018, %v2023
  %2027 = vrot.lane.b32.xlu0 %v2025, 32
  %v2028 = vpop.permute.xlu0 %2027
  %v2030 = vadd.f32 %v2020, %v2028
  %v2031 = vtanh.pop %v2030
  %2033 = vrot.lane.b32.xlu0 %v2031, 64
  %v2034 = vpop.permute.xlu0 %2033
  %v2036 = vmul.f32 %v2018, %v2034
  %2038 = vrot.lane.b32.xlu0 %v2036, 32
  %v2039 = vpop.permute.xlu0 %2038
  %2041 = vst.msk [vmem:[#allocation3] sm:$0xff] %vm493, %v2039
  %v2042 = vld [vmem:[#allocation3] sm:$0xff]
  %v2044 = vsel %vm602, %v2042, 0
  %2046 = vmatprep.subr.mxu0 0.0
  %2047 = vmatpush1.msra.mxu0 %v475
  %2048 = vmatprep.subr.mxu0 0.0
  %2049 = vmatpush1.msra.mxu0 %v476
  %2050 = vmatprep.subr.mxu0 0.0
  %2051 = vmatpush1.msra.mxu0 %v477
  %2052 = vmatprep.subr.mxu0 0.0
  %2053 = vmatpush1.msra.mxu0 %v478
  %2054 = vmatprep.subr.mxu0 0.0
  %2055 = vmatpush1.msra.mxu0 %v479
  %2056 = vmatprep.subr.mxu0 0.0
  %2057 = vmatpush1.msra.mxu0 %v480
  %2058 = vmatprep.subr.mxu0 0.0
  %2059 = vmatpush1.msra.mxu0 %v481
  %2060 = vmatprep.subr.mxu0 0.0
  %2061 = vmatpush1.msra.mxu0 %v482
  %2062 = vmatprep.subr.mxu0 0.0
  %2063 = vmatpush1.msra.mxu0 0.0
  %2064 = vmatprep.subr.mxu0 0.0
  %2065 = vmatpush1.msra.mxu0 0.0
  %2066 = vmatprep.subr.mxu0 0.0
  %2067 = vmatpush1.msra.mxu0 0.0
  %2068 = vmatprep.subr.mxu0 0.0
  %2069 = vmatpush1.msra.mxu0 0.0
  %2070 = vmatprep.subr.mxu0 0.0
  %2071 = vmatpush1.msra.mxu0 0.0
  %2072 = vmatprep.subr.mxu0 0.0
  %2073 = vmatpush1.msra.mxu0 0.0
  %2074 = vmatprep.subr.mxu0 0.0
  %2075 = vmatpush1.msra.mxu0 0.0
  %2076 = vmatprep.subr.mxu0 0.0
  %2077 = vmatpush1.msra.mxu0 0.0
  %2078 = vmatprep.subr.mxu0 0.0
  %2079 = vmatpush1.msra.mxu0 0.0
  %2080 = vmatprep.subr.mxu0 0.0
  %2081 = vmatpush1.msra.mxu0 0.0
  %2082 = vmatprep.subr.mxu0 0.0
  %2083 = vmatpush1.msra.mxu0 0.0
  %2084 = vmatprep.subr.mxu0 0.0
  %2085 = vmatpush1.msra.mxu0 0.0
  %2086 = vmatprep.subr.mxu0 0.0
  %2087 = vmatpush1.msra.mxu0 0.0
  %2088 = vmatprep.subr.mxu0 0.0
  %2089 = vmatpush1.msra.mxu0 0.0
  %2090 = vmatprep.subr.mxu0 0.0
  %2091 = vmatpush1.msra.mxu0 0.0
  %2092 = vmatprep.subr.mxu0 0.0
  %2093 = vmatpush1.msra.mxu0 0.0
  %2094 = vmatprep.subr.mxu0 0.0
  %2095 = vmatpush1.msra.mxu0 0.0
  %2096 = vmatprep.subr.mxu0 0.0
  %2097 = vmatpush1.msra.mxu0 0.0
  %2098 = vmatprep.subr.mxu0 0.0
  %2099 = vmatpush1.msra.mxu0 0.0
  %2100 = vmatprep.subr.mxu0 0.0
  %2101 = vmatpush1.msra.mxu0 0.0
  %2102 = vmatprep.subr.mxu0 0.0
  %2103 = vmatpush1.msra.mxu0 0.0
  %2104 = vmatprep.subr.mxu0 0.0
  %2105 = vmatpush1.msra.mxu0 0.0
  %2106 = vmatprep.subr.mxu0 0.0
  %2107 = vmatpush1.msra.mxu0 0.0
  %2108 = vmatprep.subr.mxu0 0.0
  %2109 = vmatpush1.msra.mxu0 0.0
  %2110 = vmatprep.mubr.f32.mxu0 0.0
  %2111 = vmatmul.mubr.f32.gmra.mrb[0].mxu0 %v2044
  %v2112 = vpop.f32.mrb[0].mxu0
  %v2113 = vadd.f32 %v488, %v2112
  %v2114 = vpop.f32.mrb[0].mxu0
  %2115 = vdwg.mxu0
  %v2116 = vxor.u32 %v2113, 2147483648
  %v2117 = vmul.f32 %v2116, 1.442695
  %v2118 = vpow.pop %v2117
  %v2119 = vadd.f32 %v2118, 1.0
  %v2120 = vrcp.pop %v2119
  %v2121 = vmul.f32 1.0, %v2120
  %v2122 = vtanh.pop %v2113
  %v2123 = vmul.f32 %v2121, %v1928
  %2125 = vrot.lane.b32.xlu0 %v2122, 64
  %v2126 = vpop.permute.xlu0 %2125
  %v2128 = vmul.f32 %v2121, %v2126
  %2130 = vrot.lane.b32.xlu0 %v2128, 32
  %v2131 = vpop.permute.xlu0 %2130
  %v2133 = vadd.f32 %v2123, %v2131
  %v2134 = vtanh.pop %v2133
  %2136 = vrot.lane.b32.xlu0 %v2134, 64
  %v2137 = vpop.permute.xlu0 %2136
  %v2139 = vmul.f32 %v2121, %v2137
  %2141 = vrot.lane.b32.xlu0 %v2139, 64
  %v2142 = vpop.permute.xlu0 %2141
  %2144 = vst.msk [vmem:[#allocation3] sm:$0xff] %vm708, %v2142
  %2146 = vrot.lane.b32.xlu0 %v2030, 96
  %v2147 = vpop.permute.xlu0 %2146
  %2149 = vst.msk [vmem:[#allocation4] sm:$0xff] %vm493, %v2147
  %2151 = vrot.lane.b32.xlu0 %v2133, 96
  %v2152 = vpop.permute.xlu0 %2151
  %2154 = vst.msk [vmem:[#allocation5] sm:$0xff] %vm493, %v2152
  // Predicated region
  $region62: #{tpu_custom_call.1} parent=0 // pred_check
    %p2155 = pneg %p49
  $region63: #{tpu_custom_call.1} parent=0 // pred_check_branch
    %2157 = sbr.rel (%p2155) target = $region65
  $region64: #{tpu_custom_call.1} parent=0 // pred_region
    %v2158 = vld [vmem:[%s12] sm:$0xff]
    %v2159 = vld [vmem:[%s12 + $0x8] sm:$0xff]
    %v2160 = vld [vmem:[%s12 + $0x10] sm:$0xff]
    %v2161 = vld [vmem:[%s12 + $0x18] sm:$0xff]
    %v2162 = vld [vmem:[#allocation6] sm:$0x1]
    %v2164 = vlaneseq
    %v2165 = vshrl.u32 %v2164, 7
    %v2166 = vsub.s32 0, %v2165
    %v2167 = vrot.slane %v2162, %v2166
    %2169 = vrot.lane.b32.xlu0 %v2139, 32
    %v2170 = vpop.permute.xlu0 %2169
    %v2171 = vsel %vm493, %v2170, 0
    %2173 = vmatprep.subr.mxu0 0.0
    %2174 = vmatpush1.msra.mxu0 %v2158
    %2175 = vmatprep.subr.mxu0 0.0
    %2176 = vmatpush1.msra.mxu0 %v2159
    %2177 = vmatprep.subr.mxu0 0.0
    %2178 = vmatpush1.msra.mxu0 %v2160
    %2179 = vmatprep.subr.mxu0 0.0
    %2180 = vmatpush1.msra.mxu0 %v2161
    %2181 = vmatprep.subr.mxu0 0.0
    %2182 = vmatpush1.msra.mxu0 0.0
    %2183 = vmatprep.subr.mxu0 0.0
    %2184 = vmatpush1.msra.mxu0 0.0
    %2185 = vmatprep.subr.mxu0 0.0
    %2186 = vmatpush1.msra.mxu0 0.0
    %2187 = vmatprep.subr.mxu0 0.0
    %2188 = vmatpush1.msra.mxu0 0.0
    %2189 = vmatprep.subr.mxu0 0.0
    %2190 = vmatpush1.msra.mxu0 0.0
    %2191 = vmatprep.subr.mxu0 0.0
    %2192 = vmatpush1.msra.mxu0 0.0
    %2193 = vmatprep.subr.mxu0 0.0
    %2194 = vmatpush1.msra.mxu0 0.0
    %2195 = vmatprep.subr.mxu0 0.0
    %2196 = vmatpush1.msra.mxu0 0.0
    %2197 = vmatprep.subr.mxu0 0.0
    %2198 = vmatpush1.msra.mxu0 0.0
    %2199 = vmatprep.subr.mxu0 0.0
    %2200 = vmatpush1.msra.mxu0 0.0
    %2201 = vmatprep.subr.mxu0 0.0
    %2202 = vmatpush1.msra.mxu0 0.0
    %2203 = vmatprep.subr.mxu0 0.0
    %2204 = vmatpush1.msra.mxu0 0.0
    %2205 = vmatprep.subr.mxu0 0.0
    %2206 = vmatpush1.msra.mxu0 0.0
    %2207 = vmatprep.subr.mxu0 0.0
    %2208 = vmatpush1.msra.mxu0 0.0
    %2209 = vmatprep.subr.mxu0 0.0
    %2210 = vmatpush1.msra.mxu0 0.0
    %2211 = vmatprep.subr.mxu0 0.0
    %2212 = vmatpush1.msra.mxu0 0.0
    %2213 = vmatprep.subr.mxu0 0.0
    %2214 = vmatpush1.msra.mxu0 0.0
    %2215 = vmatprep.subr.mxu0 0.0
    %2216 = vmatpush1.msra.mxu0 0.0
    %2217 = vmatprep.subr.mxu0 0.0
    %2218 = vmatpush1.msra.mxu0 0.0
    %2219 = vmatprep.subr.mxu0 0.0
    %2220 = vmatpush1.msra.mxu0 0.0
    %2221 = vmatprep.subr.mxu0 0.0
    %2222 = vmatpush1.msra.mxu0 0.0
    %2223 = vmatprep.subr.mxu0 0.0
    %2224 = vmatpush1.msra.mxu0 0.0
    %2225 = vmatprep.subr.mxu0 0.0
    %2226 = vmatpush1.msra.mxu0 0.0
    %2227 = vmatprep.subr.mxu0 0.0
    %2228 = vmatpush1.msra.mxu0 0.0
    %2229 = vmatprep.subr.mxu0 0.0
    %2230 = vmatpush1.msra.mxu0 0.0
    %2231 = vmatprep.subr.mxu0 0.0
    %2232 = vmatpush1.msra.mxu0 0.0
    %2233 = vmatprep.subr.mxu0 0.0
    %2234 = vmatpush1.msra.mxu0 0.0
    %2235 = vmatprep.subr.mxu0 0.0
    %2236 = vmatpush1.msra.mxu0 0.0
    %2237 = vmatprep.mubr.f32.mxu0 0.0
    %2238 = vmatmul.mubr.f32.gmra.mrb[0].mxu0 %v2171
    %v2239 = vpop.f32.mrb[0].mxu0
    %v2240 = vadd.f32 %v2167, %v2239
    %v2241 = vpop.f32.mrb[0].mxu0
    %2242 = vdwg.mxu0
    %vm2243 = vcmask 7168
    %2244 = vst.msk [vmem:[%s14] sm:$0xff] %vm2243, %v2240
  $region65: #{tpu_custom_call.1} parent=0 // pred_fallthru
    _
  // Predicated region
  $region66: #{tpu_custom_call.1} parent=0 // pred_check
    _
  $region67: #{tpu_custom_call.1} parent=0 // pred_check_branch
    %2246 = sbr.rel (0) target = $region69
  $region68: #{tpu_custom_call.1} parent=0 // pred_region
    _
  $region69: #{tpu_custom_call.1} parent=0 // pred_fallthru
    _
  // Predicated region
  $region70: #{tpu_custom_call.1} parent=0 // pred_check
    _
  $region71: #{tpu_custom_call.1} parent=0 // pred_check_branch
    %2248 = sbr.rel (0) target = $region73
  $region72: #{tpu_custom_call.1} parent=0 // pred_region
    _
  $region73: #{tpu_custom_call.1} parent=0 // pred_fallthru
    _

</llo_original>
